<compile_context>
chip_gen: v5e
topology: v5e:2x2
jax: 0.10.0
libtpu: 0.0.40
codegen_flags: <defaults>
</compile_context>

<pallas_src>
import functools

import jax
import jax.numpy as jnp
import numpy as np
from jax.experimental import pallas as pl
from jax.experimental.pallas import tpu as pltpu


def _round_up(x, m):
    return (x + m - 1) // m * m


def _emb_kernel(idx_ref, table_ref, gamma_ref, beta_ref, out_ref, *, eps, hidden):
    """One row-tile of the flattened (B*S) token stream.

    idx_ref   : (TILE_R, 8) int32  -- absolute row indices into the fused table
    table_ref : (V_pad, H_pad) f32 -- [word; x; y; h; w; token_type], zero padded
    gamma_ref : (1, H_pad) f32     -- LayerNorm weight, zero padded
    beta_ref  : (1, H_pad) f32     -- LayerNorm bias, zero padded
    out_ref   : (TILE_R, H_pad) f32
    """
    idx = idx_ref[...]                      # (TILE_R, 8)
    tile_r = idx.shape[0]
    v_pad = table_ref.shape[0]

    # Fused "multi-hot" LHS: one big MXU matmul replaces 8 small one-hot
    # lookups and 7 VPU adds.  Counts of 2 (x0==x1 or y0==y1) are correct.
    iota = jax.lax.broadcasted_iota(jnp.int32, (tile_r, v_pad), 1)
    multihot = jnp.zeros((tile_r, v_pad), jnp.float32)
    for k in range(8):                      # unrolled at trace time
        multihot = multihot + (idx[:, k:k + 1] == iota).astype(jnp.float32)

    # NOTE: with bf16 parameter tables, cast `multihot` to bf16 here for full
    # MXU rate on v5e/v6e/v7x (0/1 is exact in bf16); f32 kept to match the
    # f32 PyTorch parameters bit-for-bit in spirit.
    emb = jnp.dot(multihot, table_ref[...], preferred_element_type=jnp.float32)

    # BertLayerNorm over the *real* hidden width.  Padded hidden columns of the
    # table are zero, so sums over H_pad equal sums over H; E[x^2]-E[x]^2 keeps
    # the padded columns out of the variance as well.
    inv_h = 1.0 / float(hidden)
    mean = jnp.sum(emb, axis=-1, keepdims=True) * inv_h
    ex2 = jnp.sum(emb * emb, axis=-1, keepdims=True) * inv_h
    var = ex2 - mean * mean
    normed = (emb - mean) * jax.lax.rsqrt(var + eps)

    # gamma/beta are zero-padded -> padded output lanes are written as 0.
    # Dropout: eval-mode identity.
    out_ref[...] = normed * gamma_ref[...] + beta_ref[...]


def permutation_invariant_2d_embeddings(input_ids, bbox, token_type_ids, params,
                                        eps=1e-12, tile_rows=128):
    B, S = input_ids.shape
    H = params["word"].shape[1]
    Vw = params["word"].shape[0]
    P = params["x"].shape[0]
    Vtt = params["tt"].shape[0]

    if token_type_ids is None:
        token_type_ids = jnp.zeros_like(input_ids)

    # ---- fused embedding table: [word; x; y; h; w; token_type], zero padded to
    # an MXU/lane friendly shape (contraction dim -> mult of 128, hidden ->
    # mult of 128 so output stores are lane-dense).
    v_tot = Vw + 4 * P + Vtt
    v_pad = _round_up(v_tot, 128)
    h_pad = _round_up(H, 128)
    table = jnp.concatenate(
        [params["word"], params["x"], params["y"], params["h"], params["w"],
         params["tt"]], axis=0).astype(jnp.float32)
    table = jnp.pad(table, ((0, v_pad - v_tot), (0, h_pad - H)))
    gamma = jnp.pad(params["gamma"].astype(jnp.float32).reshape(1, H),
                    ((0, 0), (0, h_pad - H)))
    beta = jnp.pad(params["beta"].astype(jnp.float32).reshape(1, H),
                   ((0, 0), (0, h_pad - H)))

    # ---- flatten (B, S) -> rows, precompute the 8 absolute fused-table rows.
    R = B * S
    r_pad = _round_up(R, tile_rows)
    ids = input_ids.reshape(R).astype(jnp.int32)
    tt = token_type_ids.reshape(R).astype(jnp.int32)
    bb = bbox.reshape(R, 4).astype(jnp.int32)
    x0, y0, x1, y1 = bb[:, 0], bb[:, 1], bb[:, 2], bb[:, 3]
    idx = jnp.stack([
        ids,                      # word
        Vw + x0,                  # left   (x table)
        Vw + x1,                  # right  (x table)
        Vw + P + y0,              # upper  (y table)
        Vw + P + y1,              # lower  (y table)
        Vw + 2 * P + (y1 - y0),   # height (h table)
        Vw + 3 * P + (x1 - x0),   # width  (w table)
        Vw + 4 * P + tt,          # token type
    ], axis=1)                     # (R, 8) int32
    idx = jnp.pad(idx, ((0, r_pad - R), (0, 0)))

    out = pl.pallas_call(
        functools.partial(_emb_kernel, eps=eps, hidden=H),
        out_shape=jax.ShapeDtypeStruct((r_pad, h_pad), jnp.float32),
        grid=(r_pad // tile_rows,),
        in_specs=[
            pl.BlockSpec((tile_rows, 8), lambda i: (i, 0)),   # fused indices
            pl.BlockSpec((v_pad, h_pad), lambda i: (0, 0)),   # fused table
            pl.BlockSpec((1, h_pad), lambda i: (0, 0)),       # LayerNorm gamma
            pl.BlockSpec((1, h_pad), lambda i: (0, 0)),       # LayerNorm beta
        ],
        out_specs=pl.BlockSpec((tile_rows, h_pad), lambda i: (i, 0)),
        compiler_params=pltpu.CompilerParams(
            dimension_semantics=("parallel",)),
    )(idx, table, gamma, beta)

    return out[:R, :H].reshape(B, S, H)


def _reference(input_ids, bbox, token_type_ids, params, eps=1e-12):
    """Pure-JAX reference mirroring the PyTorch forward (eval mode)."""
    take = lambda tab, i: jnp.take(tab, i, axis=0)
    emb = (take(params["word"], input_ids)
           + take(params["x"], bbox[:, :, 0])
           + take(params["y"], bbox[:, :, 1])
           + take(params["x"], bbox[:, :, 2])
           + take(params["y"], bbox[:, :, 3])
           + take(params["h"], bbox[:, :, 3] - bbox[:, :, 1])
           + take(params["w"], bbox[:, :, 2] - bbox[:, :, 0])
           + take(params["tt"], token_type_ids))
    mean = jnp.mean(emb, axis=-1, keepdims=True)
    var = jnp.mean((emb - mean) ** 2, axis=-1, keepdims=True)
    return (emb - mean) * jax.lax.rsqrt(var + eps) * params["gamma"] + params["beta"]


if __name__ == "__main__":
    # Small synthetic config.
    vocab_size = 64
    hidden_size = 32
    max_2d_position_embeddings = 128
    type_vocab_size = 2
    layer_norm_eps = 1e-12
    B, S = 2, 8

    key = jax.random.PRNGKey(0)
    keys = jax.random.split(key, 10)

    def init_table(k, n, h):
        return (0.02 * jax.random.normal(k, (n, h))).astype(jnp.float32)

    word = init_table(keys[0], vocab_size, hidden_size)
    word = word.at[0].set(0.0)  # padding_idx=0 -> zero row
    params = {
        "word": word,
        "x": init_table(keys[1], max_2d_position_embeddings, hidden_size),
        "y": init_table(keys[2], max_2d_position_embeddings, hidden_size),
        "h": init_table(keys[3], max_2d_position_embeddings, hidden_size),
        "w": init_table(keys[4], max_2d_position_embeddings, hidden_size),
        "tt": init_table(keys[5], type_vocab_size, hidden_size),
        "gamma": jnp.ones((hidden_size,), jnp.float32),
        "beta": jnp.zeros((hidden_size,), jnp.float32),
    }
    # NOTE: position_embeddings exist in __init__ but are unused in forward.

    input_ids = jax.random.randint(keys[6], (B, S), 0, vocab_size, dtype=jnp.int32)
    # bbox with x0<=x1, y0<=y1 and all coords/diffs < max_2d_position_embeddings.
    lo = jax.random.randint(keys[7], (B, S, 2), 0, 64, dtype=jnp.int32)
    ext = jax.random.randint(keys[8], (B, S, 2), 0, 64, dtype=jnp.int32)
    bbox = jnp.concatenate([lo, lo + ext], axis=-1)       # (x0, y0, x1, y1)
    token_type_ids = jax.random.randint(keys[9], (B, S), 0, type_vocab_size,
                                        dtype=jnp.int32)

    out = permutation_invariant_2d_embeddings(input_ids, bbox, token_type_ids,
                                              params, eps=layer_norm_eps)
    out = jax.block_until_ready(out)

    ref = _reference(input_ids, bbox, token_type_ids, params, eps=layer_norm_eps)
    # Observed error vs the f32 reference is ~1e-6 (fused f32 MXU matmul +
    # E[x^2]-E[x]^2 LayerNorm); tolerance kept tight enough to catch any
    # low-precision path or indexing bug.
    np.testing.assert_allclose(np.asarray(out), np.asarray(ref),
                               rtol=1e-4, atol=1e-4)
    print("KERNEL_OK")
</pallas_src>

<mosaic_0001>
module attributes {stable_mosaic.version = 11 : i64} {
  func.func @_emb_kernel(%arg0: i32, %arg1: memref<128x8xi32, #tpu.memory_space<vmem>>, %arg2: memref<640x128xf32, #tpu.memory_space<vmem>>, %arg3: memref<1x128xf32, #tpu.memory_space<vmem>>, %arg4: memref<1x128xf32, #tpu.memory_space<vmem>>, %arg5: memref<128x128xf32, #tpu.memory_space<vmem>>) attributes {dimension_semantics = [#tpu.dimension_semantics<parallel>], iteration_bounds = array<i64: 1>, scalar_prefetch = 0 : i64, scratch_operands = 0 : i64, tpu.core_type = #tpu.core_type<tc>, window_params = [{transform_indices = @transform_0, window_bounds = array<i64: 128, 8>}, {pipeline_mode = #tpu.pipeline_mode<synchronous>, transform_indices = @transform_1, window_bounds = array<i64: 640, 128>}, {pipeline_mode = #tpu.pipeline_mode<synchronous>, transform_indices = @transform_2, window_bounds = array<i64: 1, 128>}, {pipeline_mode = #tpu.pipeline_mode<synchronous>, transform_indices = @transform_3, window_bounds = array<i64: 1, 128>}, {transform_indices = @transform_4, window_bounds = array<i64: 128, 128>}]} {
    %c0 = arith.constant 0 : index
    %c0_0 = arith.constant 0 : index
    %0 = vector.load %arg1[%c0, %c0_0] : memref<128x8xi32, #tpu.memory_space<vmem>>, vector<128x8xi32>
    %1 = tpu.iota {dimensions = array<i32: 1>} : vector<128x640xi32>
    %cst = arith.constant 0.000000e+00 : f32
    %2 = vector.broadcast %cst : f32 to vector<128x640xf32>
    %3 = vector.extract_strided_slice %0 {offsets = [0, 0], sizes = [128, 1], strides = [1, 1]} : vector<128x8xi32> to vector<128x1xi32>
    %4 = vector.broadcast %3 : vector<128x1xi32> to vector<128x640xi32>
    %5 = arith.cmpi eq, %4, %1 : vector<128x640xi32>
    %6 = arith.extui %5 : vector<128x640xi1> to vector<128x640xi32>
    %7 = arith.sitofp %6 : vector<128x640xi32> to vector<128x640xf32>
    %8 = arith.addf %2, %7 : vector<128x640xf32>
    %9 = vector.extract_strided_slice %0 {offsets = [0, 1], sizes = [128, 1], strides = [1, 1]} : vector<128x8xi32> to vector<128x1xi32>
    %10 = vector.broadcast %9 : vector<128x1xi32> to vector<128x640xi32>
    %11 = arith.cmpi eq, %10, %1 : vector<128x640xi32>
    %12 = arith.extui %11 : vector<128x640xi1> to vector<128x640xi32>
    %13 = arith.sitofp %12 : vector<128x640xi32> to vector<128x640xf32>
    %14 = arith.addf %8, %13 : vector<128x640xf32>
    %15 = vector.extract_strided_slice %0 {offsets = [0, 2], sizes = [128, 1], strides = [1, 1]} : vector<128x8xi32> to vector<128x1xi32>
    %16 = vector.broadcast %15 : vector<128x1xi32> to vector<128x640xi32>
    %17 = arith.cmpi eq, %16, %1 : vector<128x640xi32>
    %18 = arith.extui %17 : vector<128x640xi1> to vector<128x640xi32>
    %19 = arith.sitofp %18 : vector<128x640xi32> to vector<128x640xf32>
    %20 = arith.addf %14, %19 : vector<128x640xf32>
    %21 = vector.extract_strided_slice %0 {offsets = [0, 3], sizes = [128, 1], strides = [1, 1]} : vector<128x8xi32> to vector<128x1xi32>
    %22 = vector.broadcast %21 : vector<128x1xi32> to vector<128x640xi32>
    %23 = arith.cmpi eq, %22, %1 : vector<128x640xi32>
    %24 = arith.extui %23 : vector<128x640xi1> to vector<128x640xi32>
    %25 = arith.sitofp %24 : vector<128x640xi32> to vector<128x640xf32>
    %26 = arith.addf %20, %25 : vector<128x640xf32>
    %27 = vector.extract_strided_slice %0 {offsets = [0, 4], sizes = [128, 1], strides = [1, 1]} : vector<128x8xi32> to vector<128x1xi32>
    %28 = vector.broadcast %27 : vector<128x1xi32> to vector<128x640xi32>
    %29 = arith.cmpi eq, %28, %1 : vector<128x640xi32>
    %30 = arith.extui %29 : vector<128x640xi1> to vector<128x640xi32>
    %31 = arith.sitofp %30 : vector<128x640xi32> to vector<128x640xf32>
    %32 = arith.addf %26, %31 : vector<128x640xf32>
    %33 = vector.extract_strided_slice %0 {offsets = [0, 5], sizes = [128, 1], strides = [1, 1]} : vector<128x8xi32> to vector<128x1xi32>
    %34 = vector.broadcast %33 : vector<128x1xi32> to vector<128x640xi32>
    %35 = arith.cmpi eq, %34, %1 : vector<128x640xi32>
    %36 = arith.extui %35 : vector<128x640xi1> to vector<128x640xi32>
    %37 = arith.sitofp %36 : vector<128x640xi32> to vector<128x640xf32>
    %38 = arith.addf %32, %37 : vector<128x640xf32>
    %39 = vector.extract_strided_slice %0 {offsets = [0, 6], sizes = [128, 1], strides = [1, 1]} : vector<128x8xi32> to vector<128x1xi32>
    %40 = vector.broadcast %39 : vector<128x1xi32> to vector<128x640xi32>
    %41 = arith.cmpi eq, %40, %1 : vector<128x640xi32>
    %42 = arith.extui %41 : vector<128x640xi1> to vector<128x640xi32>
    %43 = arith.sitofp %42 : vector<128x640xi32> to vector<128x640xf32>
    %44 = arith.addf %38, %43 : vector<128x640xf32>
    %45 = vector.extract_strided_slice %0 {offsets = [0, 7], sizes = [128, 1], strides = [1, 1]} : vector<128x8xi32> to vector<128x1xi32>
    %46 = vector.broadcast %45 : vector<128x1xi32> to vector<128x640xi32>
    %47 = arith.cmpi eq, %46, %1 : vector<128x640xi32>
    %48 = arith.extui %47 : vector<128x640xi1> to vector<128x640xi32>
    %49 = arith.sitofp %48 : vector<128x640xi32> to vector<128x640xf32>
    %50 = arith.addf %44, %49 : vector<128x640xf32>
    %c0_1 = arith.constant 0 : index
    %c0_2 = arith.constant 0 : index
    %51 = vector.load %arg2[%c0_1, %c0_2] : memref<640x128xf32, #tpu.memory_space<vmem>>, vector<640x128xf32>
    %cst_3 = arith.constant dense<0.000000e+00> : vector<128x128xf32>
    %52 = tpu.matmul %50, %51, %cst_3 {dimension_numbers = #tpu.dot_dimension_numbers<[1], [0], [0], [1], [0, 0, 1, 1], [], []>} : vector<128x640xf32>, vector<640x128xf32>, vector<128x128xf32> -> vector<128x128xf32>
    %cst_4 = arith.constant dense<0.000000e+00> : vector<128xf32>
    %53 = vector.multi_reduction <add>, %52, %cst_4 [1] : vector<128x128xf32> to vector<128xf32>
    %54 = vector.shape_cast %53 : vector<128xf32> to vector<128x1xf32>
    %cst_5 = arith.constant 3.125000e-02 : f32
    %55 = vector.broadcast %cst_5 : f32 to vector<128x1xf32>
    %56 = arith.mulf %54, %55 : vector<128x1xf32>
    %57 = arith.mulf %52, %52 : vector<128x128xf32>
    %cst_6 = arith.constant dense<0.000000e+00> : vector<128xf32>
    %58 = vector.multi_reduction <add>, %57, %cst_6 [1] : vector<128x128xf32> to vector<128xf32>
    %59 = vector.shape_cast %58 : vector<128xf32> to vector<128x1xf32>
    %cst_7 = arith.constant 3.125000e-02 : f32
    %60 = vector.broadcast %cst_7 : f32 to vector<128x1xf32>
    %61 = arith.mulf %59, %60 : vector<128x1xf32>
    %62 = arith.mulf %56, %56 : vector<128x1xf32>
    %63 = arith.subf %61, %62 : vector<128x1xf32>
    %64 = vector.broadcast %56 : vector<128x1xf32> to vector<128x128xf32>
    %65 = arith.subf %52, %64 : vector<128x128xf32>
    %cst_8 = arith.constant 9.99999996E-13 : f32
    %66 = vector.broadcast %cst_8 : f32 to vector<128x1xf32>
    %67 = arith.addf %63, %66 : vector<128x1xf32>
    %68 = math.rsqrt %67 : vector<128x1xf32>
    %69 = vector.broadcast %68 : vector<128x1xf32> to vector<128x128xf32>
    %70 = arith.mulf %65, %69 : vector<128x128xf32>
    %c0_9 = arith.constant 0 : index
    %c0_10 = arith.constant 0 : index
    %71 = vector.load %arg3[%c0_9, %c0_10] : memref<1x128xf32, #tpu.memory_space<vmem>>, vector<1x128xf32>
    %72 = vector.broadcast %71 : vector<1x128xf32> to vector<128x128xf32>
    %73 = arith.mulf %70, %72 : vector<128x128xf32>
    %c0_11 = arith.constant 0 : index
    %c0_12 = arith.constant 0 : index
    %74 = vector.load %arg4[%c0_11, %c0_12] : memref<1x128xf32, #tpu.memory_space<vmem>>, vector<1x128xf32>
    %75 = vector.broadcast %74 : vector<1x128xf32> to vector<128x128xf32>
    %76 = arith.addf %73, %75 : vector<128x128xf32>
    %c0_13 = arith.constant 0 : index
    %c0_14 = arith.constant 0 : index
    %77 = vector.load %arg5[%c0_13, %c0_14] : memref<128x128xf32, #tpu.memory_space<vmem>>, vector<128x128xf32>
    tpu.vector_store %arg5[%c0_13, %c0_14], %76 {strides = array<i32>} : memref<128x128xf32, #tpu.memory_space<vmem>>, vector<128x128xf32>,
    return
  }
  func.func @transform_0(%arg0: i32) -> (i32, i32) {
    %c0_i32 = arith.constant 0 : i32
    %c0_i32_0 = arith.constant 0 : i32
    return %arg0, %c0_i32 : i32, i32
  }
  func.func @transform_1(%arg0: i32) -> (i32, i32) {
    %c0_i32 = arith.constant 0 : i32
    %c0_i32_0 = arith.constant 0 : i32
    %c0_i32_1 = arith.constant 0 : i32
    return %c0_i32, %c0_i32_0 : i32, i32
  }
  func.func @transform_2(%arg0: i32) -> (i32, i32) {
    %c0_i32 = arith.constant 0 : i32
    %c0_i32_0 = arith.constant 0 : i32
    %c0_i32_1 = arith.constant 0 : i32
    return %c0_i32, %c0_i32_0 : i32, i32
  }
  func.func @transform_3(%arg0: i32) -> (i32, i32) {
    %c0_i32 = arith.constant 0 : i32
    %c0_i32_0 = arith.constant 0 : i32
    %c0_i32_1 = arith.constant 0 : i32
    return %c0_i32, %c0_i32_0 : i32, i32
  }
  func.func @transform_4(%arg0: i32) -> (i32, i32) {
    %c0_i32 = arith.constant 0 : i32
    %c0_i32_0 = arith.constant 0 : i32
    return %arg0, %c0_i32 : i32, i32
  }
}

</mosaic_0001>

<llo_original>
// kernel: tpu_custom_call.1
$region0: #{tpu_custom_call.1}
  #allocation0 [shape = 'u32[]', space=smem, size = 0x4, offset = 0x4, fixed_abs, tag = 'smem constant byte address 0x4 - core index']
  #allocation1 [shape = 'u32[72,128]{1,0:T(1,128)}', space=vmem, size = 0x9000, scoped, tag = 'internal scratch']
  %s0 = inlined_call_operand.vmem [shape: s32[128,8], index: 0, kind: input, shape index: {}]
  %s1 = inlined_call_operand.hbm [shape: f32[640,128], index: 1, kind: input, shape index: {}]
  %s2 = inlined_call_operand.vmem [shape: f32[1,128], index: 2, kind: input, shape index: {}]
  %s3 = inlined_call_operand.vmem [shape: f32[1,128], index: 3, kind: input, shape index: {}]
  %s4 = inlined_call_operand.hbm [shape: f32[128,128], index: 4, kind: output, shape index: {}]
  %s5 = sld [smem:[#allocation0]]
  $region30: #{tpu_custom_call.1} parent=0
    _
  %s7 = ssub.s32 1, %s5
  %s8 = scalar_select 0, %s7, %s5
  $region1: #{tpu_custom_call.1} parent=0
    #allocation2 [shape = 'u8[327680]{0}', space=vmem, size = 0x50000, scoped, tag = 'input window, operand 1, single buffered']
    #allocation3 [shape = 's32[1]{0}', space=sflag, size = 0x4, scoped, tag = 'scoped memory for tpu_custom_call.1']
    #allocation4 [shape = 's32[1]{0}', space=sflag, size = 0x4, scoped, tag = 'scoped memory for tpu_custom_call.1']
    #allocation5 [shape = 'u8[65536]{0}', space=vmem, size = 0x10000, scoped, tag = 'output window, operand 0, single buffered']
    %9 = vsyncpa [#allocation3], 0
    %10 = vsyncpa [#allocation4], 0
    // Predicated region
    $region2: #{tpu_custom_call.1} parent=1 // pred_check
      _
    $region3: #{tpu_custom_call.1} parent=1 // pred_check_branch
      %12 = sbr.rel (0) target = $region5
    $region4: #{tpu_custom_call.1} parent=1 // pred_region
      _
    $region5: #{tpu_custom_call.1} parent=1 // pred_fallthru
      _
    // Predicated region
    $region6: #{tpu_custom_call.1} parent=1 // pred_check
      _
    $region7: #{tpu_custom_call.1} parent=1 // pred_check_branch
      %14 = sbr.rel (0) target = $region9
    $region8: #{tpu_custom_call.1} parent=1 // pred_region
      %16 = vsyncadd [#allocation3], 0
      %s17 = sshll.u32 %s1, 4
      %s18 = int_to_ptr.hbm [resolvable:$true] %s17
      %s19 = sshll.u32 [#allocation2], 4
      %s20 = int_to_ptr.vmem [resolvable:$true] %s19
      %25 = dma.hbm_to_vmem [thread:$0]  %s18, 10240, %s20, [#allocation3], 128, 128, 8
    $region9: #{tpu_custom_call.1} parent=1 // pred_fallthru
      _
    // Predicated region
    $region10: #{tpu_custom_call.1} parent=1 // pred_check
      _
    $region11: #{tpu_custom_call.1} parent=1 // pred_check_branch
      %27 = sbr.rel (0) target = $region13
    $region12: #{tpu_custom_call.1} parent=1 // pred_region
      _
    $region13: #{tpu_custom_call.1} parent=1 // pred_fallthru
      _
    // Predicated region
    $region14: #{tpu_custom_call.1} parent=1 // pred_check
      _
    $region15: #{tpu_custom_call.1} parent=1 // pred_check_branch
      %29 = sbr.rel (0) target = $region17
    $region16: #{tpu_custom_call.1} parent=1 // pred_region
      _
    $region17: #{tpu_custom_call.1} parent=1 // pred_fallthru
      _
    // Predicated region
    $region18: #{tpu_custom_call.1} parent=1 // pred_check
      _
    $region19: #{tpu_custom_call.1} parent=1 // pred_check_branch
      %31 = sbr.rel (0) target = $region21
    $region20: #{tpu_custom_call.1} parent=1 // pred_region
      %33 = dma.done [#allocation3], 10240
    $region21: #{tpu_custom_call.1} parent=1 // pred_fallthru
      _
    %v34 = vld [vmem:[%s0] sm:$0xff]
    %v35 = vld [vmem:[%s0 + $0x8] sm:$0xff]
    %v36 = vld [vmem:[%s0 + $0x10] sm:$0xff]
    %v37 = vld [vmem:[%s0 + $0x18] sm:$0xff]
    %v38 = vld [vmem:[%s0 + $0x20] sm:$0xff]
    %v39 = vld [vmem:[%s0 + $0x28] sm:$0xff]
    %v40 = vld [vmem:[%s0 + $0x30] sm:$0xff]
    %v41 = vld [vmem:[%s0 + $0x38] sm:$0xff]
    %v42 = vld [vmem:[%s0 + $0x40] sm:$0xff]
    %v43 = vld [vmem:[%s0 + $0x48] sm:$0xff]
    %v44 = vld [vmem:[%s0 + $0x50] sm:$0xff]
    %v45 = vld [vmem:[%s0 + $0x58] sm:$0xff]
    %v46 = vld [vmem:[%s0 + $0x60] sm:$0xff]
    %v47 = vld [vmem:[%s0 + $0x68] sm:$0xff]
    %v48 = vld [vmem:[%s0 + $0x70] sm:$0xff]
    %v49 = vld [vmem:[%s0 + $0x78] sm:$0xff]
    %v50 = vlaneseq
    %v51 = vand.u32 %v50, 127
    %v52 = vadd.s32 %v51, 128
    %v53 = vadd.s32 %v51, 256
    %v54 = vadd.s32 %v51, 384
    %v55 = vadd.s32 %v51, 512
    %56 = vset.pattern.permute.xlu0 0
    %57 = vperm.xlu0 %56, %v34
    %v58 = vpop.permute.xlu0 %57
    %59 = vset.pattern.permute.xlu0 0
    %60 = vperm.xlu0 %59, %v35
    %v61 = vpop.permute.xlu0 %60
    %62 = vset.pattern.permute.xlu0 0
    %63 = vperm.xlu0 %62, %v36
    %v64 = vpop.permute.xlu0 %63
    %65 = vset.pattern.permute.xlu0 0
    %66 = vperm.xlu0 %65, %v37
    %v67 = vpop.permute.xlu0 %66
    %68 = vset.pattern.permute.xlu0 0
    %69 = vperm.xlu0 %68, %v38
    %v70 = vpop.permute.xlu0 %69
    %71 = vset.pattern.permute.xlu0 0
    %72 = vperm.xlu0 %71, %v39
    %v73 = vpop.permute.xlu0 %72
    %74 = vset.pattern.permute.xlu0 0
    %75 = vperm.xlu0 %74, %v40
    %v76 = vpop.permute.xlu0 %75
    %77 = vset.pattern.permute.xlu0 0
    %78 = vperm.xlu0 %77, %v41
    %v79 = vpop.permute.xlu0 %78
    %80 = vset.pattern.permute.xlu0 0
    %81 = vperm.xlu0 %80, %v42
    %v82 = vpop.permute.xlu0 %81
    %83 = vset.pattern.permute.xlu0 0
    %84 = vperm.xlu0 %83, %v43
    %v85 = vpop.permute.xlu0 %84
    %86 = vset.pattern.permute.xlu0 0
    %87 = vperm.xlu0 %86, %v44
    %v88 = vpop.permute.xlu0 %87
    %89 = vset.pattern.permute.xlu0 0
    %90 = vperm.xlu0 %89, %v45
    %v91 = vpop.permute.xlu0 %90
    %92 = vset.pattern.permute.xlu0 0
    %93 = vperm.xlu0 %92, %v46
    %v94 = vpop.permute.xlu0 %93
    %95 = vset.pattern.permute.xlu0 0
    %96 = vperm.xlu0 %95, %v47
    %v97 = vpop.permute.xlu0 %96
    %98 = vset.pattern.permute.xlu0 0
    %99 = vperm.xlu0 %98, %v48
    %v100 = vpop.permute.xlu0 %99
    %101 = vset.pattern.permute.xlu0 0
    %102 = vperm.xlu0 %101, %v49
    %v103 = vpop.permute.xlu0 %102
    %vm104 = vcmp.eq.s32.totalorder %v58, %v51
    %vm105 = vcmp.eq.s32.totalorder %v58, %v52
    %vm106 = vcmp.eq.s32.totalorder %v58, %v53
    %vm107 = vcmp.eq.s32.totalorder %v58, %v54
    %vm108 = vcmp.eq.s32.totalorder %v58, %v55
    %vm109 = vcmp.eq.s32.totalorder %v61, %v51
    %vm110 = vcmp.eq.s32.totalorder %v61, %v52
    %vm111 = vcmp.eq.s32.totalorder %v61, %v53
    %vm112 = vcmp.eq.s32.totalorder %v61, %v54
    %vm113 = vcmp.eq.s32.totalorder %v61, %v55
    %vm114 = vcmp.eq.s32.totalorder %v64, %v51
    %vm115 = vcmp.eq.s32.totalorder %v64, %v52
    %vm116 = vcmp.eq.s32.totalorder %v64, %v53
    %vm117 = vcmp.eq.s32.totalorder %v64, %v54
    %vm118 = vcmp.eq.s32.totalorder %v64, %v55
    %vm119 = vcmp.eq.s32.totalorder %v67, %v51
    %vm120 = vcmp.eq.s32.totalorder %v67, %v52
    %vm121 = vcmp.eq.s32.totalorder %v67, %v53
    %vm122 = vcmp.eq.s32.totalorder %v67, %v54
    %vm123 = vcmp.eq.s32.totalorder %v67, %v55
    %vm124 = vcmp.eq.s32.totalorder %v70, %v51
    %vm125 = vcmp.eq.s32.totalorder %v70, %v52
    %vm126 = vcmp.eq.s32.totalorder %v70, %v53
    %vm127 = vcmp.eq.s32.totalorder %v70, %v54
    %vm128 = vcmp.eq.s32.totalorder %v70, %v55
    %vm129 = vcmp.eq.s32.totalorder %v73, %v51
    %vm130 = vcmp.eq.s32.totalorder %v73, %v52
    %vm131 = vcmp.eq.s32.totalorder %v73, %v53
    %vm132 = vcmp.eq.s32.totalorder %v73, %v54
    %vm133 = vcmp.eq.s32.totalorder %v73, %v55
    %vm134 = vcmp.eq.s32.totalorder %v76, %v51
    %vm135 = vcmp.eq.s32.totalorder %v76, %v52
    %vm136 = vcmp.eq.s32.totalorder %v76, %v53
    %vm137 = vcmp.eq.s32.totalorder %v76, %v54
    %vm138 = vcmp.eq.s32.totalorder %v76, %v55
    %vm139 = vcmp.eq.s32.totalorder %v79, %v51
    %vm140 = vcmp.eq.s32.totalorder %v79, %v52
    %vm141 = vcmp.eq.s32.totalorder %v79, %v53
    %vm142 = vcmp.eq.s32.totalorder %v79, %v54
    %vm143 = vcmp.eq.s32.totalorder %v79, %v55
    %vm144 = vcmp.eq.s32.totalorder %v82, %v51
    %vm145 = vcmp.eq.s32.totalorder %v82, %v52
    %vm146 = vcmp.eq.s32.totalorder %v82, %v53
    %vm147 = vcmp.eq.s32.totalorder %v82, %v54
    %vm148 = vcmp.eq.s32.totalorder %v82, %v55
    %vm149 = vcmp.eq.s32.totalorder %v85, %v51
    %vm150 = vcmp.eq.s32.totalorder %v85, %v52
    %vm151 = vcmp.eq.s32.totalorder %v85, %v53
    %vm152 = vcmp.eq.s32.totalorder %v85, %v54
    %vm153 = vcmp.eq.s32.totalorder %v85, %v55
    %vm154 = vcmp.eq.s32.totalorder %v88, %v51
    %vm155 = vcmp.eq.s32.totalorder %v88, %v52
    %vm156 = vcmp.eq.s32.totalorder %v88, %v53
    %vm157 = vcmp.eq.s32.totalorder %v88, %v54
    %vm158 = vcmp.eq.s32.totalorder %v88, %v55
    %vm159 = vcmp.eq.s32.totalorder %v91, %v51
    %vm160 = vcmp.eq.s32.totalorder %v91, %v52
    %vm161 = vcmp.eq.s32.totalorder %v91, %v53
    %vm162 = vcmp.eq.s32.totalorder %v91, %v54
    %vm163 = vcmp.eq.s32.totalorder %v91, %v55
    %vm164 = vcmp.eq.s32.totalorder %v94, %v51
    %vm165 = vcmp.eq.s32.totalorder %v94, %v52
    %vm166 = vcmp.eq.s32.totalorder %v94, %v53
    %vm167 = vcmp.eq.s32.totalorder %v94, %v54
    %vm168 = vcmp.eq.s32.totalorder %v94, %v55
    %vm169 = vcmp.eq.s32.totalorder %v97, %v51
    %vm170 = vcmp.eq.s32.totalorder %v97, %v52
    %vm171 = vcmp.eq.s32.totalorder %v97, %v53
    %vm172 = vcmp.eq.s32.totalorder %v97, %v54
    %vm173 = vcmp.eq.s32.totalorder %v97, %v55
    %vm174 = vcmp.eq.s32.totalorder %v100, %v51
    %vm175 = vcmp.eq.s32.totalorder %v100, %v52
    %vm176 = vcmp.eq.s32.totalorder %v100, %v53
    %vm177 = vcmp.eq.s32.totalorder %v100, %v54
    %vm178 = vcmp.eq.s32.totalorder %v100, %v55
    %vm179 = vcmp.eq.s32.totalorder %v103, %v51
    %vm180 = vcmp.eq.s32.totalorder %v103, %v52
    %vm181 = vcmp.eq.s32.totalorder %v103, %v53
    %vm182 = vcmp.eq.s32.totalorder %v103, %v54
    %vm183 = vcmp.eq.s32.totalorder %v103, %v55
    %v184 = vsel %vm104, 1, 0
    %v185 = vsel %vm105, 1, 0
    %v186 = vsel %vm106, 1, 0
    %v187 = vsel %vm107, 1, 0
    %v188 = vsel %vm108, 1, 0
    %v189 = vsel %vm109, 1, 0
    %v190 = vsel %vm110, 1, 0
    %v191 = vsel %vm111, 1, 0
    %v192 = vsel %vm112, 1, 0
    %v193 = vsel %vm113, 1, 0
    %v194 = vsel %vm114, 1, 0
    %v195 = vsel %vm115, 1, 0
    %v196 = vsel %vm116, 1, 0
    %v197 = vsel %vm117, 1, 0
    %v198 = vsel %vm118, 1, 0
    %v199 = vsel %vm119, 1, 0
    %v200 = vsel %vm120, 1, 0
    %v201 = vsel %vm121, 1, 0
    %v202 = vsel %vm122, 1, 0
    %v203 = vsel %vm123, 1, 0
    %v204 = vsel %vm124, 1, 0
    %v205 = vsel %vm125, 1, 0
    %v206 = vsel %vm126, 1, 0
    %v207 = vsel %vm127, 1, 0
    %v208 = vsel %vm128, 1, 0
    %v209 = vsel %vm129, 1, 0
    %v210 = vsel %vm130, 1, 0
    %v211 = vsel %vm131, 1, 0
    %v212 = vsel %vm132, 1, 0
    %v213 = vsel %vm133, 1, 0
    %v214 = vsel %vm134, 1, 0
    %v215 = vsel %vm135, 1, 0
    %v216 = vsel %vm136, 1, 0
    %v217 = vsel %vm137, 1, 0
    %v218 = vsel %vm138, 1, 0
    %v219 = vsel %vm139, 1, 0
    %v220 = vsel %vm140, 1, 0
    %v221 = vsel %vm141, 1, 0
    %v222 = vsel %vm142, 1, 0
    %v223 = vsel %vm143, 1, 0
    %v224 = vsel %vm144, 1, 0
    %v225 = vsel %vm145, 1, 0
    %v226 = vsel %vm146, 1, 0
    %v227 = vsel %vm147, 1, 0
    %v228 = vsel %vm148, 1, 0
    %v229 = vsel %vm149, 1, 0
    %v230 = vsel %vm150, 1, 0
    %v231 = vsel %vm151, 1, 0
    %v232 = vsel %vm152, 1, 0
    %v233 = vsel %vm153, 1, 0
    %v234 = vsel %vm154, 1, 0
    %v235 = vsel %vm155, 1, 0
    %v236 = vsel %vm156, 1, 0
    %v237 = vsel %vm157, 1, 0
    %v238 = vsel %vm158, 1, 0
    %v239 = vsel %vm159, 1, 0
    %v240 = vsel %vm160, 1, 0
    %v241 = vsel %vm161, 1, 0
    %v242 = vsel %vm162, 1, 0
    %v243 = vsel %vm163, 1, 0
    %v244 = vsel %vm164, 1, 0
    %v245 = vsel %vm165, 1, 0
    %v246 = vsel %vm166, 1, 0
    %v247 = vsel %vm167, 1, 0
    %v248 = vsel %vm168, 1, 0
    %v249 = vsel %vm169, 1, 0
    %v250 = vsel %vm170, 1, 0
    %v251 = vsel %vm171, 1, 0
    %v252 = vsel %vm172, 1, 0
    %v253 = vsel %vm173, 1, 0
    %v254 = vsel %vm174, 1, 0
    %v255 = vsel %vm175, 1, 0
    %v256 = vsel %vm176, 1, 0
    %v257 = vsel %vm177, 1, 0
    %v258 = vsel %vm178, 1, 0
    %v259 = vsel %vm179, 1, 0
    %v260 = vsel %vm180, 1, 0
    %v261 = vsel %vm181, 1, 0
    %v262 = vsel %vm182, 1, 0
    %v263 = vsel %vm183, 1, 0
    %v264 = vcvt.s32.f32 %v184
    %v265 = vcvt.s32.f32 %v185
    %v266 = vcvt.s32.f32 %v186
    %v267 = vcvt.s32.f32 %v187
    %v268 = vcvt.s32.f32 %v188
    %v269 = vcvt.s32.f32 %v189
    %v270 = vcvt.s32.f32 %v190
    %v271 = vcvt.s32.f32 %v191
    %v272 = vcvt.s32.f32 %v192
    %v273 = vcvt.s32.f32 %v193
    %v274 = vcvt.s32.f32 %v194
    %v275 = vcvt.s32.f32 %v195
    %v276 = vcvt.s32.f32 %v196
    %v277 = vcvt.s32.f32 %v197
    %v278 = vcvt.s32.f32 %v198
    %v279 = vcvt.s32.f32 %v199
    %v280 = vcvt.s32.f32 %v200
    %v281 = vcvt.s32.f32 %v201
    %v282 = vcvt.s32.f32 %v202
    %v283 = vcvt.s32.f32 %v203
    %v284 = vcvt.s32.f32 %v204
    %v285 = vcvt.s32.f32 %v205
    %v286 = vcvt.s32.f32 %v206
    %v287 = vcvt.s32.f32 %v207
    %v288 = vcvt.s32.f32 %v208
    %v289 = vcvt.s32.f32 %v209
    %v290 = vcvt.s32.f32 %v210
    %v291 = vcvt.s32.f32 %v211
    %v292 = vcvt.s32.f32 %v212
    %v293 = vcvt.s32.f32 %v213
    %v294 = vcvt.s32.f32 %v214
    %v295 = vcvt.s32.f32 %v215
    %v296 = vcvt.s32.f32 %v216
    %v297 = vcvt.s32.f32 %v217
    %v298 = vcvt.s32.f32 %v218
    %v299 = vcvt.s32.f32 %v219
    %v300 = vcvt.s32.f32 %v220
    %v301 = vcvt.s32.f32 %v221
    %v302 = vcvt.s32.f32 %v222
    %v303 = vcvt.s32.f32 %v223
    %v304 = vcvt.s32.f32 %v224
    %v305 = vcvt.s32.f32 %v225
    %v306 = vcvt.s32.f32 %v226
    %v307 = vcvt.s32.f32 %v227
    %v308 = vcvt.s32.f32 %v228
    %v309 = vcvt.s32.f32 %v229
    %v310 = vcvt.s32.f32 %v230
    %v311 = vcvt.s32.f32 %v231
    %v312 = vcvt.s32.f32 %v232
    %v313 = vcvt.s32.f32 %v233
    %v314 = vcvt.s32.f32 %v234
    %v315 = vcvt.s32.f32 %v235
    %v316 = vcvt.s32.f32 %v236
    %v317 = vcvt.s32.f32 %v237
    %v318 = vcvt.s32.f32 %v238
    %v319 = vcvt.s32.f32 %v239
    %v320 = vcvt.s32.f32 %v240
    %v321 = vcvt.s32.f32 %v241
    %v322 = vcvt.s32.f32 %v242
    %v323 = vcvt.s32.f32 %v243
    %v324 = vcvt.s32.f32 %v244
    %v325 = vcvt.s32.f32 %v245
    %v326 = vcvt.s32.f32 %v246
    %v327 = vcvt.s32.f32 %v247
    %v328 = vcvt.s32.f32 %v248
    %v329 = vcvt.s32.f32 %v249
    %v330 = vcvt.s32.f32 %v250
    %v331 = vcvt.s32.f32 %v251
    %v332 = vcvt.s32.f32 %v252
    %v333 = vcvt.s32.f32 %v253
    %v334 = vcvt.s32.f32 %v254
    %v335 = vcvt.s32.f32 %v255
    %v336 = vcvt.s32.f32 %v256
    %v337 = vcvt.s32.f32 %v257
    %v338 = vcvt.s32.f32 %v258
    %v339 = vcvt.s32.f32 %v259
    %v340 = vcvt.s32.f32 %v260
    %v341 = vcvt.s32.f32 %v261
    %v342 = vcvt.s32.f32 %v262
    %v343 = vcvt.s32.f32 %v263
    %v344 = vadd.f32 %v264, 0.0
    %v345 = vadd.f32 %v265, 0.0
    %v346 = vadd.f32 %v266, 0.0
    %v347 = vadd.f32 %v267, 0.0
    %v348 = vadd.f32 %v268, 0.0
    %v349 = vadd.f32 %v269, 0.0
    %v350 = vadd.f32 %v270, 0.0
    %v351 = vadd.f32 %v271, 0.0
    %v352 = vadd.f32 %v272, 0.0
    %v353 = vadd.f32 %v273, 0.0
    %v354 = vadd.f32 %v274, 0.0
    %v355 = vadd.f32 %v275, 0.0
    %v356 = vadd.f32 %v276, 0.0
    %v357 = vadd.f32 %v277, 0.0
    %v358 = vadd.f32 %v278, 0.0
    %v359 = vadd.f32 %v279, 0.0
    %v360 = vadd.f32 %v280, 0.0
    %v361 = vadd.f32 %v281, 0.0
    %v362 = vadd.f32 %v282, 0.0
    %v363 = vadd.f32 %v283, 0.0
    %v364 = vadd.f32 %v284, 0.0
    %v365 = vadd.f32 %v285, 0.0
    %v366 = vadd.f32 %v286, 0.0
    %v367 = vadd.f32 %v287, 0.0
    %v368 = vadd.f32 %v288, 0.0
    %v369 = vadd.f32 %v289, 0.0
    %v370 = vadd.f32 %v290, 0.0
    %v371 = vadd.f32 %v291, 0.0
    %v372 = vadd.f32 %v292, 0.0
    %v373 = vadd.f32 %v293, 0.0
    %v374 = vadd.f32 %v294, 0.0
    %v375 = vadd.f32 %v295, 0.0
    %v376 = vadd.f32 %v296, 0.0
    %v377 = vadd.f32 %v297, 0.0
    %v378 = vadd.f32 %v298, 0.0
    %v379 = vadd.f32 %v299, 0.0
    %v380 = vadd.f32 %v300, 0.0
    %v381 = vadd.f32 %v301, 0.0
    %v382 = vadd.f32 %v302, 0.0
    %v383 = vadd.f32 %v303, 0.0
    %v384 = vadd.f32 %v304, 0.0
    %v385 = vadd.f32 %v305, 0.0
    %v386 = vadd.f32 %v306, 0.0
    %v387 = vadd.f32 %v307, 0.0
    %v388 = vadd.f32 %v308, 0.0
    %v389 = vadd.f32 %v309, 0.0
    %v390 = vadd.f32 %v310, 0.0
    %v391 = vadd.f32 %v311, 0.0
    %v392 = vadd.f32 %v312, 0.0
    %v393 = vadd.f32 %v313, 0.0
    %v394 = vadd.f32 %v314, 0.0
    %v395 = vadd.f32 %v315, 0.0
    %v396 = vadd.f32 %v316, 0.0
    %v397 = vadd.f32 %v317, 0.0
    %v398 = vadd.f32 %v318, 0.0
    %v399 = vadd.f32 %v319, 0.0
    %v400 = vadd.f32 %v320, 0.0
    %v401 = vadd.f32 %v321, 0.0
    %v402 = vadd.f32 %v322, 0.0
    %v403 = vadd.f32 %v323, 0.0
    %v404 = vadd.f32 %v324, 0.0
    %v405 = vadd.f32 %v325, 0.0
    %v406 = vadd.f32 %v326, 0.0
    %v407 = vadd.f32 %v327, 0.0
    %v408 = vadd.f32 %v328, 0.0
    %v409 = vadd.f32 %v329, 0.0
    %v410 = vadd.f32 %v330, 0.0
    %v411 = vadd.f32 %v331, 0.0
    %v412 = vadd.f32 %v332, 0.0
    %v413 = vadd.f32 %v333, 0.0
    %v414 = vadd.f32 %v334, 0.0
    %v415 = vadd.f32 %v335, 0.0
    %v416 = vadd.f32 %v336, 0.0
    %v417 = vadd.f32 %v337, 0.0
    %v418 = vadd.f32 %v338, 0.0
    %v419 = vadd.f32 %v339, 0.0
    %v420 = vadd.f32 %v340, 0.0
    %v421 = vadd.f32 %v341, 0.0
    %v422 = vadd.f32 %v342, 0.0
    %v423 = vadd.f32 %v343, 0.0
    %424 = vset.pattern.permute.xlu0 1
    %425 = vperm.xlu0 %424, %v34
    %v426 = vpop.permute.xlu0 %425
    %427 = vset.pattern.permute.xlu0 1
    %428 = vperm.xlu0 %427, %v35
    %v429 = vpop.permute.xlu0 %428
    %430 = vset.pattern.permute.xlu0 1
    %431 = vperm.xlu0 %430, %v36
    %v432 = vpop.permute.xlu0 %431
    %433 = vset.pattern.permute.xlu0 1
    %434 = vperm.xlu0 %433, %v37
    %v435 = vpop.permute.xlu0 %434
    %436 = vset.pattern.permute.xlu0 1
    %437 = vperm.xlu0 %436, %v38
    %v438 = vpop.permute.xlu0 %437
    %439 = vset.pattern.permute.xlu0 1
    %440 = vperm.xlu0 %439, %v39
    %v441 = vpop.permute.xlu0 %440
    %442 = vset.pattern.permute.xlu0 1
    %443 = vperm.xlu0 %442, %v40
    %v444 = vpop.permute.xlu0 %443
    %445 = vset.pattern.permute.xlu0 1
    %446 = vperm.xlu0 %445, %v41
    %v447 = vpop.permute.xlu0 %446
    %448 = vset.pattern.permute.xlu0 1
    %449 = vperm.xlu0 %448, %v42
    %v450 = vpop.permute.xlu0 %449
    %451 = vset.pattern.permute.xlu0 1
    %452 = vperm.xlu0 %451, %v43
    %v453 = vpop.permute.xlu0 %452
    %454 = vset.pattern.permute.xlu0 1
    %455 = vperm.xlu0 %454, %v44
    %v456 = vpop.permute.xlu0 %455
    %457 = vset.pattern.permute.xlu0 1
    %458 = vperm.xlu0 %457, %v45
    %v459 = vpop.permute.xlu0 %458
    %460 = vset.pattern.permute.xlu0 1
    %461 = vperm.xlu0 %460, %v46
    %v462 = vpop.permute.xlu0 %461
    %463 = vset.pattern.permute.xlu0 1
    %464 = vperm.xlu0 %463, %v47
    %v465 = vpop.permute.xlu0 %464
    %466 = vset.pattern.permute.xlu0 1
    %467 = vperm.xlu0 %466, %v48
    %v468 = vpop.permute.xlu0 %467
    %469 = vset.pattern.permute.xlu0 1
    %470 = vperm.xlu0 %469, %v49
    %v471 = vpop.permute.xlu0 %470
    %vm472 = vcmp.eq.s32.totalorder %v426, %v51
    %vm473 = vcmp.eq.s32.totalorder %v426, %v52
    %vm474 = vcmp.eq.s32.totalorder %v426, %v53
    %vm475 = vcmp.eq.s32.totalorder %v426, %v54
    %vm476 = vcmp.eq.s32.totalorder %v426, %v55
    %vm477 = vcmp.eq.s32.totalorder %v429, %v51
    %vm478 = vcmp.eq.s32.totalorder %v429, %v52
    %vm479 = vcmp.eq.s32.totalorder %v429, %v53
    %vm480 = vcmp.eq.s32.totalorder %v429, %v54
    %vm481 = vcmp.eq.s32.totalorder %v429, %v55
    %vm482 = vcmp.eq.s32.totalorder %v432, %v51
    %vm483 = vcmp.eq.s32.totalorder %v432, %v52
    %vm484 = vcmp.eq.s32.totalorder %v432, %v53
    %vm485 = vcmp.eq.s32.totalorder %v432, %v54
    %vm486 = vcmp.eq.s32.totalorder %v432, %v55
    %vm487 = vcmp.eq.s32.totalorder %v435, %v51
    %vm488 = vcmp.eq.s32.totalorder %v435, %v52
    %vm489 = vcmp.eq.s32.totalorder %v435, %v53
    %vm490 = vcmp.eq.s32.totalorder %v435, %v54
    %vm491 = vcmp.eq.s32.totalorder %v435, %v55
    %vm492 = vcmp.eq.s32.totalorder %v438, %v51
    %vm493 = vcmp.eq.s32.totalorder %v438, %v52
    %vm494 = vcmp.eq.s32.totalorder %v438, %v53
    %vm495 = vcmp.eq.s32.totalorder %v438, %v54
    %vm496 = vcmp.eq.s32.totalorder %v438, %v55
    %vm497 = vcmp.eq.s32.totalorder %v441, %v51
    %vm498 = vcmp.eq.s32.totalorder %v441, %v52
    %vm499 = vcmp.eq.s32.totalorder %v441, %v53
    %vm500 = vcmp.eq.s32.totalorder %v441, %v54
    %vm501 = vcmp.eq.s32.totalorder %v441, %v55
    %vm502 = vcmp.eq.s32.totalorder %v444, %v51
    %vm503 = vcmp.eq.s32.totalorder %v444, %v52
    %vm504 = vcmp.eq.s32.totalorder %v444, %v53
    %vm505 = vcmp.eq.s32.totalorder %v444, %v54
    %vm506 = vcmp.eq.s32.totalorder %v444, %v55
    %vm507 = vcmp.eq.s32.totalorder %v447, %v51
    %vm508 = vcmp.eq.s32.totalorder %v447, %v52
    %vm509 = vcmp.eq.s32.totalorder %v447, %v53
    %vm510 = vcmp.eq.s32.totalorder %v447, %v54
    %vm511 = vcmp.eq.s32.totalorder %v447, %v55
    %vm512 = vcmp.eq.s32.totalorder %v450, %v51
    %vm513 = vcmp.eq.s32.totalorder %v450, %v52
    %vm514 = vcmp.eq.s32.totalorder %v450, %v53
    %vm515 = vcmp.eq.s32.totalorder %v450, %v54
    %vm516 = vcmp.eq.s32.totalorder %v450, %v55
    %vm517 = vcmp.eq.s32.totalorder %v453, %v51
    %vm518 = vcmp.eq.s32.totalorder %v453, %v52
    %vm519 = vcmp.eq.s32.totalorder %v453, %v53
    %vm520 = vcmp.eq.s32.totalorder %v453, %v54
    %vm521 = vcmp.eq.s32.totalorder %v453, %v55
    %vm522 = vcmp.eq.s32.totalorder %v456, %v51
    %vm523 = vcmp.eq.s32.totalorder %v456, %v52
    %vm524 = vcmp.eq.s32.totalorder %v456, %v53
    %vm525 = vcmp.eq.s32.totalorder %v456, %v54
    %vm526 = vcmp.eq.s32.totalorder %v456, %v55
    %vm527 = vcmp.eq.s32.totalorder %v459, %v51
    %vm528 = vcmp.eq.s32.totalorder %v459, %v52
    %vm529 = vcmp.eq.s32.totalorder %v459, %v53
    %vm530 = vcmp.eq.s32.totalorder %v459, %v54
    %vm531 = vcmp.eq.s32.totalorder %v459, %v55
    %vm532 = vcmp.eq.s32.totalorder %v462, %v51
    %vm533 = vcmp.eq.s32.totalorder %v462, %v52
    %vm534 = vcmp.eq.s32.totalorder %v462, %v53
    %vm535 = vcmp.eq.s32.totalorder %v462, %v54
    %vm536 = vcmp.eq.s32.totalorder %v462, %v55
    %vm537 = vcmp.eq.s32.totalorder %v465, %v51
    %vm538 = vcmp.eq.s32.totalorder %v465, %v52
    %vm539 = vcmp.eq.s32.totalorder %v465, %v53
    %vm540 = vcmp.eq.s32.totalorder %v465, %v54
    %vm541 = vcmp.eq.s32.totalorder %v465, %v55
    %vm542 = vcmp.eq.s32.totalorder %v468, %v51
    %vm543 = vcmp.eq.s32.totalorder %v468, %v52
    %vm544 = vcmp.eq.s32.totalorder %v468, %v53
    %vm545 = vcmp.eq.s32.totalorder %v468, %v54
    %vm546 = vcmp.eq.s32.totalorder %v468, %v55
    %vm547 = vcmp.eq.s32.totalorder %v471, %v51
    %vm548 = vcmp.eq.s32.totalorder %v471, %v52
    %vm549 = vcmp.eq.s32.totalorder %v471, %v53
    %vm550 = vcmp.eq.s32.totalorder %v471, %v54
    %vm551 = vcmp.eq.s32.totalorder %v471, %v55
    %v552 = vsel %vm472, 1, 0
    %v553 = vsel %vm473, 1, 0
    %v554 = vsel %vm474, 1, 0
    %v555 = vsel %vm475, 1, 0
    %v556 = vsel %vm476, 1, 0
    %v557 = vsel %vm477, 1, 0
    %v558 = vsel %vm478, 1, 0
    %v559 = vsel %vm479, 1, 0
    %v560 = vsel %vm480, 1, 0
    %v561 = vsel %vm481, 1, 0
    %v562 = vsel %vm482, 1, 0
    %v563 = vsel %vm483, 1, 0
    %v564 = vsel %vm484, 1, 0
    %v565 = vsel %vm485, 1, 0
    %v566 = vsel %vm486, 1, 0
    %v567 = vsel %vm487, 1, 0
    %v568 = vsel %vm488, 1, 0
    %v569 = vsel %vm489, 1, 0
    %v570 = vsel %vm490, 1, 0
    %v571 = vsel %vm491, 1, 0
    %v572 = vsel %vm492, 1, 0
    %v573 = vsel %vm493, 1, 0
    %v574 = vsel %vm494, 1, 0
    %v575 = vsel %vm495, 1, 0
    %v576 = vsel %vm496, 1, 0
    %v577 = vsel %vm497, 1, 0
    %v578 = vsel %vm498, 1, 0
    %v579 = vsel %vm499, 1, 0
    %v580 = vsel %vm500, 1, 0
    %v581 = vsel %vm501, 1, 0
    %v582 = vsel %vm502, 1, 0
    %v583 = vsel %vm503, 1, 0
    %v584 = vsel %vm504, 1, 0
    %v585 = vsel %vm505, 1, 0
    %v586 = vsel %vm506, 1, 0
    %v587 = vsel %vm507, 1, 0
    %v588 = vsel %vm508, 1, 0
    %v589 = vsel %vm509, 1, 0
    %v590 = vsel %vm510, 1, 0
    %v591 = vsel %vm511, 1, 0
    %v592 = vsel %vm512, 1, 0
    %v593 = vsel %vm513, 1, 0
    %v594 = vsel %vm514, 1, 0
    %v595 = vsel %vm515, 1, 0
    %v596 = vsel %vm516, 1, 0
    %v597 = vsel %vm517, 1, 0
    %v598 = vsel %vm518, 1, 0
    %v599 = vsel %vm519, 1, 0
    %v600 = vsel %vm520, 1, 0
    %v601 = vsel %vm521, 1, 0
    %v602 = vsel %vm522, 1, 0
    %v603 = vsel %vm523, 1, 0
    %v604 = vsel %vm524, 1, 0
    %v605 = vsel %vm525, 1, 0
    %v606 = vsel %vm526, 1, 0
    %v607 = vsel %vm527, 1, 0
    %v608 = vsel %vm528, 1, 0
    %v609 = vsel %vm529, 1, 0
    %v610 = vsel %vm530, 1, 0
    %v611 = vsel %vm531, 1, 0
    %v612 = vsel %vm532, 1, 0
    %v613 = vsel %vm533, 1, 0
    %v614 = vsel %vm534, 1, 0
    %v615 = vsel %vm535, 1, 0
    %v616 = vsel %vm536, 1, 0
    %v617 = vsel %vm537, 1, 0
    %v618 = vsel %vm538, 1, 0
    %v619 = vsel %vm539, 1, 0
    %v620 = vsel %vm540, 1, 0
    %v621 = vsel %vm541, 1, 0
    %v622 = vsel %vm542, 1, 0
    %v623 = vsel %vm543, 1, 0
    %v624 = vsel %vm544, 1, 0
    %v625 = vsel %vm545, 1, 0
    %v626 = vsel %vm546, 1, 0
    %v627 = vsel %vm547, 1, 0
    %v628 = vsel %vm548, 1, 0
    %v629 = vsel %vm549, 1, 0
    %v630 = vsel %vm550, 1, 0
    %v631 = vsel %vm551, 1, 0
    %v632 = vcvt.s32.f32 %v552
    %v633 = vcvt.s32.f32 %v553
    %v634 = vcvt.s32.f32 %v554
    %v635 = vcvt.s32.f32 %v555
    %v636 = vcvt.s32.f32 %v556
    %v637 = vcvt.s32.f32 %v557
    %v638 = vcvt.s32.f32 %v558
    %v639 = vcvt.s32.f32 %v559
    %v640 = vcvt.s32.f32 %v560
    %v641 = vcvt.s32.f32 %v561
    %v642 = vcvt.s32.f32 %v562
    %v643 = vcvt.s32.f32 %v563
    %v644 = vcvt.s32.f32 %v564
    %v645 = vcvt.s32.f32 %v565
    %v646 = vcvt.s32.f32 %v566
    %v647 = vcvt.s32.f32 %v567
    %v648 = vcvt.s32.f32 %v568
    %v649 = vcvt.s32.f32 %v569
    %v650 = vcvt.s32.f32 %v570
    %v651 = vcvt.s32.f32 %v571
    %v652 = vcvt.s32.f32 %v572
    %v653 = vcvt.s32.f32 %v573
    %v654 = vcvt.s32.f32 %v574
    %v655 = vcvt.s32.f32 %v575
    %v656 = vcvt.s32.f32 %v576
    %v657 = vcvt.s32.f32 %v577
    %v658 = vcvt.s32.f32 %v578
    %v659 = vcvt.s32.f32 %v579
    %v660 = vcvt.s32.f32 %v580
    %v661 = vcvt.s32.f32 %v581
    %v662 = vcvt.s32.f32 %v582
    %v663 = vcvt.s32.f32 %v583
    %v664 = vcvt.s32.f32 %v584
    %v665 = vcvt.s32.f32 %v585
    %v666 = vcvt.s32.f32 %v586
    %v667 = vcvt.s32.f32 %v587
    %v668 = vcvt.s32.f32 %v588
    %v669 = vcvt.s32.f32 %v589
    %v670 = vcvt.s32.f32 %v590
    %v671 = vcvt.s32.f32 %v591
    %v672 = vcvt.s32.f32 %v592
    %v673 = vcvt.s32.f32 %v593
    %v674 = vcvt.s32.f32 %v594
    %v675 = vcvt.s32.f32 %v595
    %v676 = vcvt.s32.f32 %v596
    %v677 = vcvt.s32.f32 %v597
    %v678 = vcvt.s32.f32 %v598
    %v679 = vcvt.s32.f32 %v599
    %v680 = vcvt.s32.f32 %v600
    %v681 = vcvt.s32.f32 %v601
    %v682 = vcvt.s32.f32 %v602
    %v683 = vcvt.s32.f32 %v603
    %v684 = vcvt.s32.f32 %v604
    %v685 = vcvt.s32.f32 %v605
    %v686 = vcvt.s32.f32 %v606
    %v687 = vcvt.s32.f32 %v607
    %v688 = vcvt.s32.f32 %v608
    %v689 = vcvt.s32.f32 %v609
    %v690 = vcvt.s32.f32 %v610
    %v691 = vcvt.s32.f32 %v611
    %v692 = vcvt.s32.f32 %v612
    %v693 = vcvt.s32.f32 %v613
    %v694 = vcvt.s32.f32 %v614
    %v695 = vcvt.s32.f32 %v615
    %v696 = vcvt.s32.f32 %v616
    %v697 = vcvt.s32.f32 %v617
    %v698 = vcvt.s32.f32 %v618
    %v699 = vcvt.s32.f32 %v619
    %v700 = vcvt.s32.f32 %v620
    %v701 = vcvt.s32.f32 %v621
    %v702 = vcvt.s32.f32 %v622
    %v703 = vcvt.s32.f32 %v623
    %v704 = vcvt.s32.f32 %v624
    %v705 = vcvt.s32.f32 %v625
    %v706 = vcvt.s32.f32 %v626
    %v707 = vcvt.s32.f32 %v627
    %v708 = vcvt.s32.f32 %v628
    %v709 = vcvt.s32.f32 %v629
    %v710 = vcvt.s32.f32 %v630
    %v711 = vcvt.s32.f32 %v631
    %v712 = vadd.f32 %v344, %v632
    %v713 = vadd.f32 %v345, %v633
    %v714 = vadd.f32 %v346, %v634
    %v715 = vadd.f32 %v347, %v635
    %v716 = vadd.f32 %v348, %v636
    %v717 = vadd.f32 %v349, %v637
    %v718 = vadd.f32 %v350, %v638
    %v719 = vadd.f32 %v351, %v639
    %v720 = vadd.f32 %v352, %v640
    %v721 = vadd.f32 %v353, %v641
    %v722 = vadd.f32 %v354, %v642
    %v723 = vadd.f32 %v355, %v643
    %v724 = vadd.f32 %v356, %v644
    %v725 = vadd.f32 %v357, %v645
    %v726 = vadd.f32 %v358, %v646
    %v727 = vadd.f32 %v359, %v647
    %v728 = vadd.f32 %v360, %v648
    %v729 = vadd.f32 %v361, %v649
    %v730 = vadd.f32 %v362, %v650
    %v731 = vadd.f32 %v363, %v651
    %v732 = vadd.f32 %v364, %v652
    %v733 = vadd.f32 %v365, %v653
    %v734 = vadd.f32 %v366, %v654
    %v735 = vadd.f32 %v367, %v655
    %v736 = vadd.f32 %v368, %v656
    %v737 = vadd.f32 %v369, %v657
    %v738 = vadd.f32 %v370, %v658
    %v739 = vadd.f32 %v371, %v659
    %v740 = vadd.f32 %v372, %v660
    %v741 = vadd.f32 %v373, %v661
    %v742 = vadd.f32 %v374, %v662
    %v743 = vadd.f32 %v375, %v663
    %v744 = vadd.f32 %v376, %v664
    %v745 = vadd.f32 %v377, %v665
    %v746 = vadd.f32 %v378, %v666
    %v747 = vadd.f32 %v379, %v667
    %v748 = vadd.f32 %v380, %v668
    %v749 = vadd.f32 %v381, %v669
    %v750 = vadd.f32 %v382, %v670
    %v751 = vadd.f32 %v383, %v671
    %v752 = vadd.f32 %v384, %v672
    %v753 = vadd.f32 %v385, %v673
    %v754 = vadd.f32 %v386, %v674
    %v755 = vadd.f32 %v387, %v675
    %v756 = vadd.f32 %v388, %v676
    %v757 = vadd.f32 %v389, %v677
    %v758 = vadd.f32 %v390, %v678
    %v759 = vadd.f32 %v391, %v679
    %v760 = vadd.f32 %v392, %v680
    %v761 = vadd.f32 %v393, %v681
    %v762 = vadd.f32 %v394, %v682
    %v763 = vadd.f32 %v395, %v683
    %v764 = vadd.f32 %v396, %v684
    %v765 = vadd.f32 %v397, %v685
    %v766 = vadd.f32 %v398, %v686
    %v767 = vadd.f32 %v399, %v687
    %v768 = vadd.f32 %v400, %v688
    %v769 = vadd.f32 %v401, %v689
    %v770 = vadd.f32 %v402, %v690
    %v771 = vadd.f32 %v403, %v691
    %v772 = vadd.f32 %v404, %v692
    %v773 = vadd.f32 %v405, %v693
    %v774 = vadd.f32 %v406, %v694
    %v775 = vadd.f32 %v407, %v695
    %v776 = vadd.f32 %v408, %v696
    %v777 = vadd.f32 %v409, %v697
    %v778 = vadd.f32 %v410, %v698
    %v779 = vadd.f32 %v411, %v699
    %v780 = vadd.f32 %v412, %v700
    %v781 = vadd.f32 %v413, %v701
    %v782 = vadd.f32 %v414, %v702
    %v783 = vadd.f32 %v415, %v703
    %v784 = vadd.f32 %v416, %v704
    %v785 = vadd.f32 %v417, %v705
    %v786 = vadd.f32 %v418, %v706
    %v787 = vadd.f32 %v419, %v707
    %v788 = vadd.f32 %v420, %v708
    %v789 = vadd.f32 %v421, %v709
    %v790 = vadd.f32 %v422, %v710
    %v791 = vadd.f32 %v423, %v711
    %792 = vset.pattern.permute.xlu0 2
    %793 = vperm.xlu0 %792, %v34
    %v794 = vpop.permute.xlu0 %793
    %795 = vset.pattern.permute.xlu0 2
    %796 = vperm.xlu0 %795, %v35
    %v797 = vpop.permute.xlu0 %796
    %798 = vset.pattern.permute.xlu0 2
    %799 = vperm.xlu0 %798, %v36
    %v800 = vpop.permute.xlu0 %799
    %801 = vset.pattern.permute.xlu0 2
    %802 = vperm.xlu0 %801, %v37
    %v803 = vpop.permute.xlu0 %802
    %804 = vset.pattern.permute.xlu0 2
    %805 = vperm.xlu0 %804, %v38
    %v806 = vpop.permute.xlu0 %805
    %807 = vset.pattern.permute.xlu0 2
    %808 = vperm.xlu0 %807, %v39
    %v809 = vpop.permute.xlu0 %808
    %810 = vset.pattern.permute.xlu0 2
    %811 = vperm.xlu0 %810, %v40
    %v812 = vpop.permute.xlu0 %811
    %813 = vset.pattern.permute.xlu0 2
    %814 = vperm.xlu0 %813, %v41
    %v815 = vpop.permute.xlu0 %814
    %816 = vset.pattern.permute.xlu0 2
    %817 = vperm.xlu0 %816, %v42
    %v818 = vpop.permute.xlu0 %817
    %819 = vset.pattern.permute.xlu0 2
    %820 = vperm.xlu0 %819, %v43
    %v821 = vpop.permute.xlu0 %820
    %822 = vset.pattern.permute.xlu0 2
    %823 = vperm.xlu0 %822, %v44
    %v824 = vpop.permute.xlu0 %823
    %825 = vset.pattern.permute.xlu0 2
    %826 = vperm.xlu0 %825, %v45
    %v827 = vpop.permute.xlu0 %826
    %828 = vset.pattern.permute.xlu0 2
    %829 = vperm.xlu0 %828, %v46
    %v830 = vpop.permute.xlu0 %829
    %831 = vset.pattern.permute.xlu0 2
    %832 = vperm.xlu0 %831, %v47
    %v833 = vpop.permute.xlu0 %832
    %834 = vset.pattern.permute.xlu0 2
    %835 = vperm.xlu0 %834, %v48
    %v836 = vpop.permute.xlu0 %835
    %837 = vset.pattern.permute.xlu0 2
    %838 = vperm.xlu0 %837, %v49
    %v839 = vpop.permute.xlu0 %838
    %vm840 = vcmp.eq.s32.totalorder %v794, %v51
    %vm841 = vcmp.eq.s32.totalorder %v794, %v52
    %vm842 = vcmp.eq.s32.totalorder %v794, %v53
    %vm843 = vcmp.eq.s32.totalorder %v794, %v54
    %vm844 = vcmp.eq.s32.totalorder %v794, %v55
    %vm845 = vcmp.eq.s32.totalorder %v797, %v51
    %vm846 = vcmp.eq.s32.totalorder %v797, %v52
    %vm847 = vcmp.eq.s32.totalorder %v797, %v53
    %vm848 = vcmp.eq.s32.totalorder %v797, %v54
    %vm849 = vcmp.eq.s32.totalorder %v797, %v55
    %vm850 = vcmp.eq.s32.totalorder %v800, %v51
    %vm851 = vcmp.eq.s32.totalorder %v800, %v52
    %vm852 = vcmp.eq.s32.totalorder %v800, %v53
    %vm853 = vcmp.eq.s32.totalorder %v800, %v54
    %vm854 = vcmp.eq.s32.totalorder %v800, %v55
    %vm855 = vcmp.eq.s32.totalorder %v803, %v51
    %vm856 = vcmp.eq.s32.totalorder %v803, %v52
    %vm857 = vcmp.eq.s32.totalorder %v803, %v53
    %vm858 = vcmp.eq.s32.totalorder %v803, %v54
    %vm859 = vcmp.eq.s32.totalorder %v803, %v55
    %vm860 = vcmp.eq.s32.totalorder %v806, %v51
    %vm861 = vcmp.eq.s32.totalorder %v806, %v52
    %vm862 = vcmp.eq.s32.totalorder %v806, %v53
    %vm863 = vcmp.eq.s32.totalorder %v806, %v54
    %vm864 = vcmp.eq.s32.totalorder %v806, %v55
    %vm865 = vcmp.eq.s32.totalorder %v809, %v51
    %vm866 = vcmp.eq.s32.totalorder %v809, %v52
    %vm867 = vcmp.eq.s32.totalorder %v809, %v53
    %vm868 = vcmp.eq.s32.totalorder %v809, %v54
    %vm869 = vcmp.eq.s32.totalorder %v809, %v55
    %vm870 = vcmp.eq.s32.totalorder %v812, %v51
    %vm871 = vcmp.eq.s32.totalorder %v812, %v52
    %vm872 = vcmp.eq.s32.totalorder %v812, %v53
    %vm873 = vcmp.eq.s32.totalorder %v812, %v54
    %vm874 = vcmp.eq.s32.totalorder %v812, %v55
    %vm875 = vcmp.eq.s32.totalorder %v815, %v51
    %vm876 = vcmp.eq.s32.totalorder %v815, %v52
    %vm877 = vcmp.eq.s32.totalorder %v815, %v53
    %vm878 = vcmp.eq.s32.totalorder %v815, %v54
    %vm879 = vcmp.eq.s32.totalorder %v815, %v55
    %vm880 = vcmp.eq.s32.totalorder %v818, %v51
    %vm881 = vcmp.eq.s32.totalorder %v818, %v52
    %vm882 = vcmp.eq.s32.totalorder %v818, %v53
    %vm883 = vcmp.eq.s32.totalorder %v818, %v54
    %vm884 = vcmp.eq.s32.totalorder %v818, %v55
    %vm885 = vcmp.eq.s32.totalorder %v821, %v51
    %vm886 = vcmp.eq.s32.totalorder %v821, %v52
    %vm887 = vcmp.eq.s32.totalorder %v821, %v53
    %vm888 = vcmp.eq.s32.totalorder %v821, %v54
    %vm889 = vcmp.eq.s32.totalorder %v821, %v55
    %vm890 = vcmp.eq.s32.totalorder %v824, %v51
    %vm891 = vcmp.eq.s32.totalorder %v824, %v52
    %vm892 = vcmp.eq.s32.totalorder %v824, %v53
    %vm893 = vcmp.eq.s32.totalorder %v824, %v54
    %vm894 = vcmp.eq.s32.totalorder %v824, %v55
    %vm895 = vcmp.eq.s32.totalorder %v827, %v51
    %vm896 = vcmp.eq.s32.totalorder %v827, %v52
    %vm897 = vcmp.eq.s32.totalorder %v827, %v53
    %vm898 = vcmp.eq.s32.totalorder %v827, %v54
    %vm899 = vcmp.eq.s32.totalorder %v827, %v55
    %vm900 = vcmp.eq.s32.totalorder %v830, %v51
    %vm901 = vcmp.eq.s32.totalorder %v830, %v52
    %vm902 = vcmp.eq.s32.totalorder %v830, %v53
    %vm903 = vcmp.eq.s32.totalorder %v830, %v54
    %vm904 = vcmp.eq.s32.totalorder %v830, %v55
    %vm905 = vcmp.eq.s32.totalorder %v833, %v51
    %vm906 = vcmp.eq.s32.totalorder %v833, %v52
    %vm907 = vcmp.eq.s32.totalorder %v833, %v53
    %vm908 = vcmp.eq.s32.totalorder %v833, %v54
    %vm909 = vcmp.eq.s32.totalorder %v833, %v55
    %vm910 = vcmp.eq.s32.totalorder %v836, %v51
    %vm911 = vcmp.eq.s32.totalorder %v836, %v52
    %vm912 = vcmp.eq.s32.totalorder %v836, %v53
    %vm913 = vcmp.eq.s32.totalorder %v836, %v54
    %vm914 = vcmp.eq.s32.totalorder %v836, %v55
    %vm915 = vcmp.eq.s32.totalorder %v839, %v51
    %vm916 = vcmp.eq.s32.totalorder %v839, %v52
    %vm917 = vcmp.eq.s32.totalorder %v839, %v53
    %vm918 = vcmp.eq.s32.totalorder %v839, %v54
    %vm919 = vcmp.eq.s32.totalorder %v839, %v55
    %v920 = vsel %vm840, 1, 0
    %v921 = vsel %vm841, 1, 0
    %v922 = vsel %vm842, 1, 0
    %v923 = vsel %vm843, 1, 0
    %v924 = vsel %vm844, 1, 0
    %v925 = vsel %vm845, 1, 0
    %v926 = vsel %vm846, 1, 0
    %v927 = vsel %vm847, 1, 0
    %v928 = vsel %vm848, 1, 0
    %v929 = vsel %vm849, 1, 0
    %v930 = vsel %vm850, 1, 0
    %v931 = vsel %vm851, 1, 0
    %v932 = vsel %vm852, 1, 0
    %v933 = vsel %vm853, 1, 0
    %v934 = vsel %vm854, 1, 0
    %v935 = vsel %vm855, 1, 0
    %v936 = vsel %vm856, 1, 0
    %v937 = vsel %vm857, 1, 0
    %v938 = vsel %vm858, 1, 0
    %v939 = vsel %vm859, 1, 0
    %v940 = vsel %vm860, 1, 0
    %v941 = vsel %vm861, 1, 0
    %v942 = vsel %vm862, 1, 0
    %v943 = vsel %vm863, 1, 0
    %v944 = vsel %vm864, 1, 0
    %v945 = vsel %vm865, 1, 0
    %v946 = vsel %vm866, 1, 0
    %v947 = vsel %vm867, 1, 0
    %v948 = vsel %vm868, 1, 0
    %v949 = vsel %vm869, 1, 0
    %v950 = vsel %vm870, 1, 0
    %v951 = vsel %vm871, 1, 0
    %v952 = vsel %vm872, 1, 0
    %v953 = vsel %vm873, 1, 0
    %v954 = vsel %vm874, 1, 0
    %v955 = vsel %vm875, 1, 0
    %v956 = vsel %vm876, 1, 0
    %v957 = vsel %vm877, 1, 0
    %v958 = vsel %vm878, 1, 0
    %v959 = vsel %vm879, 1, 0
    %v960 = vsel %vm880, 1, 0
    %v961 = vsel %vm881, 1, 0
    %v962 = vsel %vm882, 1, 0
    %v963 = vsel %vm883, 1, 0
    %v964 = vsel %vm884, 1, 0
    %v965 = vsel %vm885, 1, 0
    %v966 = vsel %vm886, 1, 0
    %v967 = vsel %vm887, 1, 0
    %v968 = vsel %vm888, 1, 0
    %v969 = vsel %vm889, 1, 0
    %v970 = vsel %vm890, 1, 0
    %v971 = vsel %vm891, 1, 0
    %v972 = vsel %vm892, 1, 0
    %v973 = vsel %vm893, 1, 0
    %v974 = vsel %vm894, 1, 0
    %v975 = vsel %vm895, 1, 0
    %v976 = vsel %vm896, 1, 0
    %v977 = vsel %vm897, 1, 0
    %v978 = vsel %vm898, 1, 0
    %v979 = vsel %vm899, 1, 0
    %v980 = vsel %vm900, 1, 0
    %v981 = vsel %vm901, 1, 0
    %v982 = vsel %vm902, 1, 0
    %v983 = vsel %vm903, 1, 0
    %v984 = vsel %vm904, 1, 0
    %v985 = vsel %vm905, 1, 0
    %v986 = vsel %vm906, 1, 0
    %v987 = vsel %vm907, 1, 0
    %v988 = vsel %vm908, 1, 0
    %v989 = vsel %vm909, 1, 0
    %v990 = vsel %vm910, 1, 0
    %v991 = vsel %vm911, 1, 0
    %v992 = vsel %vm912, 1, 0
    %v993 = vsel %vm913, 1, 0
    %v994 = vsel %vm914, 1, 0
    %v995 = vsel %vm915, 1, 0
    %v996 = vsel %vm916, 1, 0
    %v997 = vsel %vm917, 1, 0
    %v998 = vsel %vm918, 1, 0
    %v999 = vsel %vm919, 1, 0
    %v1000 = vcvt.s32.f32 %v920
    %v1001 = vcvt.s32.f32 %v921
    %v1002 = vcvt.s32.f32 %v922
    %v1003 = vcvt.s32.f32 %v923
    %v1004 = vcvt.s32.f32 %v924
    %v1005 = vcvt.s32.f32 %v925
    %v1006 = vcvt.s32.f32 %v926
    %v1007 = vcvt.s32.f32 %v927
    %v1008 = vcvt.s32.f32 %v928
    %v1009 = vcvt.s32.f32 %v929
    %v1010 = vcvt.s32.f32 %v930
    %v1011 = vcvt.s32.f32 %v931
    %v1012 = vcvt.s32.f32 %v932
    %v1013 = vcvt.s32.f32 %v933
    %v1014 = vcvt.s32.f32 %v934
    %v1015 = vcvt.s32.f32 %v935
    %v1016 = vcvt.s32.f32 %v936
    %v1017 = vcvt.s32.f32 %v937
    %v1018 = vcvt.s32.f32 %v938
    %v1019 = vcvt.s32.f32 %v939
    %v1020 = vcvt.s32.f32 %v940
    %v1021 = vcvt.s32.f32 %v941
    %v1022 = vcvt.s32.f32 %v942
    %v1023 = vcvt.s32.f32 %v943
    %v1024 = vcvt.s32.f32 %v944
    %v1025 = vcvt.s32.f32 %v945
    %v1026 = vcvt.s32.f32 %v946
    %v1027 = vcvt.s32.f32 %v947
    %v1028 = vcvt.s32.f32 %v948
    %v1029 = vcvt.s32.f32 %v949
    %v1030 = vcvt.s32.f32 %v950
    %v1031 = vcvt.s32.f32 %v951
    %v1032 = vcvt.s32.f32 %v952
    %v1033 = vcvt.s32.f32 %v953
    %v1034 = vcvt.s32.f32 %v954
    %v1035 = vcvt.s32.f32 %v955
    %v1036 = vcvt.s32.f32 %v956
    %v1037 = vcvt.s32.f32 %v957
    %v1038 = vcvt.s32.f32 %v958
    %v1039 = vcvt.s32.f32 %v959
    %v1040 = vcvt.s32.f32 %v960
    %v1041 = vcvt.s32.f32 %v961
    %v1042 = vcvt.s32.f32 %v962
    %v1043 = vcvt.s32.f32 %v963
    %v1044 = vcvt.s32.f32 %v964
    %v1045 = vcvt.s32.f32 %v965
    %v1046 = vcvt.s32.f32 %v966
    %v1047 = vcvt.s32.f32 %v967
    %v1048 = vcvt.s32.f32 %v968
    %v1049 = vcvt.s32.f32 %v969
    %v1050 = vcvt.s32.f32 %v970
    %v1051 = vcvt.s32.f32 %v971
    %v1052 = vcvt.s32.f32 %v972
    %v1053 = vcvt.s32.f32 %v973
    %v1054 = vcvt.s32.f32 %v974
    %v1055 = vcvt.s32.f32 %v975
    %v1056 = vcvt.s32.f32 %v976
    %v1057 = vcvt.s32.f32 %v977
    %v1058 = vcvt.s32.f32 %v978
    %v1059 = vcvt.s32.f32 %v979
    %v1060 = vcvt.s32.f32 %v980
    %v1061 = vcvt.s32.f32 %v981
    %v1062 = vcvt.s32.f32 %v982
    %v1063 = vcvt.s32.f32 %v983
    %v1064 = vcvt.s32.f32 %v984
    %v1065 = vcvt.s32.f32 %v985
    %v1066 = vcvt.s32.f32 %v986
    %v1067 = vcvt.s32.f32 %v987
    %v1068 = vcvt.s32.f32 %v988
    %v1069 = vcvt.s32.f32 %v989
    %v1070 = vcvt.s32.f32 %v990
    %v1071 = vcvt.s32.f32 %v991
    %v1072 = vcvt.s32.f32 %v992
    %v1073 = vcvt.s32.f32 %v993
    %v1074 = vcvt.s32.f32 %v994
    %v1075 = vcvt.s32.f32 %v995
    %v1076 = vcvt.s32.f32 %v996
    %v1077 = vcvt.s32.f32 %v997
    %v1078 = vcvt.s32.f32 %v998
    %v1079 = vcvt.s32.f32 %v999
    %v1080 = vadd.f32 %v712, %v1000
    %v1081 = vadd.f32 %v713, %v1001
    %v1082 = vadd.f32 %v714, %v1002
    %v1083 = vadd.f32 %v715, %v1003
    %v1084 = vadd.f32 %v716, %v1004
    %v1085 = vadd.f32 %v717, %v1005
    %v1086 = vadd.f32 %v718, %v1006
    %v1087 = vadd.f32 %v719, %v1007
    %v1088 = vadd.f32 %v720, %v1008
    %v1089 = vadd.f32 %v721, %v1009
    %v1090 = vadd.f32 %v722, %v1010
    %v1091 = vadd.f32 %v723, %v1011
    %v1092 = vadd.f32 %v724, %v1012
    %v1093 = vadd.f32 %v725, %v1013
    %v1094 = vadd.f32 %v726, %v1014
    %v1095 = vadd.f32 %v727, %v1015
    %v1096 = vadd.f32 %v728, %v1016
    %v1097 = vadd.f32 %v729, %v1017
    %v1098 = vadd.f32 %v730, %v1018
    %v1099 = vadd.f32 %v731, %v1019
    %v1100 = vadd.f32 %v732, %v1020
    %v1101 = vadd.f32 %v733, %v1021
    %v1102 = vadd.f32 %v734, %v1022
    %v1103 = vadd.f32 %v735, %v1023
    %v1104 = vadd.f32 %v736, %v1024
    %v1105 = vadd.f32 %v737, %v1025
    %v1106 = vadd.f32 %v738, %v1026
    %v1107 = vadd.f32 %v739, %v1027
    %v1108 = vadd.f32 %v740, %v1028
    %v1109 = vadd.f32 %v741, %v1029
    %v1110 = vadd.f32 %v742, %v1030
    %v1111 = vadd.f32 %v743, %v1031
    %v1112 = vadd.f32 %v744, %v1032
    %v1113 = vadd.f32 %v745, %v1033
    %v1114 = vadd.f32 %v746, %v1034
    %v1115 = vadd.f32 %v747, %v1035
    %v1116 = vadd.f32 %v748, %v1036
    %v1117 = vadd.f32 %v749, %v1037
    %v1118 = vadd.f32 %v750, %v1038
    %v1119 = vadd.f32 %v751, %v1039
    %v1120 = vadd.f32 %v752, %v1040
    %v1121 = vadd.f32 %v753, %v1041
    %v1122 = vadd.f32 %v754, %v1042
    %v1123 = vadd.f32 %v755, %v1043
    %v1124 = vadd.f32 %v756, %v1044
    %v1125 = vadd.f32 %v757, %v1045
    %v1126 = vadd.f32 %v758, %v1046
    %v1127 = vadd.f32 %v759, %v1047
    %v1128 = vadd.f32 %v760, %v1048
    %v1129 = vadd.f32 %v761, %v1049
    %v1130 = vadd.f32 %v762, %v1050
    %v1131 = vadd.f32 %v763, %v1051
    %v1132 = vadd.f32 %v764, %v1052
    %v1133 = vadd.f32 %v765, %v1053
    %v1134 = vadd.f32 %v766, %v1054
    %v1135 = vadd.f32 %v767, %v1055
    %v1136 = vadd.f32 %v768, %v1056
    %v1137 = vadd.f32 %v769, %v1057
    %v1138 = vadd.f32 %v770, %v1058
    %v1139 = vadd.f32 %v771, %v1059
    %v1140 = vadd.f32 %v772, %v1060
    %v1141 = vadd.f32 %v773, %v1061
    %v1142 = vadd.f32 %v774, %v1062
    %v1143 = vadd.f32 %v775, %v1063
    %v1144 = vadd.f32 %v776, %v1064
    %v1145 = vadd.f32 %v777, %v1065
    %v1146 = vadd.f32 %v778, %v1066
    %v1147 = vadd.f32 %v779, %v1067
    %v1148 = vadd.f32 %v780, %v1068
    %v1149 = vadd.f32 %v781, %v1069
    %v1150 = vadd.f32 %v782, %v1070
    %v1151 = vadd.f32 %v783, %v1071
    %v1152 = vadd.f32 %v784, %v1072
    %v1153 = vadd.f32 %v785, %v1073
    %v1154 = vadd.f32 %v786, %v1074
    %v1155 = vadd.f32 %v787, %v1075
    %v1156 = vadd.f32 %v788, %v1076
    %v1157 = vadd.f32 %v789, %v1077
    %v1158 = vadd.f32 %v790, %v1078
    %v1159 = vadd.f32 %v791, %v1079
    %1160 = vset.pattern.permute.xlu0 3
    %1161 = vperm.xlu0 %1160, %v34
    %v1162 = vpop.permute.xlu0 %1161
    %1163 = vset.pattern.permute.xlu0 3
    %1164 = vperm.xlu0 %1163, %v35
    %v1165 = vpop.permute.xlu0 %1164
    %1166 = vset.pattern.permute.xlu0 3
    %1167 = vperm.xlu0 %1166, %v36
    %v1168 = vpop.permute.xlu0 %1167
    %1169 = vset.pattern.permute.xlu0 3
    %1170 = vperm.xlu0 %1169, %v37
    %v1171 = vpop.permute.xlu0 %1170
    %1172 = vset.pattern.permute.xlu0 3
    %1173 = vperm.xlu0 %1172, %v38
    %v1174 = vpop.permute.xlu0 %1173
    %1175 = vset.pattern.permute.xlu0 3
    %1176 = vperm.xlu0 %1175, %v39
    %v1177 = vpop.permute.xlu0 %1176
    %1178 = vset.pattern.permute.xlu0 3
    %1179 = vperm.xlu0 %1178, %v40
    %v1180 = vpop.permute.xlu0 %1179
    %1181 = vset.pattern.permute.xlu0 3
    %1182 = vperm.xlu0 %1181, %v41
    %v1183 = vpop.permute.xlu0 %1182
    %1184 = vset.pattern.permute.xlu0 3
    %1185 = vperm.xlu0 %1184, %v42
    %v1186 = vpop.permute.xlu0 %1185
    %1187 = vset.pattern.permute.xlu0 3
    %1188 = vperm.xlu0 %1187, %v43
    %v1189 = vpop.permute.xlu0 %1188
    %1190 = vset.pattern.permute.xlu0 3
    %1191 = vperm.xlu0 %1190, %v44
    %v1192 = vpop.permute.xlu0 %1191
    %1193 = vset.pattern.permute.xlu0 3
    %1194 = vperm.xlu0 %1193, %v45
    %v1195 = vpop.permute.xlu0 %1194
    %1196 = vset.pattern.permute.xlu0 3
    %1197 = vperm.xlu0 %1196, %v46
    %v1198 = vpop.permute.xlu0 %1197
    %1199 = vset.pattern.permute.xlu0 3
    %1200 = vperm.xlu0 %1199, %v47
    %v1201 = vpop.permute.xlu0 %1200
    %1202 = vset.pattern.permute.xlu0 3
    %1203 = vperm.xlu0 %1202, %v48
    %v1204 = vpop.permute.xlu0 %1203
    %1205 = vset.pattern.permute.xlu0 3
    %1206 = vperm.xlu0 %1205, %v49
    %v1207 = vpop.permute.xlu0 %1206
    %vm1208 = vcmp.eq.s32.totalorder %v1162, %v51
    %vm1209 = vcmp.eq.s32.totalorder %v1162, %v52
    %vm1210 = vcmp.eq.s32.totalorder %v1162, %v53
    %vm1211 = vcmp.eq.s32.totalorder %v1162, %v54
    %vm1212 = vcmp.eq.s32.totalorder %v1162, %v55
    %vm1213 = vcmp.eq.s32.totalorder %v1165, %v51
    %vm1214 = vcmp.eq.s32.totalorder %v1165, %v52
    %vm1215 = vcmp.eq.s32.totalorder %v1165, %v53
    %vm1216 = vcmp.eq.s32.totalorder %v1165, %v54
    %vm1217 = vcmp.eq.s32.totalorder %v1165, %v55
    %vm1218 = vcmp.eq.s32.totalorder %v1168, %v51
    %vm1219 = vcmp.eq.s32.totalorder %v1168, %v52
    %vm1220 = vcmp.eq.s32.totalorder %v1168, %v53
    %vm1221 = vcmp.eq.s32.totalorder %v1168, %v54
    %vm1222 = vcmp.eq.s32.totalorder %v1168, %v55
    %vm1223 = vcmp.eq.s32.totalorder %v1171, %v51
    %vm1224 = vcmp.eq.s32.totalorder %v1171, %v52
    %vm1225 = vcmp.eq.s32.totalorder %v1171, %v53
    %vm1226 = vcmp.eq.s32.totalorder %v1171, %v54
    %vm1227 = vcmp.eq.s32.totalorder %v1171, %v55
    %vm1228 = vcmp.eq.s32.totalorder %v1174, %v51
    %vm1229 = vcmp.eq.s32.totalorder %v1174, %v52
    %vm1230 = vcmp.eq.s32.totalorder %v1174, %v53
    %vm1231 = vcmp.eq.s32.totalorder %v1174, %v54
    %vm1232 = vcmp.eq.s32.totalorder %v1174, %v55
    %vm1233 = vcmp.eq.s32.totalorder %v1177, %v51
    %vm1234 = vcmp.eq.s32.totalorder %v1177, %v52
    %vm1235 = vcmp.eq.s32.totalorder %v1177, %v53
    %vm1236 = vcmp.eq.s32.totalorder %v1177, %v54
    %vm1237 = vcmp.eq.s32.totalorder %v1177, %v55
    %vm1238 = vcmp.eq.s32.totalorder %v1180, %v51
    %vm1239 = vcmp.eq.s32.totalorder %v1180, %v52
    %vm1240 = vcmp.eq.s32.totalorder %v1180, %v53
    %vm1241 = vcmp.eq.s32.totalorder %v1180, %v54
    %vm1242 = vcmp.eq.s32.totalorder %v1180, %v55
    %vm1243 = vcmp.eq.s32.totalorder %v1183, %v51
    %vm1244 = vcmp.eq.s32.totalorder %v1183, %v52
    %vm1245 = vcmp.eq.s32.totalorder %v1183, %v53
    %vm1246 = vcmp.eq.s32.totalorder %v1183, %v54
    %vm1247 = vcmp.eq.s32.totalorder %v1183, %v55
    %vm1248 = vcmp.eq.s32.totalorder %v1186, %v51
    %vm1249 = vcmp.eq.s32.totalorder %v1186, %v52
    %vm1250 = vcmp.eq.s32.totalorder %v1186, %v53
    %vm1251 = vcmp.eq.s32.totalorder %v1186, %v54
    %vm1252 = vcmp.eq.s32.totalorder %v1186, %v55
    %vm1253 = vcmp.eq.s32.totalorder %v1189, %v51
    %vm1254 = vcmp.eq.s32.totalorder %v1189, %v52
    %vm1255 = vcmp.eq.s32.totalorder %v1189, %v53
    %vm1256 = vcmp.eq.s32.totalorder %v1189, %v54
    %vm1257 = vcmp.eq.s32.totalorder %v1189, %v55
    %vm1258 = vcmp.eq.s32.totalorder %v1192, %v51
    %vm1259 = vcmp.eq.s32.totalorder %v1192, %v52
    %vm1260 = vcmp.eq.s32.totalorder %v1192, %v53
    %vm1261 = vcmp.eq.s32.totalorder %v1192, %v54
    %vm1262 = vcmp.eq.s32.totalorder %v1192, %v55
    %vm1263 = vcmp.eq.s32.totalorder %v1195, %v51
    %vm1264 = vcmp.eq.s32.totalorder %v1195, %v52
    %vm1265 = vcmp.eq.s32.totalorder %v1195, %v53
    %vm1266 = vcmp.eq.s32.totalorder %v1195, %v54
    %vm1267 = vcmp.eq.s32.totalorder %v1195, %v55
    %vm1268 = vcmp.eq.s32.totalorder %v1198, %v51
    %vm1269 = vcmp.eq.s32.totalorder %v1198, %v52
    %vm1270 = vcmp.eq.s32.totalorder %v1198, %v53
    %vm1271 = vcmp.eq.s32.totalorder %v1198, %v54
    %vm1272 = vcmp.eq.s32.totalorder %v1198, %v55
    %vm1273 = vcmp.eq.s32.totalorder %v1201, %v51
    %vm1274 = vcmp.eq.s32.totalorder %v1201, %v52
    %vm1275 = vcmp.eq.s32.totalorder %v1201, %v53
    %vm1276 = vcmp.eq.s32.totalorder %v1201, %v54
    %vm1277 = vcmp.eq.s32.totalorder %v1201, %v55
    %vm1278 = vcmp.eq.s32.totalorder %v1204, %v51
    %vm1279 = vcmp.eq.s32.totalorder %v1204, %v52
    %vm1280 = vcmp.eq.s32.totalorder %v1204, %v53
    %vm1281 = vcmp.eq.s32.totalorder %v1204, %v54
    %vm1282 = vcmp.eq.s32.totalorder %v1204, %v55
    %vm1283 = vcmp.eq.s32.totalorder %v1207, %v51
    %vm1284 = vcmp.eq.s32.totalorder %v1207, %v52
    %vm1285 = vcmp.eq.s32.totalorder %v1207, %v53
    %vm1286 = vcmp.eq.s32.totalorder %v1207, %v54
    %vm1287 = vcmp.eq.s32.totalorder %v1207, %v55
    %v1288 = vsel %vm1208, 1, 0
    %v1289 = vsel %vm1209, 1, 0
    %v1290 = vsel %vm1210, 1, 0
    %v1291 = vsel %vm1211, 1, 0
    %v1292 = vsel %vm1212, 1, 0
    %v1293 = vsel %vm1213, 1, 0
    %v1294 = vsel %vm1214, 1, 0
    %v1295 = vsel %vm1215, 1, 0
    %v1296 = vsel %vm1216, 1, 0
    %v1297 = vsel %vm1217, 1, 0
    %v1298 = vsel %vm1218, 1, 0
    %v1299 = vsel %vm1219, 1, 0
    %v1300 = vsel %vm1220, 1, 0
    %v1301 = vsel %vm1221, 1, 0
    %v1302 = vsel %vm1222, 1, 0
    %v1303 = vsel %vm1223, 1, 0
    %v1304 = vsel %vm1224, 1, 0
    %v1305 = vsel %vm1225, 1, 0
    %v1306 = vsel %vm1226, 1, 0
    %v1307 = vsel %vm1227, 1, 0
    %v1308 = vsel %vm1228, 1, 0
    %v1309 = vsel %vm1229, 1, 0
    %v1310 = vsel %vm1230, 1, 0
    %v1311 = vsel %vm1231, 1, 0
    %v1312 = vsel %vm1232, 1, 0
    %v1313 = vsel %vm1233, 1, 0
    %v1314 = vsel %vm1234, 1, 0
    %v1315 = vsel %vm1235, 1, 0
    %v1316 = vsel %vm1236, 1, 0
    %v1317 = vsel %vm1237, 1, 0
    %v1318 = vsel %vm1238, 1, 0
    %v1319 = vsel %vm1239, 1, 0
    %v1320 = vsel %vm1240, 1, 0
    %v1321 = vsel %vm1241, 1, 0
    %v1322 = vsel %vm1242, 1, 0
    %v1323 = vsel %vm1243, 1, 0
    %v1324 = vsel %vm1244, 1, 0
    %v1325 = vsel %vm1245, 1, 0
    %v1326 = vsel %vm1246, 1, 0
    %v1327 = vsel %vm1247, 1, 0
    %v1328 = vsel %vm1248, 1, 0
    %v1329 = vsel %vm1249, 1, 0
    %v1330 = vsel %vm1250, 1, 0
    %v1331 = vsel %vm1251, 1, 0
    %v1332 = vsel %vm1252, 1, 0
    %v1333 = vsel %vm1253, 1, 0
    %v1334 = vsel %vm1254, 1, 0
    %v1335 = vsel %vm1255, 1, 0
    %v1336 = vsel %vm1256, 1, 0
    %v1337 = vsel %vm1257, 1, 0
    %v1338 = vsel %vm1258, 1, 0
    %v1339 = vsel %vm1259, 1, 0
    %v1340 = vsel %vm1260, 1, 0
    %v1341 = vsel %vm1261, 1, 0
    %v1342 = vsel %vm1262, 1, 0
    %v1343 = vsel %vm1263, 1, 0
    %v1344 = vsel %vm1264, 1, 0
    %v1345 = vsel %vm1265, 1, 0
    %v1346 = vsel %vm1266, 1, 0
    %v1347 = vsel %vm1267, 1, 0
    %v1348 = vsel %vm1268, 1, 0
    %v1349 = vsel %vm1269, 1, 0
    %v1350 = vsel %vm1270, 1, 0
    %v1351 = vsel %vm1271, 1, 0
    %v1352 = vsel %vm1272, 1, 0
    %v1353 = vsel %vm1273, 1, 0
    %v1354 = vsel %vm1274, 1, 0
    %v1355 = vsel %vm1275, 1, 0
    %v1356 = vsel %vm1276, 1, 0
    %v1357 = vsel %vm1277, 1, 0
    %v1358 = vsel %vm1278, 1, 0
    %v1359 = vsel %vm1279, 1, 0
    %v1360 = vsel %vm1280, 1, 0
    %v1361 = vsel %vm1281, 1, 0
    %v1362 = vsel %vm1282, 1, 0
    %v1363 = vsel %vm1283, 1, 0
    %v1364 = vsel %vm1284, 1, 0
    %v1365 = vsel %vm1285, 1, 0
    %v1366 = vsel %vm1286, 1, 0
    %v1367 = vsel %vm1287, 1, 0
    %v1368 = vcvt.s32.f32 %v1288
    %v1369 = vcvt.s32.f32 %v1289
    %v1370 = vcvt.s32.f32 %v1290
    %v1371 = vcvt.s32.f32 %v1291
    %v1372 = vcvt.s32.f32 %v1292
    %v1373 = vcvt.s32.f32 %v1293
    %v1374 = vcvt.s32.f32 %v1294
    %v1375 = vcvt.s32.f32 %v1295
    %v1376 = vcvt.s32.f32 %v1296
    %v1377 = vcvt.s32.f32 %v1297
    %v1378 = vcvt.s32.f32 %v1298
    %v1379 = vcvt.s32.f32 %v1299
    %v1380 = vcvt.s32.f32 %v1300
    %v1381 = vcvt.s32.f32 %v1301
    %v1382 = vcvt.s32.f32 %v1302
    %v1383 = vcvt.s32.f32 %v1303
    %v1384 = vcvt.s32.f32 %v1304
    %v1385 = vcvt.s32.f32 %v1305
    %v1386 = vcvt.s32.f32 %v1306
    %v1387 = vcvt.s32.f32 %v1307
    %v1388 = vcvt.s32.f32 %v1308
    %v1389 = vcvt.s32.f32 %v1309
    %v1390 = vcvt.s32.f32 %v1310
    %v1391 = vcvt.s32.f32 %v1311
    %v1392 = vcvt.s32.f32 %v1312
    %v1393 = vcvt.s32.f32 %v1313
    %v1394 = vcvt.s32.f32 %v1314
    %v1395 = vcvt.s32.f32 %v1315
    %v1396 = vcvt.s32.f32 %v1316
    %v1397 = vcvt.s32.f32 %v1317
    %v1398 = vcvt.s32.f32 %v1318
    %v1399 = vcvt.s32.f32 %v1319
    %v1400 = vcvt.s32.f32 %v1320
    %v1401 = vcvt.s32.f32 %v1321
    %v1402 = vcvt.s32.f32 %v1322
    %v1403 = vcvt.s32.f32 %v1323
    %v1404 = vcvt.s32.f32 %v1324
    %v1405 = vcvt.s32.f32 %v1325
    %v1406 = vcvt.s32.f32 %v1326
    %v1407 = vcvt.s32.f32 %v1327
    %v1408 = vcvt.s32.f32 %v1328
    %v1409 = vcvt.s32.f32 %v1329
    %v1410 = vcvt.s32.f32 %v1330
    %v1411 = vcvt.s32.f32 %v1331
    %v1412 = vcvt.s32.f32 %v1332
    %v1413 = vcvt.s32.f32 %v1333
    %v1414 = vcvt.s32.f32 %v1334
    %v1415 = vcvt.s32.f32 %v1335
    %v1416 = vcvt.s32.f32 %v1336
    %v1417 = vcvt.s32.f32 %v1337
    %v1418 = vcvt.s32.f32 %v1338
    %v1419 = vcvt.s32.f32 %v1339
    %v1420 = vcvt.s32.f32 %v1340
    %v1421 = vcvt.s32.f32 %v1341
    %v1422 = vcvt.s32.f32 %v1342
    %v1423 = vcvt.s32.f32 %v1343
    %v1424 = vcvt.s32.f32 %v1344
    %v1425 = vcvt.s32.f32 %v1345
    %v1426 = vcvt.s32.f32 %v1346
    %v1427 = vcvt.s32.f32 %v1347
    %v1428 = vcvt.s32.f32 %v1348
    %v1429 = vcvt.s32.f32 %v1349
    %v1430 = vcvt.s32.f32 %v1350
    %v1431 = vcvt.s32.f32 %v1351
    %v1432 = vcvt.s32.f32 %v1352
    %v1433 = vcvt.s32.f32 %v1353
    %v1434 = vcvt.s32.f32 %v1354
    %v1435 = vcvt.s32.f32 %v1355
    %v1436 = vcvt.s32.f32 %v1356
    %v1437 = vcvt.s32.f32 %v1357
    %v1438 = vcvt.s32.f32 %v1358
    %v1439 = vcvt.s32.f32 %v1359
    %v1440 = vcvt.s32.f32 %v1360
    %v1441 = vcvt.s32.f32 %v1361
    %v1442 = vcvt.s32.f32 %v1362
    %v1443 = vcvt.s32.f32 %v1363
    %v1444 = vcvt.s32.f32 %v1364
    %v1445 = vcvt.s32.f32 %v1365
    %v1446 = vcvt.s32.f32 %v1366
    %v1447 = vcvt.s32.f32 %v1367
    %v1448 = vadd.f32 %v1080, %v1368
    %v1449 = vadd.f32 %v1081, %v1369
    %v1450 = vadd.f32 %v1082, %v1370
    %v1451 = vadd.f32 %v1083, %v1371
    %v1452 = vadd.f32 %v1084, %v1372
    %v1453 = vadd.f32 %v1085, %v1373
    %v1454 = vadd.f32 %v1086, %v1374
    %v1455 = vadd.f32 %v1087, %v1375
    %v1456 = vadd.f32 %v1088, %v1376
    %v1457 = vadd.f32 %v1089, %v1377
    %v1458 = vadd.f32 %v1090, %v1378
    %v1459 = vadd.f32 %v1091, %v1379
    %v1460 = vadd.f32 %v1092, %v1380
    %v1461 = vadd.f32 %v1093, %v1381
    %v1462 = vadd.f32 %v1094, %v1382
    %v1463 = vadd.f32 %v1095, %v1383
    %v1464 = vadd.f32 %v1096, %v1384
    %v1465 = vadd.f32 %v1097, %v1385
    %v1466 = vadd.f32 %v1098, %v1386
    %v1467 = vadd.f32 %v1099, %v1387
    %v1468 = vadd.f32 %v1100, %v1388
    %v1469 = vadd.f32 %v1101, %v1389
    %v1470 = vadd.f32 %v1102, %v1390
    %v1471 = vadd.f32 %v1103, %v1391
    %v1472 = vadd.f32 %v1104, %v1392
    %v1473 = vadd.f32 %v1105, %v1393
    %v1474 = vadd.f32 %v1106, %v1394
    %v1475 = vadd.f32 %v1107, %v1395
    %v1476 = vadd.f32 %v1108, %v1396
    %v1477 = vadd.f32 %v1109, %v1397
    %v1478 = vadd.f32 %v1110, %v1398
    %v1479 = vadd.f32 %v1111, %v1399
    %v1480 = vadd.f32 %v1112, %v1400
    %v1481 = vadd.f32 %v1113, %v1401
    %v1482 = vadd.f32 %v1114, %v1402
    %v1483 = vadd.f32 %v1115, %v1403
    %v1484 = vadd.f32 %v1116, %v1404
    %v1485 = vadd.f32 %v1117, %v1405
    %v1486 = vadd.f32 %v1118, %v1406
    %v1487 = vadd.f32 %v1119, %v1407
    %v1488 = vadd.f32 %v1120, %v1408
    %v1489 = vadd.f32 %v1121, %v1409
    %v1490 = vadd.f32 %v1122, %v1410
    %v1491 = vadd.f32 %v1123, %v1411
    %v1492 = vadd.f32 %v1124, %v1412
    %v1493 = vadd.f32 %v1125, %v1413
    %v1494 = vadd.f32 %v1126, %v1414
    %v1495 = vadd.f32 %v1127, %v1415
    %v1496 = vadd.f32 %v1128, %v1416
    %v1497 = vadd.f32 %v1129, %v1417
    %v1498 = vadd.f32 %v1130, %v1418
    %v1499 = vadd.f32 %v1131, %v1419
    %v1500 = vadd.f32 %v1132, %v1420
    %v1501 = vadd.f32 %v1133, %v1421
    %v1502 = vadd.f32 %v1134, %v1422
    %v1503 = vadd.f32 %v1135, %v1423
    %v1504 = vadd.f32 %v1136, %v1424
    %v1505 = vadd.f32 %v1137, %v1425
    %v1506 = vadd.f32 %v1138, %v1426
    %v1507 = vadd.f32 %v1139, %v1427
    %v1508 = vadd.f32 %v1140, %v1428
    %v1509 = vadd.f32 %v1141, %v1429
    %v1510 = vadd.f32 %v1142, %v1430
    %v1511 = vadd.f32 %v1143, %v1431
    %v1512 = vadd.f32 %v1144, %v1432
    %v1513 = vadd.f32 %v1145, %v1433
    %v1514 = vadd.f32 %v1146, %v1434
    %v1515 = vadd.f32 %v1147, %v1435
    %v1516 = vadd.f32 %v1148, %v1436
    %v1517 = vadd.f32 %v1149, %v1437
    %v1518 = vadd.f32 %v1150, %v1438
    %v1519 = vadd.f32 %v1151, %v1439
    %v1520 = vadd.f32 %v1152, %v1440
    %v1521 = vadd.f32 %v1153, %v1441
    %v1522 = vadd.f32 %v1154, %v1442
    %v1523 = vadd.f32 %v1155, %v1443
    %v1524 = vadd.f32 %v1156, %v1444
    %v1525 = vadd.f32 %v1157, %v1445
    %v1526 = vadd.f32 %v1158, %v1446
    %v1527 = vadd.f32 %v1159, %v1447
    %1528 = vset.pattern.permute.xlu0 4
    %1529 = vperm.xlu0 %1528, %v34
    %v1530 = vpop.permute.xlu0 %1529
    %1531 = vset.pattern.permute.xlu0 4
    %1532 = vperm.xlu0 %1531, %v35
    %v1533 = vpop.permute.xlu0 %1532
    %1534 = vset.pattern.permute.xlu0 4
    %1535 = vperm.xlu0 %1534, %v36
    %v1536 = vpop.permute.xlu0 %1535
    %1537 = vset.pattern.permute.xlu0 4
    %1538 = vperm.xlu0 %1537, %v37
    %v1539 = vpop.permute.xlu0 %1538
    %1540 = vset.pattern.permute.xlu0 4
    %1541 = vperm.xlu0 %1540, %v38
    %v1542 = vpop.permute.xlu0 %1541
    %1543 = vset.pattern.permute.xlu0 4
    %1544 = vperm.xlu0 %1543, %v39
    %v1545 = vpop.permute.xlu0 %1544
    %1546 = vset.pattern.permute.xlu0 4
    %1547 = vperm.xlu0 %1546, %v40
    %v1548 = vpop.permute.xlu0 %1547
    %1549 = vset.pattern.permute.xlu0 4
    %1550 = vperm.xlu0 %1549, %v41
    %v1551 = vpop.permute.xlu0 %1550
    %1552 = vset.pattern.permute.xlu0 4
    %1553 = vperm.xlu0 %1552, %v42
    %v1554 = vpop.permute.xlu0 %1553
    %1555 = vset.pattern.permute.xlu0 4
    %1556 = vperm.xlu0 %1555, %v43
    %v1557 = vpop.permute.xlu0 %1556
    %1558 = vset.pattern.permute.xlu0 4
    %1559 = vperm.xlu0 %1558, %v44
    %v1560 = vpop.permute.xlu0 %1559
    %1561 = vset.pattern.permute.xlu0 4
    %1562 = vperm.xlu0 %1561, %v45
    %v1563 = vpop.permute.xlu0 %1562
    %1564 = vset.pattern.permute.xlu0 4
    %1565 = vperm.xlu0 %1564, %v46
    %v1566 = vpop.permute.xlu0 %1565
    %1567 = vset.pattern.permute.xlu0 4
    %1568 = vperm.xlu0 %1567, %v47
    %v1569 = vpop.permute.xlu0 %1568
    %1570 = vset.pattern.permute.xlu0 4
    %1571 = vperm.xlu0 %1570, %v48
    %v1572 = vpop.permute.xlu0 %1571
    %1573 = vset.pattern.permute.xlu0 4
    %1574 = vperm.xlu0 %1573, %v49
    %v1575 = vpop.permute.xlu0 %1574
    %vm1576 = vcmp.eq.s32.totalorder %v1530, %v51
    %vm1577 = vcmp.eq.s32.totalorder %v1530, %v52
    %vm1578 = vcmp.eq.s32.totalorder %v1530, %v53
    %vm1579 = vcmp.eq.s32.totalorder %v1530, %v54
    %vm1580 = vcmp.eq.s32.totalorder %v1530, %v55
    %vm1581 = vcmp.eq.s32.totalorder %v1533, %v51
    %vm1582 = vcmp.eq.s32.totalorder %v1533, %v52
    %vm1583 = vcmp.eq.s32.totalorder %v1533, %v53
    %vm1584 = vcmp.eq.s32.totalorder %v1533, %v54
    %vm1585 = vcmp.eq.s32.totalorder %v1533, %v55
    %vm1586 = vcmp.eq.s32.totalorder %v1536, %v51
    %vm1587 = vcmp.eq.s32.totalorder %v1536, %v52
    %vm1588 = vcmp.eq.s32.totalorder %v1536, %v53
    %vm1589 = vcmp.eq.s32.totalorder %v1536, %v54
    %vm1590 = vcmp.eq.s32.totalorder %v1536, %v55
    %vm1591 = vcmp.eq.s32.totalorder %v1539, %v51
    %vm1592 = vcmp.eq.s32.totalorder %v1539, %v52
    %vm1593 = vcmp.eq.s32.totalorder %v1539, %v53
    %vm1594 = vcmp.eq.s32.totalorder %v1539, %v54
    %vm1595 = vcmp.eq.s32.totalorder %v1539, %v55
    %vm1596 = vcmp.eq.s32.totalorder %v1542, %v51
    %vm1597 = vcmp.eq.s32.totalorder %v1542, %v52
    %vm1598 = vcmp.eq.s32.totalorder %v1542, %v53
    %vm1599 = vcmp.eq.s32.totalorder %v1542, %v54
    %vm1600 = vcmp.eq.s32.totalorder %v1542, %v55
    %vm1601 = vcmp.eq.s32.totalorder %v1545, %v51
    %vm1602 = vcmp.eq.s32.totalorder %v1545, %v52
    %vm1603 = vcmp.eq.s32.totalorder %v1545, %v53
    %vm1604 = vcmp.eq.s32.totalorder %v1545, %v54
    %vm1605 = vcmp.eq.s32.totalorder %v1545, %v55
    %vm1606 = vcmp.eq.s32.totalorder %v1548, %v51
    %vm1607 = vcmp.eq.s32.totalorder %v1548, %v52
    %vm1608 = vcmp.eq.s32.totalorder %v1548, %v53
    %vm1609 = vcmp.eq.s32.totalorder %v1548, %v54
    %vm1610 = vcmp.eq.s32.totalorder %v1548, %v55
    %vm1611 = vcmp.eq.s32.totalorder %v1551, %v51
    %vm1612 = vcmp.eq.s32.totalorder %v1551, %v52
    %vm1613 = vcmp.eq.s32.totalorder %v1551, %v53
    %vm1614 = vcmp.eq.s32.totalorder %v1551, %v54
    %vm1615 = vcmp.eq.s32.totalorder %v1551, %v55
    %vm1616 = vcmp.eq.s32.totalorder %v1554, %v51
    %vm1617 = vcmp.eq.s32.totalorder %v1554, %v52
    %vm1618 = vcmp.eq.s32.totalorder %v1554, %v53
    %vm1619 = vcmp.eq.s32.totalorder %v1554, %v54
    %vm1620 = vcmp.eq.s32.totalorder %v1554, %v55
    %vm1621 = vcmp.eq.s32.totalorder %v1557, %v51
    %vm1622 = vcmp.eq.s32.totalorder %v1557, %v52
    %vm1623 = vcmp.eq.s32.totalorder %v1557, %v53
    %vm1624 = vcmp.eq.s32.totalorder %v1557, %v54
    %vm1625 = vcmp.eq.s32.totalorder %v1557, %v55
    %vm1626 = vcmp.eq.s32.totalorder %v1560, %v51
    %vm1627 = vcmp.eq.s32.totalorder %v1560, %v52
    %vm1628 = vcmp.eq.s32.totalorder %v1560, %v53
    %vm1629 = vcmp.eq.s32.totalorder %v1560, %v54
    %vm1630 = vcmp.eq.s32.totalorder %v1560, %v55
    %vm1631 = vcmp.eq.s32.totalorder %v1563, %v51
    %vm1632 = vcmp.eq.s32.totalorder %v1563, %v52
    %vm1633 = vcmp.eq.s32.totalorder %v1563, %v53
    %vm1634 = vcmp.eq.s32.totalorder %v1563, %v54
    %vm1635 = vcmp.eq.s32.totalorder %v1563, %v55
    %vm1636 = vcmp.eq.s32.totalorder %v1566, %v51
    %vm1637 = vcmp.eq.s32.totalorder %v1566, %v52
    %vm1638 = vcmp.eq.s32.totalorder %v1566, %v53
    %vm1639 = vcmp.eq.s32.totalorder %v1566, %v54
    %vm1640 = vcmp.eq.s32.totalorder %v1566, %v55
    %vm1641 = vcmp.eq.s32.totalorder %v1569, %v51
    %vm1642 = vcmp.eq.s32.totalorder %v1569, %v52
    %vm1643 = vcmp.eq.s32.totalorder %v1569, %v53
    %vm1644 = vcmp.eq.s32.totalorder %v1569, %v54
    %vm1645 = vcmp.eq.s32.totalorder %v1569, %v55
    %vm1646 = vcmp.eq.s32.totalorder %v1572, %v51
    %vm1647 = vcmp.eq.s32.totalorder %v1572, %v52
    %vm1648 = vcmp.eq.s32.totalorder %v1572, %v53
    %vm1649 = vcmp.eq.s32.totalorder %v1572, %v54
    %vm1650 = vcmp.eq.s32.totalorder %v1572, %v55
    %vm1651 = vcmp.eq.s32.totalorder %v1575, %v51
    %vm1652 = vcmp.eq.s32.totalorder %v1575, %v52
    %vm1653 = vcmp.eq.s32.totalorder %v1575, %v53
    %vm1654 = vcmp.eq.s32.totalorder %v1575, %v54
    %vm1655 = vcmp.eq.s32.totalorder %v1575, %v55
    %v1656 = vsel %vm1576, 1, 0
    %v1657 = vsel %vm1577, 1, 0
    %v1658 = vsel %vm1578, 1, 0
    %v1659 = vsel %vm1579, 1, 0
    %v1660 = vsel %vm1580, 1, 0
    %v1661 = vsel %vm1581, 1, 0
    %v1662 = vsel %vm1582, 1, 0
    %v1663 = vsel %vm1583, 1, 0
    %v1664 = vsel %vm1584, 1, 0
    %v1665 = vsel %vm1585, 1, 0
    %v1666 = vsel %vm1586, 1, 0
    %v1667 = vsel %vm1587, 1, 0
    %v1668 = vsel %vm1588, 1, 0
    %v1669 = vsel %vm1589, 1, 0
    %v1670 = vsel %vm1590, 1, 0
    %v1671 = vsel %vm1591, 1, 0
    %v1672 = vsel %vm1592, 1, 0
    %v1673 = vsel %vm1593, 1, 0
    %v1674 = vsel %vm1594, 1, 0
    %v1675 = vsel %vm1595, 1, 0
    %v1676 = vsel %vm1596, 1, 0
    %v1677 = vsel %vm1597, 1, 0
    %v1678 = vsel %vm1598, 1, 0
    %v1679 = vsel %vm1599, 1, 0
    %v1680 = vsel %vm1600, 1, 0
    %v1681 = vsel %vm1601, 1, 0
    %v1682 = vsel %vm1602, 1, 0
    %v1683 = vsel %vm1603, 1, 0
    %v1684 = vsel %vm1604, 1, 0
    %v1685 = vsel %vm1605, 1, 0
    %v1686 = vsel %vm1606, 1, 0
    %v1687 = vsel %vm1607, 1, 0
    %v1688 = vsel %vm1608, 1, 0
    %v1689 = vsel %vm1609, 1, 0
    %v1690 = vsel %vm1610, 1, 0
    %v1691 = vsel %vm1611, 1, 0
    %v1692 = vsel %vm1612, 1, 0
    %v1693 = vsel %vm1613, 1, 0
    %v1694 = vsel %vm1614, 1, 0
    %v1695 = vsel %vm1615, 1, 0
    %v1696 = vsel %vm1616, 1, 0
    %v1697 = vsel %vm1617, 1, 0
    %v1698 = vsel %vm1618, 1, 0
    %v1699 = vsel %vm1619, 1, 0
    %v1700 = vsel %vm1620, 1, 0
    %v1701 = vsel %vm1621, 1, 0
    %v1702 = vsel %vm1622, 1, 0
    %v1703 = vsel %vm1623, 1, 0
    %v1704 = vsel %vm1624, 1, 0
    %v1705 = vsel %vm1625, 1, 0
    %v1706 = vsel %vm1626, 1, 0
    %v1707 = vsel %vm1627, 1, 0
    %v1708 = vsel %vm1628, 1, 0
    %v1709 = vsel %vm1629, 1, 0
    %v1710 = vsel %vm1630, 1, 0
    %v1711 = vsel %vm1631, 1, 0
    %v1712 = vsel %vm1632, 1, 0
    %v1713 = vsel %vm1633, 1, 0
    %v1714 = vsel %vm1634, 1, 0
    %v1715 = vsel %vm1635, 1, 0
    %v1716 = vsel %vm1636, 1, 0
    %v1717 = vsel %vm1637, 1, 0
    %v1718 = vsel %vm1638, 1, 0
    %v1719 = vsel %vm1639, 1, 0
    %v1720 = vsel %vm1640, 1, 0
    %v1721 = vsel %vm1641, 1, 0
    %v1722 = vsel %vm1642, 1, 0
    %v1723 = vsel %vm1643, 1, 0
    %v1724 = vsel %vm1644, 1, 0
    %v1725 = vsel %vm1645, 1, 0
    %v1726 = vsel %vm1646, 1, 0
    %v1727 = vsel %vm1647, 1, 0
    %v1728 = vsel %vm1648, 1, 0
    %v1729 = vsel %vm1649, 1, 0
    %v1730 = vsel %vm1650, 1, 0
    %v1731 = vsel %vm1651, 1, 0
    %v1732 = vsel %vm1652, 1, 0
    %v1733 = vsel %vm1653, 1, 0
    %v1734 = vsel %vm1654, 1, 0
    %v1735 = vsel %vm1655, 1, 0
    %v1736 = vcvt.s32.f32 %v1656
    %v1737 = vcvt.s32.f32 %v1657
    %v1738 = vcvt.s32.f32 %v1658
    %v1739 = vcvt.s32.f32 %v1659
    %v1740 = vcvt.s32.f32 %v1660
    %v1741 = vcvt.s32.f32 %v1661
    %v1742 = vcvt.s32.f32 %v1662
    %v1743 = vcvt.s32.f32 %v1663
    %v1744 = vcvt.s32.f32 %v1664
    %v1745 = vcvt.s32.f32 %v1665
    %v1746 = vcvt.s32.f32 %v1666
    %v1747 = vcvt.s32.f32 %v1667
    %v1748 = vcvt.s32.f32 %v1668
    %v1749 = vcvt.s32.f32 %v1669
    %v1750 = vcvt.s32.f32 %v1670
    %v1751 = vcvt.s32.f32 %v1671
    %v1752 = vcvt.s32.f32 %v1672
    %v1753 = vcvt.s32.f32 %v1673
    %v1754 = vcvt.s32.f32 %v1674
    %v1755 = vcvt.s32.f32 %v1675
    %v1756 = vcvt.s32.f32 %v1676
    %v1757 = vcvt.s32.f32 %v1677
    %v1758 = vcvt.s32.f32 %v1678
    %v1759 = vcvt.s32.f32 %v1679
    %v1760 = vcvt.s32.f32 %v1680
    %v1761 = vcvt.s32.f32 %v1681
    %v1762 = vcvt.s32.f32 %v1682
    %v1763 = vcvt.s32.f32 %v1683
    %v1764 = vcvt.s32.f32 %v1684
    %v1765 = vcvt.s32.f32 %v1685
    %v1766 = vcvt.s32.f32 %v1686
    %v1767 = vcvt.s32.f32 %v1687
    %v1768 = vcvt.s32.f32 %v1688
    %v1769 = vcvt.s32.f32 %v1689
    %v1770 = vcvt.s32.f32 %v1690
    %v1771 = vcvt.s32.f32 %v1691
    %v1772 = vcvt.s32.f32 %v1692
    %v1773 = vcvt.s32.f32 %v1693
    %v1774 = vcvt.s32.f32 %v1694
    %v1775 = vcvt.s32.f32 %v1695
    %v1776 = vcvt.s32.f32 %v1696
    %v1777 = vcvt.s32.f32 %v1697
    %v1778 = vcvt.s32.f32 %v1698
    %v1779 = vcvt.s32.f32 %v1699
    %v1780 = vcvt.s32.f32 %v1700
    %v1781 = vcvt.s32.f32 %v1701
    %v1782 = vcvt.s32.f32 %v1702
    %v1783 = vcvt.s32.f32 %v1703
    %v1784 = vcvt.s32.f32 %v1704
    %v1785 = vcvt.s32.f32 %v1705
    %v1786 = vcvt.s32.f32 %v1706
    %v1787 = vcvt.s32.f32 %v1707
    %v1788 = vcvt.s32.f32 %v1708
    %v1789 = vcvt.s32.f32 %v1709
    %v1790 = vcvt.s32.f32 %v1710
    %v1791 = vcvt.s32.f32 %v1711
    %v1792 = vcvt.s32.f32 %v1712
    %v1793 = vcvt.s32.f32 %v1713
    %v1794 = vcvt.s32.f32 %v1714
    %v1795 = vcvt.s32.f32 %v1715
    %v1796 = vcvt.s32.f32 %v1716
    %v1797 = vcvt.s32.f32 %v1717
    %v1798 = vcvt.s32.f32 %v1718
    %v1799 = vcvt.s32.f32 %v1719
    %v1800 = vcvt.s32.f32 %v1720
    %v1801 = vcvt.s32.f32 %v1721
    %v1802 = vcvt.s32.f32 %v1722
    %v1803 = vcvt.s32.f32 %v1723
    %v1804 = vcvt.s32.f32 %v1724
    %v1805 = vcvt.s32.f32 %v1725
    %v1806 = vcvt.s32.f32 %v1726
    %v1807 = vcvt.s32.f32 %v1727
    %v1808 = vcvt.s32.f32 %v1728
    %v1809 = vcvt.s32.f32 %v1729
    %v1810 = vcvt.s32.f32 %v1730
    %v1811 = vcvt.s32.f32 %v1731
    %v1812 = vcvt.s32.f32 %v1732
    %v1813 = vcvt.s32.f32 %v1733
    %v1814 = vcvt.s32.f32 %v1734
    %v1815 = vcvt.s32.f32 %v1735
    %v1816 = vadd.f32 %v1448, %v1736
    %v1817 = vadd.f32 %v1449, %v1737
    %v1818 = vadd.f32 %v1450, %v1738
    %v1819 = vadd.f32 %v1451, %v1739
    %v1820 = vadd.f32 %v1452, %v1740
    %v1821 = vadd.f32 %v1453, %v1741
    %v1822 = vadd.f32 %v1454, %v1742
    %v1823 = vadd.f32 %v1455, %v1743
    %v1824 = vadd.f32 %v1456, %v1744
    %v1825 = vadd.f32 %v1457, %v1745
    %v1826 = vadd.f32 %v1458, %v1746
    %v1827 = vadd.f32 %v1459, %v1747
    %v1828 = vadd.f32 %v1460, %v1748
    %v1829 = vadd.f32 %v1461, %v1749
    %v1830 = vadd.f32 %v1462, %v1750
    %v1831 = vadd.f32 %v1463, %v1751
    %v1832 = vadd.f32 %v1464, %v1752
    %v1833 = vadd.f32 %v1465, %v1753
    %v1834 = vadd.f32 %v1466, %v1754
    %v1835 = vadd.f32 %v1467, %v1755
    %v1836 = vadd.f32 %v1468, %v1756
    %v1837 = vadd.f32 %v1469, %v1757
    %v1838 = vadd.f32 %v1470, %v1758
    %v1839 = vadd.f32 %v1471, %v1759
    %v1840 = vadd.f32 %v1472, %v1760
    %v1841 = vadd.f32 %v1473, %v1761
    %v1842 = vadd.f32 %v1474, %v1762
    %v1843 = vadd.f32 %v1475, %v1763
    %v1844 = vadd.f32 %v1476, %v1764
    %v1845 = vadd.f32 %v1477, %v1765
    %v1846 = vadd.f32 %v1478, %v1766
    %v1847 = vadd.f32 %v1479, %v1767
    %v1848 = vadd.f32 %v1480, %v1768
    %v1849 = vadd.f32 %v1481, %v1769
    %v1850 = vadd.f32 %v1482, %v1770
    %v1851 = vadd.f32 %v1483, %v1771
    %v1852 = vadd.f32 %v1484, %v1772
    %v1853 = vadd.f32 %v1485, %v1773
    %v1854 = vadd.f32 %v1486, %v1774
    %v1855 = vadd.f32 %v1487, %v1775
    %v1856 = vadd.f32 %v1488, %v1776
    %v1857 = vadd.f32 %v1489, %v1777
    %v1858 = vadd.f32 %v1490, %v1778
    %v1859 = vadd.f32 %v1491, %v1779
    %v1860 = vadd.f32 %v1492, %v1780
    %v1861 = vadd.f32 %v1493, %v1781
    %v1862 = vadd.f32 %v1494, %v1782
    %v1863 = vadd.f32 %v1495, %v1783
    %v1864 = vadd.f32 %v1496, %v1784
    %v1865 = vadd.f32 %v1497, %v1785
    %v1866 = vadd.f32 %v1498, %v1786
    %v1867 = vadd.f32 %v1499, %v1787
    %v1868 = vadd.f32 %v1500, %v1788
    %v1869 = vadd.f32 %v1501, %v1789
    %v1870 = vadd.f32 %v1502, %v1790
    %v1871 = vadd.f32 %v1503, %v1791
    %v1872 = vadd.f32 %v1504, %v1792
    %v1873 = vadd.f32 %v1505, %v1793
    %v1874 = vadd.f32 %v1506, %v1794
    %v1875 = vadd.f32 %v1507, %v1795
    %v1876 = vadd.f32 %v1508, %v1796
    %v1877 = vadd.f32 %v1509, %v1797
    %v1878 = vadd.f32 %v1510, %v1798
    %v1879 = vadd.f32 %v1511, %v1799
    %v1880 = vadd.f32 %v1512, %v1800
    %v1881 = vadd.f32 %v1513, %v1801
    %v1882 = vadd.f32 %v1514, %v1802
    %v1883 = vadd.f32 %v1515, %v1803
    %v1884 = vadd.f32 %v1516, %v1804
    %v1885 = vadd.f32 %v1517, %v1805
    %v1886 = vadd.f32 %v1518, %v1806
    %v1887 = vadd.f32 %v1519, %v1807
    %v1888 = vadd.f32 %v1520, %v1808
    %v1889 = vadd.f32 %v1521, %v1809
    %v1890 = vadd.f32 %v1522, %v1810
    %v1891 = vadd.f32 %v1523, %v1811
    %v1892 = vadd.f32 %v1524, %v1812
    %v1893 = vadd.f32 %v1525, %v1813
    %v1894 = vadd.f32 %v1526, %v1814
    %v1895 = vadd.f32 %v1527, %v1815
    %1896 = vset.pattern.permute.xlu0 5
    %1897 = vperm.xlu0 %1896, %v34
    %v1898 = vpop.permute.xlu0 %1897
    %1899 = vset.pattern.permute.xlu0 5
    %1900 = vperm.xlu0 %1899, %v35
    %v1901 = vpop.permute.xlu0 %1900
    %1902 = vset.pattern.permute.xlu0 5
    %1903 = vperm.xlu0 %1902, %v36
    %v1904 = vpop.permute.xlu0 %1903
    %1905 = vset.pattern.permute.xlu0 5
    %1906 = vperm.xlu0 %1905, %v37
    %v1907 = vpop.permute.xlu0 %1906
    %1908 = vset.pattern.permute.xlu0 5
    %1909 = vperm.xlu0 %1908, %v38
    %v1910 = vpop.permute.xlu0 %1909
    %1911 = vset.pattern.permute.xlu0 5
    %1912 = vperm.xlu0 %1911, %v39
    %v1913 = vpop.permute.xlu0 %1912
    %1914 = vset.pattern.permute.xlu0 5
    %1915 = vperm.xlu0 %1914, %v40
    %v1916 = vpop.permute.xlu0 %1915
    %1917 = vset.pattern.permute.xlu0 5
    %1918 = vperm.xlu0 %1917, %v41
    %v1919 = vpop.permute.xlu0 %1918
    %1920 = vset.pattern.permute.xlu0 5
    %1921 = vperm.xlu0 %1920, %v42
    %v1922 = vpop.permute.xlu0 %1921
    %1923 = vset.pattern.permute.xlu0 5
    %1924 = vperm.xlu0 %1923, %v43
    %v1925 = vpop.permute.xlu0 %1924
    %1926 = vset.pattern.permute.xlu0 5
    %1927 = vperm.xlu0 %1926, %v44
    %v1928 = vpop.permute.xlu0 %1927
    %1929 = vset.pattern.permute.xlu0 5
    %1930 = vperm.xlu0 %1929, %v45
    %v1931 = vpop.permute.xlu0 %1930
    %1932 = vset.pattern.permute.xlu0 5
    %1933 = vperm.xlu0 %1932, %v46
    %v1934 = vpop.permute.xlu0 %1933
    %1935 = vset.pattern.permute.xlu0 5
    %1936 = vperm.xlu0 %1935, %v47
    %v1937 = vpop.permute.xlu0 %1936
    %1938 = vset.pattern.permute.xlu0 5
    %1939 = vperm.xlu0 %1938, %v48
    %v1940 = vpop.permute.xlu0 %1939
    %1941 = vset.pattern.permute.xlu0 5
    %1942 = vperm.xlu0 %1941, %v49
    %v1943 = vpop.permute.xlu0 %1942
    %vm1944 = vcmp.eq.s32.totalorder %v1898, %v51
    %vm1945 = vcmp.eq.s32.totalorder %v1898, %v52
    %vm1946 = vcmp.eq.s32.totalorder %v1898, %v53
    %vm1947 = vcmp.eq.s32.totalorder %v1898, %v54
    %vm1948 = vcmp.eq.s32.totalorder %v1898, %v55
    %vm1949 = vcmp.eq.s32.totalorder %v1901, %v51
    %vm1950 = vcmp.eq.s32.totalorder %v1901, %v52
    %vm1951 = vcmp.eq.s32.totalorder %v1901, %v53
    %vm1952 = vcmp.eq.s32.totalorder %v1901, %v54
    %vm1953 = vcmp.eq.s32.totalorder %v1901, %v55
    %vm1954 = vcmp.eq.s32.totalorder %v1904, %v51
    %vm1955 = vcmp.eq.s32.totalorder %v1904, %v52
    %vm1956 = vcmp.eq.s32.totalorder %v1904, %v53
    %vm1957 = vcmp.eq.s32.totalorder %v1904, %v54
    %vm1958 = vcmp.eq.s32.totalorder %v1904, %v55
    %vm1959 = vcmp.eq.s32.totalorder %v1907, %v51
    %vm1960 = vcmp.eq.s32.totalorder %v1907, %v52
    %vm1961 = vcmp.eq.s32.totalorder %v1907, %v53
    %vm1962 = vcmp.eq.s32.totalorder %v1907, %v54
    %vm1963 = vcmp.eq.s32.totalorder %v1907, %v55
    %vm1964 = vcmp.eq.s32.totalorder %v1910, %v51
    %vm1965 = vcmp.eq.s32.totalorder %v1910, %v52
    %vm1966 = vcmp.eq.s32.totalorder %v1910, %v53
    %vm1967 = vcmp.eq.s32.totalorder %v1910, %v54
    %vm1968 = vcmp.eq.s32.totalorder %v1910, %v55
    %vm1969 = vcmp.eq.s32.totalorder %v1913, %v51
    %vm1970 = vcmp.eq.s32.totalorder %v1913, %v52
    %vm1971 = vcmp.eq.s32.totalorder %v1913, %v53
    %vm1972 = vcmp.eq.s32.totalorder %v1913, %v54
    %vm1973 = vcmp.eq.s32.totalorder %v1913, %v55
    %vm1974 = vcmp.eq.s32.totalorder %v1916, %v51
    %vm1975 = vcmp.eq.s32.totalorder %v1916, %v52
    %vm1976 = vcmp.eq.s32.totalorder %v1916, %v53
    %vm1977 = vcmp.eq.s32.totalorder %v1916, %v54
    %vm1978 = vcmp.eq.s32.totalorder %v1916, %v55
    %vm1979 = vcmp.eq.s32.totalorder %v1919, %v51
    %vm1980 = vcmp.eq.s32.totalorder %v1919, %v52
    %vm1981 = vcmp.eq.s32.totalorder %v1919, %v53
    %vm1982 = vcmp.eq.s32.totalorder %v1919, %v54
    %vm1983 = vcmp.eq.s32.totalorder %v1919, %v55
    %vm1984 = vcmp.eq.s32.totalorder %v1922, %v51
    %vm1985 = vcmp.eq.s32.totalorder %v1922, %v52
    %vm1986 = vcmp.eq.s32.totalorder %v1922, %v53
    %vm1987 = vcmp.eq.s32.totalorder %v1922, %v54
    %vm1988 = vcmp.eq.s32.totalorder %v1922, %v55
    %vm1989 = vcmp.eq.s32.totalorder %v1925, %v51
    %vm1990 = vcmp.eq.s32.totalorder %v1925, %v52
    %vm1991 = vcmp.eq.s32.totalorder %v1925, %v53
    %vm1992 = vcmp.eq.s32.totalorder %v1925, %v54
    %vm1993 = vcmp.eq.s32.totalorder %v1925, %v55
    %vm1994 = vcmp.eq.s32.totalorder %v1928, %v51
    %vm1995 = vcmp.eq.s32.totalorder %v1928, %v52
    %vm1996 = vcmp.eq.s32.totalorder %v1928, %v53
    %vm1997 = vcmp.eq.s32.totalorder %v1928, %v54
    %vm1998 = vcmp.eq.s32.totalorder %v1928, %v55
    %vm1999 = vcmp.eq.s32.totalorder %v1931, %v51
    %vm2000 = vcmp.eq.s32.totalorder %v1931, %v52
    %vm2001 = vcmp.eq.s32.totalorder %v1931, %v53
    %vm2002 = vcmp.eq.s32.totalorder %v1931, %v54
    %vm2003 = vcmp.eq.s32.totalorder %v1931, %v55
    %vm2004 = vcmp.eq.s32.totalorder %v1934, %v51
    %vm2005 = vcmp.eq.s32.totalorder %v1934, %v52
    %vm2006 = vcmp.eq.s32.totalorder %v1934, %v53
    %vm2007 = vcmp.eq.s32.totalorder %v1934, %v54
    %vm2008 = vcmp.eq.s32.totalorder %v1934, %v55
    %vm2009 = vcmp.eq.s32.totalorder %v1937, %v51
    %vm2010 = vcmp.eq.s32.totalorder %v1937, %v52
    %vm2011 = vcmp.eq.s32.totalorder %v1937, %v53
    %vm2012 = vcmp.eq.s32.totalorder %v1937, %v54
    %vm2013 = vcmp.eq.s32.totalorder %v1937, %v55
    %vm2014 = vcmp.eq.s32.totalorder %v1940, %v51
    %vm2015 = vcmp.eq.s32.totalorder %v1940, %v52
    %vm2016 = vcmp.eq.s32.totalorder %v1940, %v53
    %vm2017 = vcmp.eq.s32.totalorder %v1940, %v54
    %vm2018 = vcmp.eq.s32.totalorder %v1940, %v55
    %vm2019 = vcmp.eq.s32.totalorder %v1943, %v51
    %vm2020 = vcmp.eq.s32.totalorder %v1943, %v52
    %vm2021 = vcmp.eq.s32.totalorder %v1943, %v53
    %vm2022 = vcmp.eq.s32.totalorder %v1943, %v54
    %vm2023 = vcmp.eq.s32.totalorder %v1943, %v55
    %v2024 = vsel %vm1944, 1, 0
    %v2025 = vsel %vm1945, 1, 0
    %v2026 = vsel %vm1946, 1, 0
    %v2027 = vsel %vm1947, 1, 0
    %v2028 = vsel %vm1948, 1, 0
    %v2029 = vsel %vm1949, 1, 0
    %v2030 = vsel %vm1950, 1, 0
    %v2031 = vsel %vm1951, 1, 0
    %v2032 = vsel %vm1952, 1, 0
    %v2033 = vsel %vm1953, 1, 0
    %v2034 = vsel %vm1954, 1, 0
    %v2035 = vsel %vm1955, 1, 0
    %v2036 = vsel %vm1956, 1, 0
    %v2037 = vsel %vm1957, 1, 0
    %v2038 = vsel %vm1958, 1, 0
    %v2039 = vsel %vm1959, 1, 0
    %v2040 = vsel %vm1960, 1, 0
    %v2041 = vsel %vm1961, 1, 0
    %v2042 = vsel %vm1962, 1, 0
    %v2043 = vsel %vm1963, 1, 0
    %v2044 = vsel %vm1964, 1, 0
    %v2045 = vsel %vm1965, 1, 0
    %v2046 = vsel %vm1966, 1, 0
    %v2047 = vsel %vm1967, 1, 0
    %v2048 = vsel %vm1968, 1, 0
    %v2049 = vsel %vm1969, 1, 0
    %v2050 = vsel %vm1970, 1, 0
    %v2051 = vsel %vm1971, 1, 0
    %v2052 = vsel %vm1972, 1, 0
    %v2053 = vsel %vm1973, 1, 0
    %v2054 = vsel %vm1974, 1, 0
    %v2055 = vsel %vm1975, 1, 0
    %v2056 = vsel %vm1976, 1, 0
    %v2057 = vsel %vm1977, 1, 0
    %v2058 = vsel %vm1978, 1, 0
    %v2059 = vsel %vm1979, 1, 0
    %v2060 = vsel %vm1980, 1, 0
    %v2061 = vsel %vm1981, 1, 0
    %v2062 = vsel %vm1982, 1, 0
    %v2063 = vsel %vm1983, 1, 0
    %v2064 = vsel %vm1984, 1, 0
    %v2065 = vsel %vm1985, 1, 0
    %v2066 = vsel %vm1986, 1, 0
    %v2067 = vsel %vm1987, 1, 0
    %v2068 = vsel %vm1988, 1, 0
    %v2069 = vsel %vm1989, 1, 0
    %v2070 = vsel %vm1990, 1, 0
    %v2071 = vsel %vm1991, 1, 0
    %v2072 = vsel %vm1992, 1, 0
    %v2073 = vsel %vm1993, 1, 0
    %v2074 = vsel %vm1994, 1, 0
    %v2075 = vsel %vm1995, 1, 0
    %v2076 = vsel %vm1996, 1, 0
    %v2077 = vsel %vm1997, 1, 0
    %v2078 = vsel %vm1998, 1, 0
    %v2079 = vsel %vm1999, 1, 0
    %v2080 = vsel %vm2000, 1, 0
    %v2081 = vsel %vm2001, 1, 0
    %v2082 = vsel %vm2002, 1, 0
    %v2083 = vsel %vm2003, 1, 0
    %v2084 = vsel %vm2004, 1, 0
    %v2085 = vsel %vm2005, 1, 0
    %v2086 = vsel %vm2006, 1, 0
    %v2087 = vsel %vm2007, 1, 0
    %v2088 = vsel %vm2008, 1, 0
    %v2089 = vsel %vm2009, 1, 0
    %v2090 = vsel %vm2010, 1, 0
    %v2091 = vsel %vm2011, 1, 0
    %v2092 = vsel %vm2012, 1, 0
    %v2093 = vsel %vm2013, 1, 0
    %v2094 = vsel %vm2014, 1, 0
    %v2095 = vsel %vm2015, 1, 0
    %v2096 = vsel %vm2016, 1, 0
    %v2097 = vsel %vm2017, 1, 0
    %v2098 = vsel %vm2018, 1, 0
    %v2099 = vsel %vm2019, 1, 0
    %v2100 = vsel %vm2020, 1, 0
    %v2101 = vsel %vm2021, 1, 0
    %v2102 = vsel %vm2022, 1, 0
    %v2103 = vsel %vm2023, 1, 0
    %v2104 = vcvt.s32.f32 %v2024
    %v2105 = vcvt.s32.f32 %v2025
    %v2106 = vcvt.s32.f32 %v2026
    %v2107 = vcvt.s32.f32 %v2027
    %v2108 = vcvt.s32.f32 %v2028
    %v2109 = vcvt.s32.f32 %v2029
    %v2110 = vcvt.s32.f32 %v2030
    %v2111 = vcvt.s32.f32 %v2031
    %v2112 = vcvt.s32.f32 %v2032
    %v2113 = vcvt.s32.f32 %v2033
    %v2114 = vcvt.s32.f32 %v2034
    %v2115 = vcvt.s32.f32 %v2035
    %v2116 = vcvt.s32.f32 %v2036
    %v2117 = vcvt.s32.f32 %v2037
    %v2118 = vcvt.s32.f32 %v2038
    %v2119 = vcvt.s32.f32 %v2039
    %v2120 = vcvt.s32.f32 %v2040
    %v2121 = vcvt.s32.f32 %v2041
    %v2122 = vcvt.s32.f32 %v2042
    %v2123 = vcvt.s32.f32 %v2043
    %v2124 = vcvt.s32.f32 %v2044
    %v2125 = vcvt.s32.f32 %v2045
    %v2126 = vcvt.s32.f32 %v2046
    %v2127 = vcvt.s32.f32 %v2047
    %v2128 = vcvt.s32.f32 %v2048
    %v2129 = vcvt.s32.f32 %v2049
    %v2130 = vcvt.s32.f32 %v2050
    %v2131 = vcvt.s32.f32 %v2051
    %v2132 = vcvt.s32.f32 %v2052
    %v2133 = vcvt.s32.f32 %v2053
    %v2134 = vcvt.s32.f32 %v2054
    %v2135 = vcvt.s32.f32 %v2055
    %v2136 = vcvt.s32.f32 %v2056
    %v2137 = vcvt.s32.f32 %v2057
    %v2138 = vcvt.s32.f32 %v2058
    %v2139 = vcvt.s32.f32 %v2059
    %v2140 = vcvt.s32.f32 %v2060
    %v2141 = vcvt.s32.f32 %v2061
    %v2142 = vcvt.s32.f32 %v2062
    %v2143 = vcvt.s32.f32 %v2063
    %v2144 = vcvt.s32.f32 %v2064
    %v2145 = vcvt.s32.f32 %v2065
    %v2146 = vcvt.s32.f32 %v2066
    %v2147 = vcvt.s32.f32 %v2067
    %v2148 = vcvt.s32.f32 %v2068
    %v2149 = vcvt.s32.f32 %v2069
    %v2150 = vcvt.s32.f32 %v2070
    %v2151 = vcvt.s32.f32 %v2071
    %v2152 = vcvt.s32.f32 %v2072
    %v2153 = vcvt.s32.f32 %v2073
    %v2154 = vcvt.s32.f32 %v2074
    %v2155 = vcvt.s32.f32 %v2075
    %v2156 = vcvt.s32.f32 %v2076
    %v2157 = vcvt.s32.f32 %v2077
    %v2158 = vcvt.s32.f32 %v2078
    %v2159 = vcvt.s32.f32 %v2079
    %v2160 = vcvt.s32.f32 %v2080
    %v2161 = vcvt.s32.f32 %v2081
    %v2162 = vcvt.s32.f32 %v2082
    %v2163 = vcvt.s32.f32 %v2083
    %v2164 = vcvt.s32.f32 %v2084
    %v2165 = vcvt.s32.f32 %v2085
    %v2166 = vcvt.s32.f32 %v2086
    %v2167 = vcvt.s32.f32 %v2087
    %v2168 = vcvt.s32.f32 %v2088
    %v2169 = vcvt.s32.f32 %v2089
    %v2170 = vcvt.s32.f32 %v2090
    %v2171 = vcvt.s32.f32 %v2091
    %v2172 = vcvt.s32.f32 %v2092
    %v2173 = vcvt.s32.f32 %v2093
    %v2174 = vcvt.s32.f32 %v2094
    %v2175 = vcvt.s32.f32 %v2095
    %v2176 = vcvt.s32.f32 %v2096
    %v2177 = vcvt.s32.f32 %v2097
    %v2178 = vcvt.s32.f32 %v2098
    %v2179 = vcvt.s32.f32 %v2099
    %v2180 = vcvt.s32.f32 %v2100
    %v2181 = vcvt.s32.f32 %v2101
    %v2182 = vcvt.s32.f32 %v2102
    %v2183 = vcvt.s32.f32 %v2103
    %v2184 = vadd.f32 %v1816, %v2104
    %v2185 = vadd.f32 %v1817, %v2105
    %v2186 = vadd.f32 %v1818, %v2106
    %v2187 = vadd.f32 %v1819, %v2107
    %v2188 = vadd.f32 %v1820, %v2108
    %v2189 = vadd.f32 %v1821, %v2109
    %v2190 = vadd.f32 %v1822, %v2110
    %v2191 = vadd.f32 %v1823, %v2111
    %v2192 = vadd.f32 %v1824, %v2112
    %v2193 = vadd.f32 %v1825, %v2113
    %v2194 = vadd.f32 %v1826, %v2114
    %v2195 = vadd.f32 %v1827, %v2115
    %v2196 = vadd.f32 %v1828, %v2116
    %v2197 = vadd.f32 %v1829, %v2117
    %v2198 = vadd.f32 %v1830, %v2118
    %v2199 = vadd.f32 %v1831, %v2119
    %v2200 = vadd.f32 %v1832, %v2120
    %v2201 = vadd.f32 %v1833, %v2121
    %v2202 = vadd.f32 %v1834, %v2122
    %v2203 = vadd.f32 %v1835, %v2123
    %v2204 = vadd.f32 %v1836, %v2124
    %v2205 = vadd.f32 %v1837, %v2125
    %v2206 = vadd.f32 %v1838, %v2126
    %v2207 = vadd.f32 %v1839, %v2127
    %v2208 = vadd.f32 %v1840, %v2128
    %v2209 = vadd.f32 %v1841, %v2129
    %v2210 = vadd.f32 %v1842, %v2130
    %v2211 = vadd.f32 %v1843, %v2131
    %v2212 = vadd.f32 %v1844, %v2132
    %v2213 = vadd.f32 %v1845, %v2133
    %v2214 = vadd.f32 %v1846, %v2134
    %v2215 = vadd.f32 %v1847, %v2135
    %v2216 = vadd.f32 %v1848, %v2136
    %v2217 = vadd.f32 %v1849, %v2137
    %v2218 = vadd.f32 %v1850, %v2138
    %v2219 = vadd.f32 %v1851, %v2139
    %v2220 = vadd.f32 %v1852, %v2140
    %v2221 = vadd.f32 %v1853, %v2141
    %v2222 = vadd.f32 %v1854, %v2142
    %v2223 = vadd.f32 %v1855, %v2143
    %v2224 = vadd.f32 %v1856, %v2144
    %v2225 = vadd.f32 %v1857, %v2145
    %v2226 = vadd.f32 %v1858, %v2146
    %v2227 = vadd.f32 %v1859, %v2147
    %v2228 = vadd.f32 %v1860, %v2148
    %v2229 = vadd.f32 %v1861, %v2149
    %v2230 = vadd.f32 %v1862, %v2150
    %v2231 = vadd.f32 %v1863, %v2151
    %v2232 = vadd.f32 %v1864, %v2152
    %v2233 = vadd.f32 %v1865, %v2153
    %v2234 = vadd.f32 %v1866, %v2154
    %v2235 = vadd.f32 %v1867, %v2155
    %v2236 = vadd.f32 %v1868, %v2156
    %v2237 = vadd.f32 %v1869, %v2157
    %v2238 = vadd.f32 %v1870, %v2158
    %v2239 = vadd.f32 %v1871, %v2159
    %v2240 = vadd.f32 %v1872, %v2160
    %v2241 = vadd.f32 %v1873, %v2161
    %v2242 = vadd.f32 %v1874, %v2162
    %v2243 = vadd.f32 %v1875, %v2163
    %v2244 = vadd.f32 %v1876, %v2164
    %v2245 = vadd.f32 %v1877, %v2165
    %v2246 = vadd.f32 %v1878, %v2166
    %v2247 = vadd.f32 %v1879, %v2167
    %v2248 = vadd.f32 %v1880, %v2168
    %v2249 = vadd.f32 %v1881, %v2169
    %v2250 = vadd.f32 %v1882, %v2170
    %v2251 = vadd.f32 %v1883, %v2171
    %v2252 = vadd.f32 %v1884, %v2172
    %v2253 = vadd.f32 %v1885, %v2173
    %v2254 = vadd.f32 %v1886, %v2174
    %v2255 = vadd.f32 %v1887, %v2175
    %v2256 = vadd.f32 %v1888, %v2176
    %v2257 = vadd.f32 %v1889, %v2177
    %v2258 = vadd.f32 %v1890, %v2178
    %v2259 = vadd.f32 %v1891, %v2179
    %v2260 = vadd.f32 %v1892, %v2180
    %v2261 = vadd.f32 %v1893, %v2181
    %v2262 = vadd.f32 %v1894, %v2182
    %v2263 = vadd.f32 %v1895, %v2183
    %2264 = vset.pattern.permute.xlu0 6
    %2265 = vperm.xlu0 %2264, %v34
    %v2266 = vpop.permute.xlu0 %2265
    %2267 = vset.pattern.permute.xlu0 6
    %2268 = vperm.xlu0 %2267, %v35
    %v2269 = vpop.permute.xlu0 %2268
    %2270 = vset.pattern.permute.xlu0 6
    %2271 = vperm.xlu0 %2270, %v36
    %v2272 = vpop.permute.xlu0 %2271
    %2273 = vset.pattern.permute.xlu0 6
    %2274 = vperm.xlu0 %2273, %v37
    %v2275 = vpop.permute.xlu0 %2274
    %2276 = vset.pattern.permute.xlu0 6
    %2277 = vperm.xlu0 %2276, %v38
    %v2278 = vpop.permute.xlu0 %2277
    %2279 = vset.pattern.permute.xlu0 6
    %2280 = vperm.xlu0 %2279, %v39
    %v2281 = vpop.permute.xlu0 %2280
    %2282 = vset.pattern.permute.xlu0 6
    %2283 = vperm.xlu0 %2282, %v40
    %v2284 = vpop.permute.xlu0 %2283
    %2285 = vset.pattern.permute.xlu0 6
    %2286 = vperm.xlu0 %2285, %v41
    %v2287 = vpop.permute.xlu0 %2286
    %2288 = vset.pattern.permute.xlu0 6
    %2289 = vperm.xlu0 %2288, %v42
    %v2290 = vpop.permute.xlu0 %2289
    %2291 = vset.pattern.permute.xlu0 6
    %2292 = vperm.xlu0 %2291, %v43
    %v2293 = vpop.permute.xlu0 %2292
    %2294 = vset.pattern.permute.xlu0 6
    %2295 = vperm.xlu0 %2294, %v44
    %v2296 = vpop.permute.xlu0 %2295
    %2297 = vset.pattern.permute.xlu0 6
    %2298 = vperm.xlu0 %2297, %v45
    %v2299 = vpop.permute.xlu0 %2298
    %2300 = vset.pattern.permute.xlu0 6
    %2301 = vperm.xlu0 %2300, %v46
    %v2302 = vpop.permute.xlu0 %2301
    %2303 = vset.pattern.permute.xlu0 6
    %2304 = vperm.xlu0 %2303, %v47
    %v2305 = vpop.permute.xlu0 %2304
    %2306 = vset.pattern.permute.xlu0 6
    %2307 = vperm.xlu0 %2306, %v48
    %v2308 = vpop.permute.xlu0 %2307
    %2309 = vset.pattern.permute.xlu0 6
    %2310 = vperm.xlu0 %2309, %v49
    %v2311 = vpop.permute.xlu0 %2310
    %vm2312 = vcmp.eq.s32.totalorder %v2266, %v51
    %vm2313 = vcmp.eq.s32.totalorder %v2266, %v52
    %vm2314 = vcmp.eq.s32.totalorder %v2266, %v53
    %vm2315 = vcmp.eq.s32.totalorder %v2266, %v54
    %vm2316 = vcmp.eq.s32.totalorder %v2266, %v55
    %vm2317 = vcmp.eq.s32.totalorder %v2269, %v51
    %vm2318 = vcmp.eq.s32.totalorder %v2269, %v52
    %vm2319 = vcmp.eq.s32.totalorder %v2269, %v53
    %vm2320 = vcmp.eq.s32.totalorder %v2269, %v54
    %vm2321 = vcmp.eq.s32.totalorder %v2269, %v55
    %vm2322 = vcmp.eq.s32.totalorder %v2272, %v51
    %vm2323 = vcmp.eq.s32.totalorder %v2272, %v52
    %vm2324 = vcmp.eq.s32.totalorder %v2272, %v53
    %vm2325 = vcmp.eq.s32.totalorder %v2272, %v54
    %vm2326 = vcmp.eq.s32.totalorder %v2272, %v55
    %vm2327 = vcmp.eq.s32.totalorder %v2275, %v51
    %vm2328 = vcmp.eq.s32.totalorder %v2275, %v52
    %vm2329 = vcmp.eq.s32.totalorder %v2275, %v53
    %vm2330 = vcmp.eq.s32.totalorder %v2275, %v54
    %vm2331 = vcmp.eq.s32.totalorder %v2275, %v55
    %vm2332 = vcmp.eq.s32.totalorder %v2278, %v51
    %vm2333 = vcmp.eq.s32.totalorder %v2278, %v52
    %vm2334 = vcmp.eq.s32.totalorder %v2278, %v53
    %vm2335 = vcmp.eq.s32.totalorder %v2278, %v54
    %vm2336 = vcmp.eq.s32.totalorder %v2278, %v55
    %vm2337 = vcmp.eq.s32.totalorder %v2281, %v51
    %vm2338 = vcmp.eq.s32.totalorder %v2281, %v52
    %vm2339 = vcmp.eq.s32.totalorder %v2281, %v53
    %vm2340 = vcmp.eq.s32.totalorder %v2281, %v54
    %vm2341 = vcmp.eq.s32.totalorder %v2281, %v55
    %vm2342 = vcmp.eq.s32.totalorder %v2284, %v51
    %vm2343 = vcmp.eq.s32.totalorder %v2284, %v52
    %vm2344 = vcmp.eq.s32.totalorder %v2284, %v53
    %vm2345 = vcmp.eq.s32.totalorder %v2284, %v54
    %vm2346 = vcmp.eq.s32.totalorder %v2284, %v55
    %vm2347 = vcmp.eq.s32.totalorder %v2287, %v51
    %vm2348 = vcmp.eq.s32.totalorder %v2287, %v52
    %vm2349 = vcmp.eq.s32.totalorder %v2287, %v53
    %vm2350 = vcmp.eq.s32.totalorder %v2287, %v54
    %vm2351 = vcmp.eq.s32.totalorder %v2287, %v55
    %vm2352 = vcmp.eq.s32.totalorder %v2290, %v51
    %vm2353 = vcmp.eq.s32.totalorder %v2290, %v52
    %vm2354 = vcmp.eq.s32.totalorder %v2290, %v53
    %vm2355 = vcmp.eq.s32.totalorder %v2290, %v54
    %vm2356 = vcmp.eq.s32.totalorder %v2290, %v55
    %vm2357 = vcmp.eq.s32.totalorder %v2293, %v51
    %vm2358 = vcmp.eq.s32.totalorder %v2293, %v52
    %vm2359 = vcmp.eq.s32.totalorder %v2293, %v53
    %vm2360 = vcmp.eq.s32.totalorder %v2293, %v54
    %vm2361 = vcmp.eq.s32.totalorder %v2293, %v55
    %vm2362 = vcmp.eq.s32.totalorder %v2296, %v51
    %vm2363 = vcmp.eq.s32.totalorder %v2296, %v52
    %vm2364 = vcmp.eq.s32.totalorder %v2296, %v53
    %vm2365 = vcmp.eq.s32.totalorder %v2296, %v54
    %vm2366 = vcmp.eq.s32.totalorder %v2296, %v55
    %vm2367 = vcmp.eq.s32.totalorder %v2299, %v51
    %vm2368 = vcmp.eq.s32.totalorder %v2299, %v52
    %vm2369 = vcmp.eq.s32.totalorder %v2299, %v53
    %vm2370 = vcmp.eq.s32.totalorder %v2299, %v54
    %vm2371 = vcmp.eq.s32.totalorder %v2299, %v55
    %vm2372 = vcmp.eq.s32.totalorder %v2302, %v51
    %vm2373 = vcmp.eq.s32.totalorder %v2302, %v52
    %vm2374 = vcmp.eq.s32.totalorder %v2302, %v53
    %vm2375 = vcmp.eq.s32.totalorder %v2302, %v54
    %vm2376 = vcmp.eq.s32.totalorder %v2302, %v55
    %vm2377 = vcmp.eq.s32.totalorder %v2305, %v51
    %vm2378 = vcmp.eq.s32.totalorder %v2305, %v52
    %vm2379 = vcmp.eq.s32.totalorder %v2305, %v53
    %vm2380 = vcmp.eq.s32.totalorder %v2305, %v54
    %vm2381 = vcmp.eq.s32.totalorder %v2305, %v55
    %vm2382 = vcmp.eq.s32.totalorder %v2308, %v51
    %vm2383 = vcmp.eq.s32.totalorder %v2308, %v52
    %vm2384 = vcmp.eq.s32.totalorder %v2308, %v53
    %vm2385 = vcmp.eq.s32.totalorder %v2308, %v54
    %vm2386 = vcmp.eq.s32.totalorder %v2308, %v55
    %vm2387 = vcmp.eq.s32.totalorder %v2311, %v51
    %vm2388 = vcmp.eq.s32.totalorder %v2311, %v52
    %vm2389 = vcmp.eq.s32.totalorder %v2311, %v53
    %vm2390 = vcmp.eq.s32.totalorder %v2311, %v54
    %vm2391 = vcmp.eq.s32.totalorder %v2311, %v55
    %v2392 = vsel %vm2312, 1, 0
    %v2393 = vsel %vm2313, 1, 0
    %v2394 = vsel %vm2314, 1, 0
    %v2395 = vsel %vm2315, 1, 0
    %v2396 = vsel %vm2316, 1, 0
    %v2397 = vsel %vm2317, 1, 0
    %v2398 = vsel %vm2318, 1, 0
    %v2399 = vsel %vm2319, 1, 0
    %v2400 = vsel %vm2320, 1, 0
    %v2401 = vsel %vm2321, 1, 0
    %v2402 = vsel %vm2322, 1, 0
    %v2403 = vsel %vm2323, 1, 0
    %v2404 = vsel %vm2324, 1, 0
    %v2405 = vsel %vm2325, 1, 0
    %v2406 = vsel %vm2326, 1, 0
    %v2407 = vsel %vm2327, 1, 0
    %v2408 = vsel %vm2328, 1, 0
    %v2409 = vsel %vm2329, 1, 0
    %v2410 = vsel %vm2330, 1, 0
    %v2411 = vsel %vm2331, 1, 0
    %v2412 = vsel %vm2332, 1, 0
    %v2413 = vsel %vm2333, 1, 0
    %v2414 = vsel %vm2334, 1, 0
    %v2415 = vsel %vm2335, 1, 0
    %v2416 = vsel %vm2336, 1, 0
    %v2417 = vsel %vm2337, 1, 0
    %v2418 = vsel %vm2338, 1, 0
    %v2419 = vsel %vm2339, 1, 0
    %v2420 = vsel %vm2340, 1, 0
    %v2421 = vsel %vm2341, 1, 0
    %v2422 = vsel %vm2342, 1, 0
    %v2423 = vsel %vm2343, 1, 0
    %v2424 = vsel %vm2344, 1, 0
    %v2425 = vsel %vm2345, 1, 0
    %v2426 = vsel %vm2346, 1, 0
    %v2427 = vsel %vm2347, 1, 0
    %v2428 = vsel %vm2348, 1, 0
    %v2429 = vsel %vm2349, 1, 0
    %v2430 = vsel %vm2350, 1, 0
    %v2431 = vsel %vm2351, 1, 0
    %v2432 = vsel %vm2352, 1, 0
    %v2433 = vsel %vm2353, 1, 0
    %v2434 = vsel %vm2354, 1, 0
    %v2435 = vsel %vm2355, 1, 0
    %v2436 = vsel %vm2356, 1, 0
    %v2437 = vsel %vm2357, 1, 0
    %v2438 = vsel %vm2358, 1, 0
    %v2439 = vsel %vm2359, 1, 0
    %v2440 = vsel %vm2360, 1, 0
    %v2441 = vsel %vm2361, 1, 0
    %v2442 = vsel %vm2362, 1, 0
    %v2443 = vsel %vm2363, 1, 0
    %v2444 = vsel %vm2364, 1, 0
    %v2445 = vsel %vm2365, 1, 0
    %v2446 = vsel %vm2366, 1, 0
    %v2447 = vsel %vm2367, 1, 0
    %v2448 = vsel %vm2368, 1, 0
    %v2449 = vsel %vm2369, 1, 0
    %v2450 = vsel %vm2370, 1, 0
    %v2451 = vsel %vm2371, 1, 0
    %v2452 = vsel %vm2372, 1, 0
    %v2453 = vsel %vm2373, 1, 0
    %v2454 = vsel %vm2374, 1, 0
    %v2455 = vsel %vm2375, 1, 0
    %v2456 = vsel %vm2376, 1, 0
    %v2457 = vsel %vm2377, 1, 0
    %v2458 = vsel %vm2378, 1, 0
    %v2459 = vsel %vm2379, 1, 0
    %v2460 = vsel %vm2380, 1, 0
    %v2461 = vsel %vm2381, 1, 0
    %v2462 = vsel %vm2382, 1, 0
    %v2463 = vsel %vm2383, 1, 0
    %v2464 = vsel %vm2384, 1, 0
    %v2465 = vsel %vm2385, 1, 0
    %v2466 = vsel %vm2386, 1, 0
    %v2467 = vsel %vm2387, 1, 0
    %v2468 = vsel %vm2388, 1, 0
    %v2469 = vsel %vm2389, 1, 0
    %v2470 = vsel %vm2390, 1, 0
    %v2471 = vsel %vm2391, 1, 0
    %v2472 = vcvt.s32.f32 %v2392
    %v2473 = vcvt.s32.f32 %v2393
    %v2474 = vcvt.s32.f32 %v2394
    %v2475 = vcvt.s32.f32 %v2395
    %v2476 = vcvt.s32.f32 %v2396
    %v2477 = vcvt.s32.f32 %v2397
    %v2478 = vcvt.s32.f32 %v2398
    %v2479 = vcvt.s32.f32 %v2399
    %v2480 = vcvt.s32.f32 %v2400
    %v2481 = vcvt.s32.f32 %v2401
    %v2482 = vcvt.s32.f32 %v2402
    %v2483 = vcvt.s32.f32 %v2403
    %v2484 = vcvt.s32.f32 %v2404
    %v2485 = vcvt.s32.f32 %v2405
    %v2486 = vcvt.s32.f32 %v2406
    %v2487 = vcvt.s32.f32 %v2407
    %v2488 = vcvt.s32.f32 %v2408
    %v2489 = vcvt.s32.f32 %v2409
    %v2490 = vcvt.s32.f32 %v2410
    %v2491 = vcvt.s32.f32 %v2411
    %v2492 = vcvt.s32.f32 %v2412
    %v2493 = vcvt.s32.f32 %v2413
    %v2494 = vcvt.s32.f32 %v2414
    %v2495 = vcvt.s32.f32 %v2415
    %v2496 = vcvt.s32.f32 %v2416
    %v2497 = vcvt.s32.f32 %v2417
    %v2498 = vcvt.s32.f32 %v2418
    %v2499 = vcvt.s32.f32 %v2419
    %v2500 = vcvt.s32.f32 %v2420
    %v2501 = vcvt.s32.f32 %v2421
    %v2502 = vcvt.s32.f32 %v2422
    %v2503 = vcvt.s32.f32 %v2423
    %v2504 = vcvt.s32.f32 %v2424
    %v2505 = vcvt.s32.f32 %v2425
    %v2506 = vcvt.s32.f32 %v2426
    %v2507 = vcvt.s32.f32 %v2427
    %v2508 = vcvt.s32.f32 %v2428
    %v2509 = vcvt.s32.f32 %v2429
    %v2510 = vcvt.s32.f32 %v2430
    %v2511 = vcvt.s32.f32 %v2431
    %v2512 = vcvt.s32.f32 %v2432
    %v2513 = vcvt.s32.f32 %v2433
    %v2514 = vcvt.s32.f32 %v2434
    %v2515 = vcvt.s32.f32 %v2435
    %v2516 = vcvt.s32.f32 %v2436
    %v2517 = vcvt.s32.f32 %v2437
    %v2518 = vcvt.s32.f32 %v2438
    %v2519 = vcvt.s32.f32 %v2439
    %v2520 = vcvt.s32.f32 %v2440
    %v2521 = vcvt.s32.f32 %v2441
    %v2522 = vcvt.s32.f32 %v2442
    %v2523 = vcvt.s32.f32 %v2443
    %v2524 = vcvt.s32.f32 %v2444
    %v2525 = vcvt.s32.f32 %v2445
    %v2526 = vcvt.s32.f32 %v2446
    %v2527 = vcvt.s32.f32 %v2447
    %v2528 = vcvt.s32.f32 %v2448
    %v2529 = vcvt.s32.f32 %v2449
    %v2530 = vcvt.s32.f32 %v2450
    %v2531 = vcvt.s32.f32 %v2451
    %v2532 = vcvt.s32.f32 %v2452
    %v2533 = vcvt.s32.f32 %v2453
    %v2534 = vcvt.s32.f32 %v2454
    %v2535 = vcvt.s32.f32 %v2455
    %v2536 = vcvt.s32.f32 %v2456
    %v2537 = vcvt.s32.f32 %v2457
    %v2538 = vcvt.s32.f32 %v2458
    %v2539 = vcvt.s32.f32 %v2459
    %v2540 = vcvt.s32.f32 %v2460
    %v2541 = vcvt.s32.f32 %v2461
    %v2542 = vcvt.s32.f32 %v2462
    %v2543 = vcvt.s32.f32 %v2463
    %v2544 = vcvt.s32.f32 %v2464
    %v2545 = vcvt.s32.f32 %v2465
    %v2546 = vcvt.s32.f32 %v2466
    %v2547 = vcvt.s32.f32 %v2467
    %v2548 = vcvt.s32.f32 %v2468
    %v2549 = vcvt.s32.f32 %v2469
    %v2550 = vcvt.s32.f32 %v2470
    %v2551 = vcvt.s32.f32 %v2471
    %v2552 = vadd.f32 %v2184, %v2472
    %v2553 = vadd.f32 %v2185, %v2473
    %v2554 = vadd.f32 %v2186, %v2474
    %v2555 = vadd.f32 %v2187, %v2475
    %v2556 = vadd.f32 %v2188, %v2476
    %v2557 = vadd.f32 %v2189, %v2477
    %v2558 = vadd.f32 %v2190, %v2478
    %v2559 = vadd.f32 %v2191, %v2479
    %v2560 = vadd.f32 %v2192, %v2480
    %v2561 = vadd.f32 %v2193, %v2481
    %v2562 = vadd.f32 %v2194, %v2482
    %v2563 = vadd.f32 %v2195, %v2483
    %v2564 = vadd.f32 %v2196, %v2484
    %v2565 = vadd.f32 %v2197, %v2485
    %v2566 = vadd.f32 %v2198, %v2486
    %v2567 = vadd.f32 %v2199, %v2487
    %v2568 = vadd.f32 %v2200, %v2488
    %v2569 = vadd.f32 %v2201, %v2489
    %v2570 = vadd.f32 %v2202, %v2490
    %v2571 = vadd.f32 %v2203, %v2491
    %v2572 = vadd.f32 %v2204, %v2492
    %v2573 = vadd.f32 %v2205, %v2493
    %v2574 = vadd.f32 %v2206, %v2494
    %v2575 = vadd.f32 %v2207, %v2495
    %v2576 = vadd.f32 %v2208, %v2496
    %v2577 = vadd.f32 %v2209, %v2497
    %v2578 = vadd.f32 %v2210, %v2498
    %v2579 = vadd.f32 %v2211, %v2499
    %v2580 = vadd.f32 %v2212, %v2500
    %v2581 = vadd.f32 %v2213, %v2501
    %v2582 = vadd.f32 %v2214, %v2502
    %v2583 = vadd.f32 %v2215, %v2503
    %v2584 = vadd.f32 %v2216, %v2504
    %v2585 = vadd.f32 %v2217, %v2505
    %v2586 = vadd.f32 %v2218, %v2506
    %v2587 = vadd.f32 %v2219, %v2507
    %v2588 = vadd.f32 %v2220, %v2508
    %v2589 = vadd.f32 %v2221, %v2509
    %v2590 = vadd.f32 %v2222, %v2510
    %v2591 = vadd.f32 %v2223, %v2511
    %v2592 = vadd.f32 %v2224, %v2512
    %v2593 = vadd.f32 %v2225, %v2513
    %v2594 = vadd.f32 %v2226, %v2514
    %v2595 = vadd.f32 %v2227, %v2515
    %v2596 = vadd.f32 %v2228, %v2516
    %v2597 = vadd.f32 %v2229, %v2517
    %v2598 = vadd.f32 %v2230, %v2518
    %v2599 = vadd.f32 %v2231, %v2519
    %v2600 = vadd.f32 %v2232, %v2520
    %v2601 = vadd.f32 %v2233, %v2521
    %v2602 = vadd.f32 %v2234, %v2522
    %v2603 = vadd.f32 %v2235, %v2523
    %v2604 = vadd.f32 %v2236, %v2524
    %v2605 = vadd.f32 %v2237, %v2525
    %v2606 = vadd.f32 %v2238, %v2526
    %v2607 = vadd.f32 %v2239, %v2527
    %v2608 = vadd.f32 %v2240, %v2528
    %v2609 = vadd.f32 %v2241, %v2529
    %v2610 = vadd.f32 %v2242, %v2530
    %v2611 = vadd.f32 %v2243, %v2531
    %v2612 = vadd.f32 %v2244, %v2532
    %v2613 = vadd.f32 %v2245, %v2533
    %v2614 = vadd.f32 %v2246, %v2534
    %v2615 = vadd.f32 %v2247, %v2535
    %v2616 = vadd.f32 %v2248, %v2536
    %v2617 = vadd.f32 %v2249, %v2537
    %v2618 = vadd.f32 %v2250, %v2538
    %v2619 = vadd.f32 %v2251, %v2539
    %v2620 = vadd.f32 %v2252, %v2540
    %v2621 = vadd.f32 %v2253, %v2541
    %v2622 = vadd.f32 %v2254, %v2542
    %v2623 = vadd.f32 %v2255, %v2543
    %v2624 = vadd.f32 %v2256, %v2544
    %v2625 = vadd.f32 %v2257, %v2545
    %v2626 = vadd.f32 %v2258, %v2546
    %v2627 = vadd.f32 %v2259, %v2547
    %v2628 = vadd.f32 %v2260, %v2548
    %v2629 = vadd.f32 %v2261, %v2549
    %v2630 = vadd.f32 %v2262, %v2550
    %v2631 = vadd.f32 %v2263, %v2551
    %2632 = vset.pattern.permute.xlu0 7
    %2633 = vperm.xlu0 %2632, %v34
    %v2634 = vpop.permute.xlu0 %2633
    %2635 = vset.pattern.permute.xlu0 7
    %2636 = vperm.xlu0 %2635, %v35
    %v2637 = vpop.permute.xlu0 %2636
    %2638 = vset.pattern.permute.xlu0 7
    %2639 = vperm.xlu0 %2638, %v36
    %v2640 = vpop.permute.xlu0 %2639
    %2641 = vset.pattern.permute.xlu0 7
    %2642 = vperm.xlu0 %2641, %v37
    %v2643 = vpop.permute.xlu0 %2642
    %2644 = vset.pattern.permute.xlu0 7
    %2645 = vperm.xlu0 %2644, %v38
    %v2646 = vpop.permute.xlu0 %2645
    %2647 = vset.pattern.permute.xlu0 7
    %2648 = vperm.xlu0 %2647, %v39
    %v2649 = vpop.permute.xlu0 %2648
    %2650 = vset.pattern.permute.xlu0 7
    %2651 = vperm.xlu0 %2650, %v40
    %v2652 = vpop.permute.xlu0 %2651
    %2653 = vset.pattern.permute.xlu0 7
    %2654 = vperm.xlu0 %2653, %v41
    %v2655 = vpop.permute.xlu0 %2654
    %2656 = vset.pattern.permute.xlu0 7
    %2657 = vperm.xlu0 %2656, %v42
    %v2658 = vpop.permute.xlu0 %2657
    %2659 = vset.pattern.permute.xlu0 7
    %2660 = vperm.xlu0 %2659, %v43
    %v2661 = vpop.permute.xlu0 %2660
    %2662 = vset.pattern.permute.xlu0 7
    %2663 = vperm.xlu0 %2662, %v44
    %v2664 = vpop.permute.xlu0 %2663
    %2665 = vset.pattern.permute.xlu0 7
    %2666 = vperm.xlu0 %2665, %v45
    %v2667 = vpop.permute.xlu0 %2666
    %2668 = vset.pattern.permute.xlu0 7
    %2669 = vperm.xlu0 %2668, %v46
    %v2670 = vpop.permute.xlu0 %2669
    %2671 = vset.pattern.permute.xlu0 7
    %2672 = vperm.xlu0 %2671, %v47
    %v2673 = vpop.permute.xlu0 %2672
    %2674 = vset.pattern.permute.xlu0 7
    %2675 = vperm.xlu0 %2674, %v48
    %v2676 = vpop.permute.xlu0 %2675
    %2677 = vset.pattern.permute.xlu0 7
    %2678 = vperm.xlu0 %2677, %v49
    %v2679 = vpop.permute.xlu0 %2678
    %vm2680 = vcmp.eq.s32.totalorder %v2634, %v51
    %vm2681 = vcmp.eq.s32.totalorder %v2634, %v52
    %vm2682 = vcmp.eq.s32.totalorder %v2634, %v53
    %vm2683 = vcmp.eq.s32.totalorder %v2634, %v54
    %vm2684 = vcmp.eq.s32.totalorder %v2634, %v55
    %vm2685 = vcmp.eq.s32.totalorder %v2637, %v51
    %vm2686 = vcmp.eq.s32.totalorder %v2637, %v52
    %vm2687 = vcmp.eq.s32.totalorder %v2637, %v53
    %vm2688 = vcmp.eq.s32.totalorder %v2637, %v54
    %vm2689 = vcmp.eq.s32.totalorder %v2637, %v55
    %vm2690 = vcmp.eq.s32.totalorder %v2640, %v51
    %vm2691 = vcmp.eq.s32.totalorder %v2640, %v52
    %vm2692 = vcmp.eq.s32.totalorder %v2640, %v53
    %vm2693 = vcmp.eq.s32.totalorder %v2640, %v54
    %vm2694 = vcmp.eq.s32.totalorder %v2640, %v55
    %vm2695 = vcmp.eq.s32.totalorder %v2643, %v51
    %vm2696 = vcmp.eq.s32.totalorder %v2643, %v52
    %vm2697 = vcmp.eq.s32.totalorder %v2643, %v53
    %vm2698 = vcmp.eq.s32.totalorder %v2643, %v54
    %vm2699 = vcmp.eq.s32.totalorder %v2643, %v55
    %vm2700 = vcmp.eq.s32.totalorder %v2646, %v51
    %vm2701 = vcmp.eq.s32.totalorder %v2646, %v52
    %vm2702 = vcmp.eq.s32.totalorder %v2646, %v53
    %vm2703 = vcmp.eq.s32.totalorder %v2646, %v54
    %vm2704 = vcmp.eq.s32.totalorder %v2646, %v55
    %vm2705 = vcmp.eq.s32.totalorder %v2649, %v51
    %vm2706 = vcmp.eq.s32.totalorder %v2649, %v52
    %vm2707 = vcmp.eq.s32.totalorder %v2649, %v53
    %vm2708 = vcmp.eq.s32.totalorder %v2649, %v54
    %vm2709 = vcmp.eq.s32.totalorder %v2649, %v55
    %vm2710 = vcmp.eq.s32.totalorder %v2652, %v51
    %vm2711 = vcmp.eq.s32.totalorder %v2652, %v52
    %vm2712 = vcmp.eq.s32.totalorder %v2652, %v53
    %vm2713 = vcmp.eq.s32.totalorder %v2652, %v54
    %vm2714 = vcmp.eq.s32.totalorder %v2652, %v55
    %vm2715 = vcmp.eq.s32.totalorder %v2655, %v51
    %vm2716 = vcmp.eq.s32.totalorder %v2655, %v52
    %vm2717 = vcmp.eq.s32.totalorder %v2655, %v53
    %vm2718 = vcmp.eq.s32.totalorder %v2655, %v54
    %vm2719 = vcmp.eq.s32.totalorder %v2655, %v55
    %vm2720 = vcmp.eq.s32.totalorder %v2658, %v51
    %vm2721 = vcmp.eq.s32.totalorder %v2658, %v52
    %vm2722 = vcmp.eq.s32.totalorder %v2658, %v53
    %vm2723 = vcmp.eq.s32.totalorder %v2658, %v54
    %vm2724 = vcmp.eq.s32.totalorder %v2658, %v55
    %vm2725 = vcmp.eq.s32.totalorder %v2661, %v51
    %vm2726 = vcmp.eq.s32.totalorder %v2661, %v52
    %vm2727 = vcmp.eq.s32.totalorder %v2661, %v53
    %vm2728 = vcmp.eq.s32.totalorder %v2661, %v54
    %vm2729 = vcmp.eq.s32.totalorder %v2661, %v55
    %vm2730 = vcmp.eq.s32.totalorder %v2664, %v51
    %vm2731 = vcmp.eq.s32.totalorder %v2664, %v52
    %vm2732 = vcmp.eq.s32.totalorder %v2664, %v53
    %vm2733 = vcmp.eq.s32.totalorder %v2664, %v54
    %vm2734 = vcmp.eq.s32.totalorder %v2664, %v55
    %vm2735 = vcmp.eq.s32.totalorder %v2667, %v51
    %vm2736 = vcmp.eq.s32.totalorder %v2667, %v52
    %vm2737 = vcmp.eq.s32.totalorder %v2667, %v53
    %vm2738 = vcmp.eq.s32.totalorder %v2667, %v54
    %vm2739 = vcmp.eq.s32.totalorder %v2667, %v55
    %vm2740 = vcmp.eq.s32.totalorder %v2670, %v51
    %vm2741 = vcmp.eq.s32.totalorder %v2670, %v52
    %vm2742 = vcmp.eq.s32.totalorder %v2670, %v53
    %vm2743 = vcmp.eq.s32.totalorder %v2670, %v54
    %vm2744 = vcmp.eq.s32.totalorder %v2670, %v55
    %vm2745 = vcmp.eq.s32.totalorder %v2673, %v51
    %vm2746 = vcmp.eq.s32.totalorder %v2673, %v52
    %vm2747 = vcmp.eq.s32.totalorder %v2673, %v53
    %vm2748 = vcmp.eq.s32.totalorder %v2673, %v54
    %vm2749 = vcmp.eq.s32.totalorder %v2673, %v55
    %vm2750 = vcmp.eq.s32.totalorder %v2676, %v51
    %vm2751 = vcmp.eq.s32.totalorder %v2676, %v52
    %vm2752 = vcmp.eq.s32.totalorder %v2676, %v53
    %vm2753 = vcmp.eq.s32.totalorder %v2676, %v54
    %vm2754 = vcmp.eq.s32.totalorder %v2676, %v55
    %vm2755 = vcmp.eq.s32.totalorder %v2679, %v51
    %vm2756 = vcmp.eq.s32.totalorder %v2679, %v52
    %vm2757 = vcmp.eq.s32.totalorder %v2679, %v53
    %vm2758 = vcmp.eq.s32.totalorder %v2679, %v54
    %vm2759 = vcmp.eq.s32.totalorder %v2679, %v55
    %v2760 = vsel %vm2680, 1, 0
    %v2761 = vsel %vm2681, 1, 0
    %v2762 = vsel %vm2682, 1, 0
    %v2763 = vsel %vm2683, 1, 0
    %v2764 = vsel %vm2684, 1, 0
    %v2765 = vsel %vm2685, 1, 0
    %v2766 = vsel %vm2686, 1, 0
    %v2767 = vsel %vm2687, 1, 0
    %v2768 = vsel %vm2688, 1, 0
    %v2769 = vsel %vm2689, 1, 0
    %v2770 = vsel %vm2690, 1, 0
    %v2771 = vsel %vm2691, 1, 0
    %v2772 = vsel %vm2692, 1, 0
    %v2773 = vsel %vm2693, 1, 0
    %v2774 = vsel %vm2694, 1, 0
    %v2775 = vsel %vm2695, 1, 0
    %v2776 = vsel %vm2696, 1, 0
    %v2777 = vsel %vm2697, 1, 0
    %v2778 = vsel %vm2698, 1, 0
    %v2779 = vsel %vm2699, 1, 0
    %v2780 = vsel %vm2700, 1, 0
    %v2781 = vsel %vm2701, 1, 0
    %v2782 = vsel %vm2702, 1, 0
    %v2783 = vsel %vm2703, 1, 0
    %v2784 = vsel %vm2704, 1, 0
    %v2785 = vsel %vm2705, 1, 0
    %v2786 = vsel %vm2706, 1, 0
    %v2787 = vsel %vm2707, 1, 0
    %v2788 = vsel %vm2708, 1, 0
    %v2789 = vsel %vm2709, 1, 0
    %v2790 = vsel %vm2710, 1, 0
    %v2791 = vsel %vm2711, 1, 0
    %v2792 = vsel %vm2712, 1, 0
    %v2793 = vsel %vm2713, 1, 0
    %v2794 = vsel %vm2714, 1, 0
    %v2795 = vsel %vm2715, 1, 0
    %v2796 = vsel %vm2716, 1, 0
    %v2797 = vsel %vm2717, 1, 0
    %v2798 = vsel %vm2718, 1, 0
    %v2799 = vsel %vm2719, 1, 0
    %v2800 = vsel %vm2720, 1, 0
    %v2801 = vsel %vm2721, 1, 0
    %v2802 = vsel %vm2722, 1, 0
    %v2803 = vsel %vm2723, 1, 0
    %v2804 = vsel %vm2724, 1, 0
    %v2805 = vsel %vm2725, 1, 0
    %v2806 = vsel %vm2726, 1, 0
    %v2807 = vsel %vm2727, 1, 0
    %v2808 = vsel %vm2728, 1, 0
    %v2809 = vsel %vm2729, 1, 0
    %v2810 = vsel %vm2730, 1, 0
    %v2811 = vsel %vm2731, 1, 0
    %v2812 = vsel %vm2732, 1, 0
    %v2813 = vsel %vm2733, 1, 0
    %v2814 = vsel %vm2734, 1, 0
    %v2815 = vsel %vm2735, 1, 0
    %v2816 = vsel %vm2736, 1, 0
    %v2817 = vsel %vm2737, 1, 0
    %v2818 = vsel %vm2738, 1, 0
    %v2819 = vsel %vm2739, 1, 0
    %v2820 = vsel %vm2740, 1, 0
    %v2821 = vsel %vm2741, 1, 0
    %v2822 = vsel %vm2742, 1, 0
    %v2823 = vsel %vm2743, 1, 0
    %v2824 = vsel %vm2744, 1, 0
    %v2825 = vsel %vm2745, 1, 0
    %v2826 = vsel %vm2746, 1, 0
    %v2827 = vsel %vm2747, 1, 0
    %v2828 = vsel %vm2748, 1, 0
    %v2829 = vsel %vm2749, 1, 0
    %v2830 = vsel %vm2750, 1, 0
    %v2831 = vsel %vm2751, 1, 0
    %v2832 = vsel %vm2752, 1, 0
    %v2833 = vsel %vm2753, 1, 0
    %v2834 = vsel %vm2754, 1, 0
    %v2835 = vsel %vm2755, 1, 0
    %v2836 = vsel %vm2756, 1, 0
    %v2837 = vsel %vm2757, 1, 0
    %v2838 = vsel %vm2758, 1, 0
    %v2839 = vsel %vm2759, 1, 0
    %v2840 = vcvt.s32.f32 %v2760
    %v2841 = vcvt.s32.f32 %v2761
    %v2842 = vcvt.s32.f32 %v2762
    %v2843 = vcvt.s32.f32 %v2763
    %v2844 = vcvt.s32.f32 %v2764
    %v2845 = vcvt.s32.f32 %v2765
    %v2846 = vcvt.s32.f32 %v2766
    %v2847 = vcvt.s32.f32 %v2767
    %v2848 = vcvt.s32.f32 %v2768
    %v2849 = vcvt.s32.f32 %v2769
    %v2850 = vcvt.s32.f32 %v2770
    %v2851 = vcvt.s32.f32 %v2771
    %v2852 = vcvt.s32.f32 %v2772
    %v2853 = vcvt.s32.f32 %v2773
    %v2854 = vcvt.s32.f32 %v2774
    %v2855 = vcvt.s32.f32 %v2775
    %v2856 = vcvt.s32.f32 %v2776
    %v2857 = vcvt.s32.f32 %v2777
    %v2858 = vcvt.s32.f32 %v2778
    %v2859 = vcvt.s32.f32 %v2779
    %v2860 = vcvt.s32.f32 %v2780
    %v2861 = vcvt.s32.f32 %v2781
    %v2862 = vcvt.s32.f32 %v2782
    %v2863 = vcvt.s32.f32 %v2783
    %v2864 = vcvt.s32.f32 %v2784
    %v2865 = vcvt.s32.f32 %v2785
    %v2866 = vcvt.s32.f32 %v2786
    %v2867 = vcvt.s32.f32 %v2787
    %v2868 = vcvt.s32.f32 %v2788
    %v2869 = vcvt.s32.f32 %v2789
    %v2870 = vcvt.s32.f32 %v2790
    %v2871 = vcvt.s32.f32 %v2791
    %v2872 = vcvt.s32.f32 %v2792
    %v2873 = vcvt.s32.f32 %v2793
    %v2874 = vcvt.s32.f32 %v2794
    %v2875 = vcvt.s32.f32 %v2795
    %v2876 = vcvt.s32.f32 %v2796
    %v2877 = vcvt.s32.f32 %v2797
    %v2878 = vcvt.s32.f32 %v2798
    %v2879 = vcvt.s32.f32 %v2799
    %v2880 = vcvt.s32.f32 %v2800
    %v2881 = vcvt.s32.f32 %v2801
    %v2882 = vcvt.s32.f32 %v2802
    %v2883 = vcvt.s32.f32 %v2803
    %v2884 = vcvt.s32.f32 %v2804
    %v2885 = vcvt.s32.f32 %v2805
    %v2886 = vcvt.s32.f32 %v2806
    %v2887 = vcvt.s32.f32 %v2807
    %v2888 = vcvt.s32.f32 %v2808
    %v2889 = vcvt.s32.f32 %v2809
    %v2890 = vcvt.s32.f32 %v2810
    %v2891 = vcvt.s32.f32 %v2811
    %v2892 = vcvt.s32.f32 %v2812
    %v2893 = vcvt.s32.f32 %v2813
    %v2894 = vcvt.s32.f32 %v2814
    %v2895 = vcvt.s32.f32 %v2815
    %v2896 = vcvt.s32.f32 %v2816
    %v2897 = vcvt.s32.f32 %v2817
    %v2898 = vcvt.s32.f32 %v2818
    %v2899 = vcvt.s32.f32 %v2819
    %v2900 = vcvt.s32.f32 %v2820
    %v2901 = vcvt.s32.f32 %v2821
    %v2902 = vcvt.s32.f32 %v2822
    %v2903 = vcvt.s32.f32 %v2823
    %v2904 = vcvt.s32.f32 %v2824
    %v2905 = vcvt.s32.f32 %v2825
    %v2906 = vcvt.s32.f32 %v2826
    %v2907 = vcvt.s32.f32 %v2827
    %v2908 = vcvt.s32.f32 %v2828
    %v2909 = vcvt.s32.f32 %v2829
    %v2910 = vcvt.s32.f32 %v2830
    %v2911 = vcvt.s32.f32 %v2831
    %v2912 = vcvt.s32.f32 %v2832
    %v2913 = vcvt.s32.f32 %v2833
    %v2914 = vcvt.s32.f32 %v2834
    %v2915 = vcvt.s32.f32 %v2835
    %v2916 = vcvt.s32.f32 %v2836
    %v2917 = vcvt.s32.f32 %v2837
    %v2918 = vcvt.s32.f32 %v2838
    %v2919 = vcvt.s32.f32 %v2839
    %v2920 = vadd.f32 %v2552, %v2840
    %v2921 = vadd.f32 %v2553, %v2841
    %v2922 = vadd.f32 %v2554, %v2842
    %v2923 = vadd.f32 %v2555, %v2843
    %v2924 = vadd.f32 %v2556, %v2844
    %v2925 = vadd.f32 %v2557, %v2845
    %v2926 = vadd.f32 %v2558, %v2846
    %v2927 = vadd.f32 %v2559, %v2847
    %v2928 = vadd.f32 %v2560, %v2848
    %v2929 = vadd.f32 %v2561, %v2849
    %v2930 = vadd.f32 %v2562, %v2850
    %v2931 = vadd.f32 %v2563, %v2851
    %v2932 = vadd.f32 %v2564, %v2852
    %v2933 = vadd.f32 %v2565, %v2853
    %v2934 = vadd.f32 %v2566, %v2854
    %v2935 = vadd.f32 %v2567, %v2855
    %v2936 = vadd.f32 %v2568, %v2856
    %v2937 = vadd.f32 %v2569, %v2857
    %v2938 = vadd.f32 %v2570, %v2858
    %v2939 = vadd.f32 %v2571, %v2859
    %v2940 = vadd.f32 %v2572, %v2860
    %v2941 = vadd.f32 %v2573, %v2861
    %v2942 = vadd.f32 %v2574, %v2862
    %v2943 = vadd.f32 %v2575, %v2863
    %v2944 = vadd.f32 %v2576, %v2864
    %v2945 = vadd.f32 %v2577, %v2865
    %v2946 = vadd.f32 %v2578, %v2866
    %v2947 = vadd.f32 %v2579, %v2867
    %v2948 = vadd.f32 %v2580, %v2868
    %v2949 = vadd.f32 %v2581, %v2869
    %v2950 = vadd.f32 %v2582, %v2870
    %v2951 = vadd.f32 %v2583, %v2871
    %v2952 = vadd.f32 %v2584, %v2872
    %v2953 = vadd.f32 %v2585, %v2873
    %v2954 = vadd.f32 %v2586, %v2874
    %v2955 = vadd.f32 %v2587, %v2875
    %v2956 = vadd.f32 %v2588, %v2876
    %v2957 = vadd.f32 %v2589, %v2877
    %v2958 = vadd.f32 %v2590, %v2878
    %v2959 = vadd.f32 %v2591, %v2879
    %v2960 = vadd.f32 %v2592, %v2880
    %v2961 = vadd.f32 %v2593, %v2881
    %v2962 = vadd.f32 %v2594, %v2882
    %v2963 = vadd.f32 %v2595, %v2883
    %v2964 = vadd.f32 %v2596, %v2884
    %v2965 = vadd.f32 %v2597, %v2885
    %v2966 = vadd.f32 %v2598, %v2886
    %v2967 = vadd.f32 %v2599, %v2887
    %v2968 = vadd.f32 %v2600, %v2888
    %v2969 = vadd.f32 %v2601, %v2889
    %v2970 = vadd.f32 %v2602, %v2890
    %v2971 = vadd.f32 %v2603, %v2891
    %v2972 = vadd.f32 %v2604, %v2892
    %v2973 = vadd.f32 %v2605, %v2893
    %v2974 = vadd.f32 %v2606, %v2894
    %v2975 = vadd.f32 %v2607, %v2895
    %v2976 = vadd.f32 %v2608, %v2896
    %v2977 = vadd.f32 %v2609, %v2897
    %v2978 = vadd.f32 %v2610, %v2898
    %v2979 = vadd.f32 %v2611, %v2899
    %v2980 = vadd.f32 %v2612, %v2900
    %v2981 = vadd.f32 %v2613, %v2901
    %v2982 = vadd.f32 %v2614, %v2902
    %v2983 = vadd.f32 %v2615, %v2903
    %v2984 = vadd.f32 %v2616, %v2904
    %v2985 = vadd.f32 %v2617, %v2905
    %v2986 = vadd.f32 %v2618, %v2906
    %v2987 = vadd.f32 %v2619, %v2907
    %v2988 = vadd.f32 %v2620, %v2908
    %v2989 = vadd.f32 %v2621, %v2909
    %v2990 = vadd.f32 %v2622, %v2910
    %v2991 = vadd.f32 %v2623, %v2911
    %v2992 = vadd.f32 %v2624, %v2912
    %v2993 = vadd.f32 %v2625, %v2913
    %v2994 = vadd.f32 %v2626, %v2914
    %v2995 = vadd.f32 %v2627, %v2915
    %v2996 = vadd.f32 %v2628, %v2916
    %v2997 = vadd.f32 %v2629, %v2917
    %v2998 = vadd.f32 %v2630, %v2918
    %v2999 = vadd.f32 %v2631, %v2919
    %v3000 = vld [vmem:[#allocation2] sm:$0xff]
    %v3001 = vld [vmem:[#allocation2 + $0x8] sm:$0xff]
    %v3002 = vld [vmem:[#allocation2 + $0x10] sm:$0xff]
    %v3003 = vld [vmem:[#allocation2 + $0x18] sm:$0xff]
    %v3004 = vld [vmem:[#allocation2 + $0x20] sm:$0xff]
    %v3005 = vld [vmem:[#allocation2 + $0x28] sm:$0xff]
    %v3006 = vld [vmem:[#allocation2 + $0x30] sm:$0xff]
    %v3007 = vld [vmem:[#allocation2 + $0x38] sm:$0xff]
    %v3008 = vld [vmem:[#allocation2 + $0x40] sm:$0xff]
    %v3009 = vld [vmem:[#allocation2 + $0x48] sm:$0xff]
    %v3010 = vld [vmem:[#allocation2 + $0x50] sm:$0xff]
    %v3011 = vld [vmem:[#allocation2 + $0x58] sm:$0xff]
    %v3012 = vld [vmem:[#allocation2 + $0x60] sm:$0xff]
    %v3013 = vld [vmem:[#allocation2 + $0x68] sm:$0xff]
    %v3014 = vld [vmem:[#allocation2 + $0x70] sm:$0xff]
    %v3015 = vld [vmem:[#allocation2 + $0x78] sm:$0xff]
    %v3016 = vld [vmem:[#allocation2 + $0x80] sm:$0xff]
    %v3017 = vld [vmem:[#allocation2 + $0x88] sm:$0xff]
    %v3018 = vld [vmem:[#allocation2 + $0x90] sm:$0xff]
    %v3019 = vld [vmem:[#allocation2 + $0x98] sm:$0xff]
    %v3020 = vld [vmem:[#allocation2 + $0xa0] sm:$0xff]
    %v3021 = vld [vmem:[#allocation2 + $0xa8] sm:$0xff]
    %v3022 = vld [vmem:[#allocation2 + $0xb0] sm:$0xff]
    %v3023 = vld [vmem:[#allocation2 + $0xb8] sm:$0xff]
    %v3024 = vld [vmem:[#allocation2 + $0xc0] sm:$0xff]
    %v3025 = vld [vmem:[#allocation2 + $0xc8] sm:$0xff]
    %v3026 = vld [vmem:[#allocation2 + $0xd0] sm:$0xff]
    %v3027 = vld [vmem:[#allocation2 + $0xd8] sm:$0xff]
    %v3028 = vld [vmem:[#allocation2 + $0xe0] sm:$0xff]
    %v3029 = vld [vmem:[#allocation2 + $0xe8] sm:$0xff]
    %v3030 = vld [vmem:[#allocation2 + $0xf0] sm:$0xff]
    %v3031 = vld [vmem:[#allocation2 + $0xf8] sm:$0xff]
    %v3032 = vld [vmem:[#allocation2 + $0x100] sm:$0xff]
    %v3033 = vld [vmem:[#allocation2 + $0x108] sm:$0xff]
    %v3034 = vld [vmem:[#allocation2 + $0x110] sm:$0xff]
    %v3035 = vld [vmem:[#allocation2 + $0x118] sm:$0xff]
    %v3036 = vld [vmem:[#allocation2 + $0x120] sm:$0xff]
    %v3037 = vld [vmem:[#allocation2 + $0x128] sm:$0xff]
    %v3038 = vld [vmem:[#allocation2 + $0x130] sm:$0xff]
    %v3039 = vld [vmem:[#allocation2 + $0x138] sm:$0xff]
    %v3040 = vld [vmem:[#allocation2 + $0x140] sm:$0xff]
    %v3041 = vld [vmem:[#allocation2 + $0x148] sm:$0xff]
    %v3042 = vld [vmem:[#allocation2 + $0x150] sm:$0xff]
    %v3043 = vld [vmem:[#allocation2 + $0x158] sm:$0xff]
    %v3044 = vld [vmem:[#allocation2 + $0x160] sm:$0xff]
    %v3045 = vld [vmem:[#allocation2 + $0x168] sm:$0xff]
    %v3046 = vld [vmem:[#allocation2 + $0x170] sm:$0xff]
    %v3047 = vld [vmem:[#allocation2 + $0x178] sm:$0xff]
    %v3048 = vld [vmem:[#allocation2 + $0x180] sm:$0xff]
    %v3049 = vld [vmem:[#allocation2 + $0x188] sm:$0xff]
    %v3050 = vld [vmem:[#allocation2 + $0x190] sm:$0xff]
    %v3051 = vld [vmem:[#allocation2 + $0x198] sm:$0xff]
    %v3052 = vld [vmem:[#allocation2 + $0x1a0] sm:$0xff]
    %v3053 = vld [vmem:[#allocation2 + $0x1a8] sm:$0xff]
    %v3054 = vld [vmem:[#allocation2 + $0x1b0] sm:$0xff]
    %v3055 = vld [vmem:[#allocation2 + $0x1b8] sm:$0xff]
    %v3056 = vld [vmem:[#allocation2 + $0x1c0] sm:$0xff]
    %v3057 = vld [vmem:[#allocation2 + $0x1c8] sm:$0xff]
    %v3058 = vld [vmem:[#allocation2 + $0x1d0] sm:$0xff]
    %v3059 = vld [vmem:[#allocation2 + $0x1d8] sm:$0xff]
    %v3060 = vld [vmem:[#allocation2 + $0x1e0] sm:$0xff]
    %v3061 = vld [vmem:[#allocation2 + $0x1e8] sm:$0xff]
    %v3062 = vld [vmem:[#allocation2 + $0x1f0] sm:$0xff]
    %v3063 = vld [vmem:[#allocation2 + $0x1f8] sm:$0xff]
    %v3064 = vld [vmem:[#allocation2 + $0x200] sm:$0xff]
    %v3065 = vld [vmem:[#allocation2 + $0x208] sm:$0xff]
    %v3066 = vld [vmem:[#allocation2 + $0x210] sm:$0xff]
    %v3067 = vld [vmem:[#allocation2 + $0x218] sm:$0xff]
    %v3068 = vld [vmem:[#allocation2 + $0x220] sm:$0xff]
    %v3069 = vld [vmem:[#allocation2 + $0x228] sm:$0xff]
    %v3070 = vld [vmem:[#allocation2 + $0x230] sm:$0xff]
    %v3071 = vld [vmem:[#allocation2 + $0x238] sm:$0xff]
    %v3072 = vld [vmem:[#allocation2 + $0x240] sm:$0xff]
    %v3073 = vld [vmem:[#allocation2 + $0x248] sm:$0xff]
    %v3074 = vld [vmem:[#allocation2 + $0x250] sm:$0xff]
    %v3075 = vld [vmem:[#allocation2 + $0x258] sm:$0xff]
    %v3076 = vld [vmem:[#allocation2 + $0x260] sm:$0xff]
    %v3077 = vld [vmem:[#allocation2 + $0x268] sm:$0xff]
    %v3078 = vld [vmem:[#allocation2 + $0x270] sm:$0xff]
    %v3079 = vld [vmem:[#allocation2 + $0x278] sm:$0xff]
    %3080 = vmatpush.msra.mxu0 %v3015
    %3081 = vmatpush.msra.mxu0 %v3014
    %3082 = vmatpush.msra.mxu0 %v3013
    %3083 = vmatpush.msra.mxu0 %v3012
    %3084 = vmatpush.msra.mxu0 %v3011
    %3085 = vmatpush.msra.mxu0 %v3010
    %3086 = vmatpush.msra.mxu0 %v3009
    %3087 = vmatpush.msra.mxu0 %v3008
    %3088 = vmatpush.msra.mxu0 %v3007
    %3089 = vmatpush.msra.mxu0 %v3006
    %3090 = vmatpush.msra.mxu0 %v3005
    %3091 = vmatpush.msra.mxu0 %v3004
    %3092 = vmatpush.msra.mxu0 %v3003
    %3093 = vmatpush.msra.mxu0 %v3002
    %3094 = vmatpush.msra.mxu0 %v3001
    %3095 = vmatpush.msra.mxu0 %v3000
    %3096 = vmatmul.f32.gmra.mxu0 %v2920
    %v3097 = vpop.f32.mrf.mxu0
    %v3098 = vadd.f32 0.0, %v3097
    %3099 = vmatmul.f32.gmra.mxu0 %v2925
    %v3100 = vpop.f32.mrf.mxu0
    %v3101 = vadd.f32 0.0, %v3100
    %3102 = vmatmul.f32.gmra.mxu0 %v2930
    %v3103 = vpop.f32.mrf.mxu0
    %v3104 = vadd.f32 0.0, %v3103
    %3105 = vmatmul.f32.gmra.mxu0 %v2935
    %v3106 = vpop.f32.mrf.mxu0
    %v3107 = vadd.f32 0.0, %v3106
    %3108 = vmatmul.f32.gmra.mxu0 %v2940
    %v3109 = vpop.f32.mrf.mxu0
    %v3110 = vadd.f32 0.0, %v3109
    %3111 = vmatmul.f32.gmra.mxu0 %v2945
    %v3112 = vpop.f32.mrf.mxu0
    %v3113 = vadd.f32 0.0, %v3112
    %3114 = vmatmul.f32.gmra.mxu0 %v2950
    %v3115 = vpop.f32.mrf.mxu0
    %v3116 = vadd.f32 0.0, %v3115
    %3117 = vmatmul.f32.gmra.mxu0 %v2955
    %v3118 = vpop.f32.mrf.mxu0
    %v3119 = vadd.f32 0.0, %v3118
    %3120 = vmatmul.f32.gmra.mxu0 %v2960
    %v3121 = vpop.f32.mrf.mxu0
    %v3122 = vadd.f32 0.0, %v3121
    %3123 = vmatmul.f32.gmra.mxu0 %v2965
    %v3124 = vpop.f32.mrf.mxu0
    %v3125 = vadd.f32 0.0, %v3124
    %3126 = vmatmul.f32.gmra.mxu0 %v2970
    %v3127 = vpop.f32.mrf.mxu0
    %v3128 = vadd.f32 0.0, %v3127
    %3129 = vmatmul.f32.gmra.mxu0 %v2975
    %v3130 = vpop.f32.mrf.mxu0
    %v3131 = vadd.f32 0.0, %v3130
    %3132 = vmatmul.f32.gmra.mxu0 %v2980
    %v3133 = vpop.f32.mrf.mxu0
    %v3134 = vadd.f32 0.0, %v3133
    %3135 = vmatmul.f32.gmra.mxu0 %v2985
    %v3136 = vpop.f32.mrf.mxu0
    %v3137 = vadd.f32 0.0, %v3136
    %3138 = vmatmul.f32.gmra.mxu0 %v2990
    %v3139 = vpop.f32.mrf.mxu0
    %v3140 = vadd.f32 0.0, %v3139
    %3141 = vmatmul.f32.gmra.mxu0 %v2995
    %v3142 = vpop.f32.mrf.mxu0
    %v3143 = vadd.f32 0.0, %v3142
    %3144 = vdwg.mxu0
    %3145 = vmatpush.msra.mxu0 %v3031
    %3146 = vmatpush.msra.mxu0 %v3030
    %3147 = vmatpush.msra.mxu0 %v3029
    %3148 = vmatpush.msra.mxu0 %v3028
    %3149 = vmatpush.msra.mxu0 %v3027
    %3150 = vmatpush.msra.mxu0 %v3026
    %3151 = vmatpush.msra.mxu0 %v3025
    %3152 = vmatpush.msra.mxu0 %v3024
    %3153 = vmatpush.msra.mxu0 %v3023
    %3154 = vmatpush.msra.mxu0 %v3022
    %3155 = vmatpush.msra.mxu0 %v3021
    %3156 = vmatpush.msra.mxu0 %v3020
    %3157 = vmatpush.msra.mxu0 %v3019
    %3158 = vmatpush.msra.mxu0 %v3018
    %3159 = vmatpush.msra.mxu0 %v3017
    %3160 = vmatpush.msra.mxu0 %v3016
    %3161 = vmatmul.f32.gmra.mxu0 %v2921
    %v3162 = vpop.f32.mrf.mxu0
    %v3163 = vadd.f32 %v3098, %v3162
    %3164 = vmatmul.f32.gmra.mxu0 %v2926
    %v3165 = vpop.f32.mrf.mxu0
    %v3166 = vadd.f32 %v3101, %v3165
    %3167 = vmatmul.f32.gmra.mxu0 %v2931
    %v3168 = vpop.f32.mrf.mxu0
    %v3169 = vadd.f32 %v3104, %v3168
    %3170 = vmatmul.f32.gmra.mxu0 %v2936
    %v3171 = vpop.f32.mrf.mxu0
    %v3172 = vadd.f32 %v3107, %v3171
    %3173 = vmatmul.f32.gmra.mxu0 %v2941
    %v3174 = vpop.f32.mrf.mxu0
    %v3175 = vadd.f32 %v3110, %v3174
    %3176 = vmatmul.f32.gmra.mxu0 %v2946
    %v3177 = vpop.f32.mrf.mxu0
    %v3178 = vadd.f32 %v3113, %v3177
    %3179 = vmatmul.f32.gmra.mxu0 %v2951
    %v3180 = vpop.f32.mrf.mxu0
    %v3181 = vadd.f32 %v3116, %v3180
    %3182 = vmatmul.f32.gmra.mxu0 %v2956
    %v3183 = vpop.f32.mrf.mxu0
    %v3184 = vadd.f32 %v3119, %v3183
    %3185 = vmatmul.f32.gmra.mxu0 %v2961
    %v3186 = vpop.f32.mrf.mxu0
    %v3187 = vadd.f32 %v3122, %v3186
    %3188 = vmatmul.f32.gmra.mxu0 %v2966
    %v3189 = vpop.f32.mrf.mxu0
    %v3190 = vadd.f32 %v3125, %v3189
    %3191 = vmatmul.f32.gmra.mxu0 %v2971
    %v3192 = vpop.f32.mrf.mxu0
    %v3193 = vadd.f32 %v3128, %v3192
    %3194 = vmatmul.f32.gmra.mxu0 %v2976
    %v3195 = vpop.f32.mrf.mxu0
    %v3196 = vadd.f32 %v3131, %v3195
    %3197 = vmatmul.f32.gmra.mxu0 %v2981
    %v3198 = vpop.f32.mrf.mxu0
    %v3199 = vadd.f32 %v3134, %v3198
    %3200 = vmatmul.f32.gmra.mxu0 %v2986
    %v3201 = vpop.f32.mrf.mxu0
    %v3202 = vadd.f32 %v3137, %v3201
    %3203 = vmatmul.f32.gmra.mxu0 %v2991
    %v3204 = vpop.f32.mrf.mxu0
    %v3205 = vadd.f32 %v3140, %v3204
    %3206 = vmatmul.f32.gmra.mxu0 %v2996
    %v3207 = vpop.f32.mrf.mxu0
    %v3208 = vadd.f32 %v3143, %v3207
    %3209 = vdwg.mxu0
    %3210 = vmatpush.msra.mxu0 %v3047
    %3211 = vmatpush.msra.mxu0 %v3046
    %3212 = vmatpush.msra.mxu0 %v3045
    %3213 = vmatpush.msra.mxu0 %v3044
    %3214 = vmatpush.msra.mxu0 %v3043
    %3215 = vmatpush.msra.mxu0 %v3042
    %3216 = vmatpush.msra.mxu0 %v3041
    %3217 = vmatpush.msra.mxu0 %v3040
    %3218 = vmatpush.msra.mxu0 %v3039
    %3219 = vmatpush.msra.mxu0 %v3038
    %3220 = vmatpush.msra.mxu0 %v3037
    %3221 = vmatpush.msra.mxu0 %v3036
    %3222 = vmatpush.msra.mxu0 %v3035
    %3223 = vmatpush.msra.mxu0 %v3034
    %3224 = vmatpush.msra.mxu0 %v3033
    %3225 = vmatpush.msra.mxu0 %v3032
    %3226 = vmatmul.f32.gmra.mxu0 %v2922
    %v3227 = vpop.f32.mrf.mxu0
    %v3228 = vadd.f32 %v3163, %v3227
    %3229 = vmatmul.f32.gmra.mxu0 %v2927
    %v3230 = vpop.f32.mrf.mxu0
    %v3231 = vadd.f32 %v3166, %v3230
    %3232 = vmatmul.f32.gmra.mxu0 %v2932
    %v3233 = vpop.f32.mrf.mxu0
    %v3234 = vadd.f32 %v3169, %v3233
    %3235 = vmatmul.f32.gmra.mxu0 %v2937
    %v3236 = vpop.f32.mrf.mxu0
    %v3237 = vadd.f32 %v3172, %v3236
    %3238 = vmatmul.f32.gmra.mxu0 %v2942
    %v3239 = vpop.f32.mrf.mxu0
    %v3240 = vadd.f32 %v3175, %v3239
    %3241 = vmatmul.f32.gmra.mxu0 %v2947
    %v3242 = vpop.f32.mrf.mxu0
    %v3243 = vadd.f32 %v3178, %v3242
    %3244 = vmatmul.f32.gmra.mxu0 %v2952
    %v3245 = vpop.f32.mrf.mxu0
    %v3246 = vadd.f32 %v3181, %v3245
    %3247 = vmatmul.f32.gmra.mxu0 %v2957
    %v3248 = vpop.f32.mrf.mxu0
    %v3249 = vadd.f32 %v3184, %v3248
    %3250 = vmatmul.f32.gmra.mxu0 %v2962
    %v3251 = vpop.f32.mrf.mxu0
    %v3252 = vadd.f32 %v3187, %v3251
    %3253 = vmatmul.f32.gmra.mxu0 %v2967
    %v3254 = vpop.f32.mrf.mxu0
    %v3255 = vadd.f32 %v3190, %v3254
    %3256 = vmatmul.f32.gmra.mxu0 %v2972
    %v3257 = vpop.f32.mrf.mxu0
    %v3258 = vadd.f32 %v3193, %v3257
    %3259 = vmatmul.f32.gmra.mxu0 %v2977
    %v3260 = vpop.f32.mrf.mxu0
    %v3261 = vadd.f32 %v3196, %v3260
    %3262 = vmatmul.f32.gmra.mxu0 %v2982
    %v3263 = vpop.f32.mrf.mxu0
    %v3264 = vadd.f32 %v3199, %v3263
    %3265 = vmatmul.f32.gmra.mxu0 %v2987
    %v3266 = vpop.f32.mrf.mxu0
    %v3267 = vadd.f32 %v3202, %v3266
    %3268 = vmatmul.f32.gmra.mxu0 %v2992
    %v3269 = vpop.f32.mrf.mxu0
    %v3270 = vadd.f32 %v3205, %v3269
    %3271 = vmatmul.f32.gmra.mxu0 %v2997
    %v3272 = vpop.f32.mrf.mxu0
    %v3273 = vadd.f32 %v3208, %v3272
    %3274 = vdwg.mxu0
    %3275 = vmatpush.msra.mxu0 %v3063
    %3276 = vmatpush.msra.mxu0 %v3062
    %3277 = vmatpush.msra.mxu0 %v3061
    %3278 = vmatpush.msra.mxu0 %v3060
    %3279 = vmatpush.msra.mxu0 %v3059
    %3280 = vmatpush.msra.mxu0 %v3058
    %3281 = vmatpush.msra.mxu0 %v3057
    %3282 = vmatpush.msra.mxu0 %v3056
    %3283 = vmatpush.msra.mxu0 %v3055
    %3284 = vmatpush.msra.mxu0 %v3054
    %3285 = vmatpush.msra.mxu0 %v3053
    %3286 = vmatpush.msra.mxu0 %v3052
    %3287 = vmatpush.msra.mxu0 %v3051
    %3288 = vmatpush.msra.mxu0 %v3050
    %3289 = vmatpush.msra.mxu0 %v3049
    %3290 = vmatpush.msra.mxu0 %v3048
    %3291 = vmatmul.f32.gmra.mxu0 %v2923
    %v3292 = vpop.f32.mrf.mxu0
    %v3293 = vadd.f32 %v3228, %v3292
    %3294 = vmatmul.f32.gmra.mxu0 %v2928
    %v3295 = vpop.f32.mrf.mxu0
    %v3296 = vadd.f32 %v3231, %v3295
    %3297 = vmatmul.f32.gmra.mxu0 %v2933
    %v3298 = vpop.f32.mrf.mxu0
    %v3299 = vadd.f32 %v3234, %v3298
    %3300 = vmatmul.f32.gmra.mxu0 %v2938
    %v3301 = vpop.f32.mrf.mxu0
    %v3302 = vadd.f32 %v3237, %v3301
    %3303 = vmatmul.f32.gmra.mxu0 %v2943
    %v3304 = vpop.f32.mrf.mxu0
    %v3305 = vadd.f32 %v3240, %v3304
    %3306 = vmatmul.f32.gmra.mxu0 %v2948
    %v3307 = vpop.f32.mrf.mxu0
    %v3308 = vadd.f32 %v3243, %v3307
    %3309 = vmatmul.f32.gmra.mxu0 %v2953
    %v3310 = vpop.f32.mrf.mxu0
    %v3311 = vadd.f32 %v3246, %v3310
    %3312 = vmatmul.f32.gmra.mxu0 %v2958
    %v3313 = vpop.f32.mrf.mxu0
    %v3314 = vadd.f32 %v3249, %v3313
    %3315 = vmatmul.f32.gmra.mxu0 %v2963
    %v3316 = vpop.f32.mrf.mxu0
    %v3317 = vadd.f32 %v3252, %v3316
    %3318 = vmatmul.f32.gmra.mxu0 %v2968
    %v3319 = vpop.f32.mrf.mxu0
    %v3320 = vadd.f32 %v3255, %v3319
    %3321 = vmatmul.f32.gmra.mxu0 %v2973
    %v3322 = vpop.f32.mrf.mxu0
    %v3323 = vadd.f32 %v3258, %v3322
    %3324 = vmatmul.f32.gmra.mxu0 %v2978
    %v3325 = vpop.f32.mrf.mxu0
    %v3326 = vadd.f32 %v3261, %v3325
    %3327 = vmatmul.f32.gmra.mxu0 %v2983
    %v3328 = vpop.f32.mrf.mxu0
    %v3329 = vadd.f32 %v3264, %v3328
    %3330 = vmatmul.f32.gmra.mxu0 %v2988
    %v3331 = vpop.f32.mrf.mxu0
    %v3332 = vadd.f32 %v3267, %v3331
    %3333 = vmatmul.f32.gmra.mxu0 %v2993
    %v3334 = vpop.f32.mrf.mxu0
    %v3335 = vadd.f32 %v3270, %v3334
    %3336 = vmatmul.f32.gmra.mxu0 %v2998
    %v3337 = vpop.f32.mrf.mxu0
    %v3338 = vadd.f32 %v3273, %v3337
    %3339 = vdwg.mxu0
    %3340 = vmatpush.msra.mxu0 %v3079
    %3341 = vmatpush.msra.mxu0 %v3078
    %3342 = vmatpush.msra.mxu0 %v3077
    %3343 = vmatpush.msra.mxu0 %v3076
    %3344 = vmatpush.msra.mxu0 %v3075
    %3345 = vmatpush.msra.mxu0 %v3074
    %3346 = vmatpush.msra.mxu0 %v3073
    %3347 = vmatpush.msra.mxu0 %v3072
    %3348 = vmatpush.msra.mxu0 %v3071
    %3349 = vmatpush.msra.mxu0 %v3070
    %3350 = vmatpush.msra.mxu0 %v3069
    %3351 = vmatpush.msra.mxu0 %v3068
    %3352 = vmatpush.msra.mxu0 %v3067
    %3353 = vmatpush.msra.mxu0 %v3066
    %3354 = vmatpush.msra.mxu0 %v3065
    %3355 = vmatpush.msra.mxu0 %v3064
    %3356 = vmatmul.f32.gmra.mxu0 %v2924
    %v3357 = vpop.f32.mrf.mxu0
    %v3358 = vadd.f32 %v3293, %v3357
    %3359 = vmatmul.f32.gmra.mxu0 %v2929
    %v3360 = vpop.f32.mrf.mxu0
    %v3361 = vadd.f32 %v3296, %v3360
    %3362 = vmatmul.f32.gmra.mxu0 %v2934
    %v3363 = vpop.f32.mrf.mxu0
    %v3364 = vadd.f32 %v3299, %v3363
    %3365 = vmatmul.f32.gmra.mxu0 %v2939
    %v3366 = vpop.f32.mrf.mxu0
    %v3367 = vadd.f32 %v3302, %v3366
    %3368 = vmatmul.f32.gmra.mxu0 %v2944
    %v3369 = vpop.f32.mrf.mxu0
    %v3370 = vadd.f32 %v3305, %v3369
    %3371 = vmatmul.f32.gmra.mxu0 %v2949
    %v3372 = vpop.f32.mrf.mxu0
    %v3373 = vadd.f32 %v3308, %v3372
    %3374 = vmatmul.f32.gmra.mxu0 %v2954
    %v3375 = vpop.f32.mrf.mxu0
    %v3376 = vadd.f32 %v3311, %v3375
    %3377 = vmatmul.f32.gmra.mxu0 %v2959
    %v3378 = vpop.f32.mrf.mxu0
    %v3379 = vadd.f32 %v3314, %v3378
    %3380 = vmatmul.f32.gmra.mxu0 %v2964
    %v3381 = vpop.f32.mrf.mxu0
    %v3382 = vadd.f32 %v3317, %v3381
    %3383 = vmatmul.f32.gmra.mxu0 %v2969
    %v3384 = vpop.f32.mrf.mxu0
    %v3385 = vadd.f32 %v3320, %v3384
    %3386 = vmatmul.f32.gmra.mxu0 %v2974
    %v3387 = vpop.f32.mrf.mxu0
    %v3388 = vadd.f32 %v3323, %v3387
    %3389 = vmatmul.f32.gmra.mxu0 %v2979
    %v3390 = vpop.f32.mrf.mxu0
    %v3391 = vadd.f32 %v3326, %v3390
    %3392 = vmatmul.f32.gmra.mxu0 %v2984
    %v3393 = vpop.f32.mrf.mxu0
    %v3394 = vadd.f32 %v3329, %v3393
    %3395 = vmatmul.f32.gmra.mxu0 %v2989
    %v3396 = vpop.f32.mrf.mxu0
    %v3397 = vadd.f32 %v3332, %v3396
    %3398 = vmatmul.f32.gmra.mxu0 %v2994
    %v3399 = vpop.f32.mrf.mxu0
    %v3400 = vadd.f32 %v3335, %v3399
    %3401 = vmatmul.f32.gmra.mxu0 %v2999
    %v3402 = vpop.f32.mrf.mxu0
    %v3403 = vadd.f32 %v3338, %v3402
    %3404 = vdwg.mxu0
    %3405 = vadd.xlane.f32.xlu0 %v3358
    %v3406 = vpop.xlane.xlu0 %3405
    %3407 = vadd.xlane.f32.xlu0 %v3361
    %v3408 = vpop.xlane.xlu0 %3407
    %3409 = vadd.xlane.f32.xlu0 %v3364
    %v3410 = vpop.xlane.xlu0 %3409
    %3411 = vadd.xlane.f32.xlu0 %v3367
    %v3412 = vpop.xlane.xlu0 %3411
    %3413 = vadd.xlane.f32.xlu0 %v3370
    %v3414 = vpop.xlane.xlu0 %3413
    %3415 = vadd.xlane.f32.xlu0 %v3373
    %v3416 = vpop.xlane.xlu0 %3415
    %3417 = vadd.xlane.f32.xlu0 %v3376
    %v3418 = vpop.xlane.xlu0 %3417
    %3419 = vadd.xlane.f32.xlu0 %v3379
    %v3420 = vpop.xlane.xlu0 %3419
    %3421 = vadd.xlane.f32.xlu0 %v3382
    %v3422 = vpop.xlane.xlu0 %3421
    %3423 = vadd.xlane.f32.xlu0 %v3385
    %v3424 = vpop.xlane.xlu0 %3423
    %3425 = vadd.xlane.f32.xlu0 %v3388
    %v3426 = vpop.xlane.xlu0 %3425
    %3427 = vadd.xlane.f32.xlu0 %v3391
    %v3428 = vpop.xlane.xlu0 %3427
    %3429 = vadd.xlane.f32.xlu0 %v3394
    %v3430 = vpop.xlane.xlu0 %3429
    %3431 = vadd.xlane.f32.xlu0 %v3397
    %v3432 = vpop.xlane.xlu0 %3431
    %3433 = vadd.xlane.f32.xlu0 %v3400
    %v3434 = vpop.xlane.xlu0 %3433
    %3435 = vadd.xlane.f32.xlu0 %v3403
    %v3436 = vpop.xlane.xlu0 %3435
    %v3437 = vmul.f32 %v3406, 0.03125
    %v3438 = vmul.f32 %v3408, 0.03125
    %v3439 = vmul.f32 %v3410, 0.03125
    %v3440 = vmul.f32 %v3412, 0.03125
    %v3441 = vmul.f32 %v3414, 0.03125
    %v3442 = vmul.f32 %v3416, 0.03125
    %v3443 = vmul.f32 %v3418, 0.03125
    %v3444 = vmul.f32 %v3420, 0.03125
    %v3445 = vmul.f32 %v3422, 0.03125
    %v3446 = vmul.f32 %v3424, 0.03125
    %v3447 = vmul.f32 %v3426, 0.03125
    %v3448 = vmul.f32 %v3428, 0.03125
    %v3449 = vmul.f32 %v3430, 0.03125
    %v3450 = vmul.f32 %v3432, 0.03125
    %v3451 = vmul.f32 %v3434, 0.03125
    %v3452 = vmul.f32 %v3436, 0.03125
    %v3453 = vmul.f32 %v3358, %v3358
    %v3454 = vmul.f32 %v3361, %v3361
    %v3455 = vmul.f32 %v3364, %v3364
    %v3456 = vmul.f32 %v3367, %v3367
    %v3457 = vmul.f32 %v3370, %v3370
    %v3458 = vmul.f32 %v3373, %v3373
    %v3459 = vmul.f32 %v3376, %v3376
    %v3460 = vmul.f32 %v3379, %v3379
    %v3461 = vmul.f32 %v3382, %v3382
    %v3462 = vmul.f32 %v3385, %v3385
    %v3463 = vmul.f32 %v3388, %v3388
    %v3464 = vmul.f32 %v3391, %v3391
    %v3465 = vmul.f32 %v3394, %v3394
    %v3466 = vmul.f32 %v3397, %v3397
    %v3467 = vmul.f32 %v3400, %v3400
    %v3468 = vmul.f32 %v3403, %v3403
    %3469 = vadd.xlane.f32.xlu0 %v3453
    %v3470 = vpop.xlane.xlu0 %3469
    %3471 = vadd.xlane.f32.xlu0 %v3454
    %v3472 = vpop.xlane.xlu0 %3471
    %3473 = vadd.xlane.f32.xlu0 %v3455
    %v3474 = vpop.xlane.xlu0 %3473
    %3475 = vadd.xlane.f32.xlu0 %v3456
    %v3476 = vpop.xlane.xlu0 %3475
    %3477 = vadd.xlane.f32.xlu0 %v3457
    %v3478 = vpop.xlane.xlu0 %3477
    %3479 = vadd.xlane.f32.xlu0 %v3458
    %v3480 = vpop.xlane.xlu0 %3479
    %3481 = vadd.xlane.f32.xlu0 %v3459
    %v3482 = vpop.xlane.xlu0 %3481
    %3483 = vadd.xlane.f32.xlu0 %v3460
    %v3484 = vpop.xlane.xlu0 %3483
    %3485 = vadd.xlane.f32.xlu0 %v3461
    %v3486 = vpop.xlane.xlu0 %3485
    %3487 = vadd.xlane.f32.xlu0 %v3462
    %v3488 = vpop.xlane.xlu0 %3487
    %3489 = vadd.xlane.f32.xlu0 %v3463
    %v3490 = vpop.xlane.xlu0 %3489
    %3491 = vadd.xlane.f32.xlu0 %v3464
    %v3492 = vpop.xlane.xlu0 %3491
    %3493 = vadd.xlane.f32.xlu0 %v3465
    %v3494 = vpop.xlane.xlu0 %3493
    %3495 = vadd.xlane.f32.xlu0 %v3466
    %v3496 = vpop.xlane.xlu0 %3495
    %3497 = vadd.xlane.f32.xlu0 %v3467
    %v3498 = vpop.xlane.xlu0 %3497
    %3499 = vadd.xlane.f32.xlu0 %v3468
    %v3500 = vpop.xlane.xlu0 %3499
    %v3501 = vmul.f32 %v3470, 0.03125
    %v3502 = vmul.f32 %v3472, 0.03125
    %v3503 = vmul.f32 %v3474, 0.03125
    %v3504 = vmul.f32 %v3476, 0.03125
    %v3505 = vmul.f32 %v3478, 0.03125
    %v3506 = vmul.f32 %v3480, 0.03125
    %v3507 = vmul.f32 %v3482, 0.03125
    %v3508 = vmul.f32 %v3484, 0.03125
    %v3509 = vmul.f32 %v3486, 0.03125
    %v3510 = vmul.f32 %v3488, 0.03125
    %v3511 = vmul.f32 %v3490, 0.03125
    %v3512 = vmul.f32 %v3492, 0.03125
    %v3513 = vmul.f32 %v3494, 0.03125
    %v3514 = vmul.f32 %v3496, 0.03125
    %v3515 = vmul.f32 %v3498, 0.03125
    %v3516 = vmul.f32 %v3500, 0.03125
    %v3517 = vmul.f32 %v3437, %v3437
    %v3518 = vmul.f32 %v3438, %v3438
    %v3519 = vmul.f32 %v3439, %v3439
    %v3520 = vmul.f32 %v3440, %v3440
    %v3521 = vmul.f32 %v3441, %v3441
    %v3522 = vmul.f32 %v3442, %v3442
    %v3523 = vmul.f32 %v3443, %v3443
    %v3524 = vmul.f32 %v3444, %v3444
    %v3525 = vmul.f32 %v3445, %v3445
    %v3526 = vmul.f32 %v3446, %v3446
    %v3527 = vmul.f32 %v3447, %v3447
    %v3528 = vmul.f32 %v3448, %v3448
    %v3529 = vmul.f32 %v3449, %v3449
    %v3530 = vmul.f32 %v3450, %v3450
    %v3531 = vmul.f32 %v3451, %v3451
    %v3532 = vmul.f32 %v3452, %v3452
    %v3533 = vsub.f32 %v3501, %v3517
    %v3534 = vsub.f32 %v3502, %v3518
    %v3535 = vsub.f32 %v3503, %v3519
    %v3536 = vsub.f32 %v3504, %v3520
    %v3537 = vsub.f32 %v3505, %v3521
    %v3538 = vsub.f32 %v3506, %v3522
    %v3539 = vsub.f32 %v3507, %v3523
    %v3540 = vsub.f32 %v3508, %v3524
    %v3541 = vsub.f32 %v3509, %v3525
    %v3542 = vsub.f32 %v3510, %v3526
    %v3543 = vsub.f32 %v3511, %v3527
    %v3544 = vsub.f32 %v3512, %v3528
    %v3545 = vsub.f32 %v3513, %v3529
    %v3546 = vsub.f32 %v3514, %v3530
    %v3547 = vsub.f32 %v3515, %v3531
    %v3548 = vsub.f32 %v3516, %v3532
    %v3549 = vsub.f32 %v3358, %v3437
    %v3550 = vsub.f32 %v3361, %v3438
    %v3551 = vsub.f32 %v3364, %v3439
    %v3552 = vsub.f32 %v3367, %v3440
    %v3553 = vsub.f32 %v3370, %v3441
    %v3554 = vsub.f32 %v3373, %v3442
    %v3555 = vsub.f32 %v3376, %v3443
    %v3556 = vsub.f32 %v3379, %v3444
    %v3557 = vsub.f32 %v3382, %v3445
    %v3558 = vsub.f32 %v3385, %v3446
    %v3559 = vsub.f32 %v3388, %v3447
    %v3560 = vsub.f32 %v3391, %v3448
    %v3561 = vsub.f32 %v3394, %v3449
    %v3562 = vsub.f32 %v3397, %v3450
    %v3563 = vsub.f32 %v3400, %v3451
    %v3564 = vsub.f32 %v3403, %v3452
    %v3565 = vadd.f32 %v3533, 1e-12
    %v3566 = vadd.f32 %v3534, 1e-12
    %v3567 = vadd.f32 %v3535, 1e-12
    %v3568 = vadd.f32 %v3536, 1e-12
    %v3569 = vadd.f32 %v3537, 1e-12
    %v3570 = vadd.f32 %v3538, 1e-12
    %v3571 = vadd.f32 %v3539, 1e-12
    %v3572 = vadd.f32 %v3540, 1e-12
    %v3573 = vadd.f32 %v3541, 1e-12
    %v3574 = vadd.f32 %v3542, 1e-12
    %v3575 = vadd.f32 %v3543, 1e-12
    %v3576 = vadd.f32 %v3544, 1e-12
    %v3577 = vadd.f32 %v3545, 1e-12
    %v3578 = vadd.f32 %v3546, 1e-12
    %v3579 = vadd.f32 %v3547, 1e-12
    %v3580 = vadd.f32 %v3548, 1e-12
    %v3581 = vrsqrt.pop %v3565
    %v3582 = vmul.f32 %v3581, %v3565
    %v3583 = vmul.f32 %v3582, %v3581
    %v3584 = vmul.f32 0.5, %v3583
    %v3585 = vsub.f32 1.5, %v3584
    %v3586 = vmul.f32 %v3581, %v3585
    %vm3587 = vweird.f32 %v3565
    %vm3588 = vweird.f32 %v3581
    %vm3589 = vmor %vm3587, %vm3588
    %v3590 = vsel %vm3589, %v3581, %v3586
    %v3591 = vrsqrt.pop %v3566
    %v3592 = vmul.f32 %v3591, %v3566
    %v3593 = vmul.f32 %v3592, %v3591
    %v3594 = vmul.f32 0.5, %v3593
    %v3595 = vsub.f32 1.5, %v3594
    %v3596 = vmul.f32 %v3591, %v3595
    %vm3597 = vweird.f32 %v3566
    %vm3598 = vweird.f32 %v3591
    %vm3599 = vmor %vm3597, %vm3598
    %v3600 = vsel %vm3599, %v3591, %v3596
    %v3601 = vrsqrt.pop %v3567
    %v3602 = vmul.f32 %v3601, %v3567
    %v3603 = vmul.f32 %v3602, %v3601
    %v3604 = vmul.f32 0.5, %v3603
    %v3605 = vsub.f32 1.5, %v3604
    %v3606 = vmul.f32 %v3601, %v3605
    %vm3607 = vweird.f32 %v3567
    %vm3608 = vweird.f32 %v3601
    %vm3609 = vmor %vm3607, %vm3608
    %v3610 = vsel %vm3609, %v3601, %v3606
    %v3611 = vrsqrt.pop %v3568
    %v3612 = vmul.f32 %v3611, %v3568
    %v3613 = vmul.f32 %v3612, %v3611
    %v3614 = vmul.f32 0.5, %v3613
    %v3615 = vsub.f32 1.5, %v3614
    %v3616 = vmul.f32 %v3611, %v3615
    %vm3617 = vweird.f32 %v3568
    %vm3618 = vweird.f32 %v3611
    %vm3619 = vmor %vm3617, %vm3618
    %v3620 = vsel %vm3619, %v3611, %v3616
    %v3621 = vrsqrt.pop %v3569
    %v3622 = vmul.f32 %v3621, %v3569
    %v3623 = vmul.f32 %v3622, %v3621
    %v3624 = vmul.f32 0.5, %v3623
    %v3625 = vsub.f32 1.5, %v3624
    %v3626 = vmul.f32 %v3621, %v3625
    %vm3627 = vweird.f32 %v3569
    %vm3628 = vweird.f32 %v3621
    %vm3629 = vmor %vm3627, %vm3628
    %v3630 = vsel %vm3629, %v3621, %v3626
    %v3631 = vrsqrt.pop %v3570
    %v3632 = vmul.f32 %v3631, %v3570
    %v3633 = vmul.f32 %v3632, %v3631
    %v3634 = vmul.f32 0.5, %v3633
    %v3635 = vsub.f32 1.5, %v3634
    %v3636 = vmul.f32 %v3631, %v3635
    %vm3637 = vweird.f32 %v3570
    %vm3638 = vweird.f32 %v3631
    %vm3639 = vmor %vm3637, %vm3638
    %v3640 = vsel %vm3639, %v3631, %v3636
    %v3641 = vrsqrt.pop %v3571
    %v3642 = vmul.f32 %v3641, %v3571
    %v3643 = vmul.f32 %v3642, %v3641
    %v3644 = vmul.f32 0.5, %v3643
    %v3645 = vsub.f32 1.5, %v3644
    %v3646 = vmul.f32 %v3641, %v3645
    %vm3647 = vweird.f32 %v3571
    %vm3648 = vweird.f32 %v3641
    %vm3649 = vmor %vm3647, %vm3648
    %v3650 = vsel %vm3649, %v3641, %v3646
    %v3651 = vrsqrt.pop %v3572
    %v3652 = vmul.f32 %v3651, %v3572
    %v3653 = vmul.f32 %v3652, %v3651
    %v3654 = vmul.f32 0.5, %v3653
    %v3655 = vsub.f32 1.5, %v3654
    %v3656 = vmul.f32 %v3651, %v3655
    %vm3657 = vweird.f32 %v3572
    %vm3658 = vweird.f32 %v3651
    %vm3659 = vmor %vm3657, %vm3658
    %v3660 = vsel %vm3659, %v3651, %v3656
    %v3661 = vrsqrt.pop %v3573
    %v3662 = vmul.f32 %v3661, %v3573
    %v3663 = vmul.f32 %v3662, %v3661
    %v3664 = vmul.f32 0.5, %v3663
    %v3665 = vsub.f32 1.5, %v3664
    %v3666 = vmul.f32 %v3661, %v3665
    %vm3667 = vweird.f32 %v3573
    %vm3668 = vweird.f32 %v3661
    %vm3669 = vmor %vm3667, %vm3668
    %v3670 = vsel %vm3669, %v3661, %v3666
    %v3671 = vrsqrt.pop %v3574
    %v3672 = vmul.f32 %v3671, %v3574
    %v3673 = vmul.f32 %v3672, %v3671
    %v3674 = vmul.f32 0.5, %v3673
    %v3675 = vsub.f32 1.5, %v3674
    %v3676 = vmul.f32 %v3671, %v3675
    %vm3677 = vweird.f32 %v3574
    %vm3678 = vweird.f32 %v3671
    %vm3679 = vmor %vm3677, %vm3678
    %v3680 = vsel %vm3679, %v3671, %v3676
    %v3681 = vrsqrt.pop %v3575
    %v3682 = vmul.f32 %v3681, %v3575
    %v3683 = vmul.f32 %v3682, %v3681
    %v3684 = vmul.f32 0.5, %v3683
    %v3685 = vsub.f32 1.5, %v3684
    %v3686 = vmul.f32 %v3681, %v3685
    %vm3687 = vweird.f32 %v3575
    %vm3688 = vweird.f32 %v3681
    %vm3689 = vmor %vm3687, %vm3688
    %v3690 = vsel %vm3689, %v3681, %v3686
    %v3691 = vrsqrt.pop %v3576
    %v3692 = vmul.f32 %v3691, %v3576
    %v3693 = vmul.f32 %v3692, %v3691
    %v3694 = vmul.f32 0.5, %v3693
    %v3695 = vsub.f32 1.5, %v3694
    %v3696 = vmul.f32 %v3691, %v3695
    %vm3697 = vweird.f32 %v3576
    %vm3698 = vweird.f32 %v3691
    %vm3699 = vmor %vm3697, %vm3698
    %v3700 = vsel %vm3699, %v3691, %v3696
    %v3701 = vrsqrt.pop %v3577
    %v3702 = vmul.f32 %v3701, %v3577
    %v3703 = vmul.f32 %v3702, %v3701
    %v3704 = vmul.f32 0.5, %v3703
    %v3705 = vsub.f32 1.5, %v3704
    %v3706 = vmul.f32 %v3701, %v3705
    %vm3707 = vweird.f32 %v3577
    %vm3708 = vweird.f32 %v3701
    %vm3709 = vmor %vm3707, %vm3708
    %v3710 = vsel %vm3709, %v3701, %v3706
    %v3711 = vrsqrt.pop %v3578
    %v3712 = vmul.f32 %v3711, %v3578
    %v3713 = vmul.f32 %v3712, %v3711
    %v3714 = vmul.f32 0.5, %v3713
    %v3715 = vsub.f32 1.5, %v3714
    %v3716 = vmul.f32 %v3711, %v3715
    %vm3717 = vweird.f32 %v3578
    %vm3718 = vweird.f32 %v3711
    %vm3719 = vmor %vm3717, %vm3718
    %v3720 = vsel %vm3719, %v3711, %v3716
    %v3721 = vrsqrt.pop %v3579
    %v3722 = vmul.f32 %v3721, %v3579
    %v3723 = vmul.f32 %v3722, %v3721
    %v3724 = vmul.f32 0.5, %v3723
    %v3725 = vsub.f32 1.5, %v3724
    %v3726 = vmul.f32 %v3721, %v3725
    %vm3727 = vweird.f32 %v3579
    %vm3728 = vweird.f32 %v3721
    %vm3729 = vmor %vm3727, %vm3728
    %v3730 = vsel %vm3729, %v3721, %v3726
    %v3731 = vrsqrt.pop %v3580
    %v3732 = vmul.f32 %v3731, %v3580
    %v3733 = vmul.f32 %v3732, %v3731
    %v3734 = vmul.f32 0.5, %v3733
    %v3735 = vsub.f32 1.5, %v3734
    %v3736 = vmul.f32 %v3731, %v3735
    %vm3737 = vweird.f32 %v3580
    %vm3738 = vweird.f32 %v3731
    %vm3739 = vmor %vm3737, %vm3738
    %v3740 = vsel %vm3739, %v3731, %v3736
    %v3741 = vmul.f32 %v3549, %v3590
    %v3742 = vmul.f32 %v3550, %v3600
    %v3743 = vmul.f32 %v3551, %v3610
    %v3744 = vmul.f32 %v3552, %v3620
    %v3745 = vmul.f32 %v3553, %v3630
    %v3746 = vmul.f32 %v3554, %v3640
    %v3747 = vmul.f32 %v3555, %v3650
    %v3748 = vmul.f32 %v3556, %v3660
    %v3749 = vmul.f32 %v3557, %v3670
    %v3750 = vmul.f32 %v3558, %v3680
    %v3751 = vmul.f32 %v3559, %v3690
    %v3752 = vmul.f32 %v3560, %v3700
    %v3753 = vmul.f32 %v3561, %v3710
    %v3754 = vmul.f32 %v3562, %v3720
    %v3755 = vmul.f32 %v3563, %v3730
    %v3756 = vmul.f32 %v3564, %v3740
    %v3757 = vld [vmem:[%s2] sm:$0x1]
    %v3759 = vperm.slane %v3757, 0
    %v3761 = vmul.f32 %v3741, %v3759
    %v3762 = vmul.f32 %v3742, %v3759
    %v3763 = vmul.f32 %v3743, %v3759
    %v3764 = vmul.f32 %v3744, %v3759
    %v3765 = vmul.f32 %v3745, %v3759
    %v3766 = vmul.f32 %v3746, %v3759
    %v3767 = vmul.f32 %v3747, %v3759
    %v3768 = vmul.f32 %v3748, %v3759
    %v3769 = vmul.f32 %v3749, %v3759
    %v3770 = vmul.f32 %v3750, %v3759
    %v3771 = vmul.f32 %v3751, %v3759
    %v3772 = vmul.f32 %v3752, %v3759
    %v3773 = vmul.f32 %v3753, %v3759
    %v3774 = vmul.f32 %v3754, %v3759
    %v3775 = vmul.f32 %v3755, %v3759
    %v3776 = vmul.f32 %v3756, %v3759
    %v3777 = vld [vmem:[%s3] sm:$0x1]
    %v3779 = vperm.slane %v3777, 0
    %v3781 = vadd.f32 %v3761, %v3779
    %v3782 = vadd.f32 %v3762, %v3779
    %v3783 = vadd.f32 %v3763, %v3779
    %v3784 = vadd.f32 %v3764, %v3779
    %v3785 = vadd.f32 %v3765, %v3779
    %v3786 = vadd.f32 %v3766, %v3779
    %v3787 = vadd.f32 %v3767, %v3779
    %v3788 = vadd.f32 %v3768, %v3779
    %v3789 = vadd.f32 %v3769, %v3779
    %v3790 = vadd.f32 %v3770, %v3779
    %v3791 = vadd.f32 %v3771, %v3779
    %v3792 = vadd.f32 %v3772, %v3779
    %v3793 = vadd.f32 %v3773, %v3779
    %v3794 = vadd.f32 %v3774, %v3779
    %v3795 = vadd.f32 %v3775, %v3779
    %v3796 = vadd.f32 %v3776, %v3779
    %3797 = vst [vmem:[#allocation5] sm:$0xff] %v3781
    %3798 = vst [vmem:[#allocation5 + $0x8] sm:$0xff] %v3782
    %3799 = vst [vmem:[#allocation5 + $0x10] sm:$0xff] %v3783
    %3800 = vst [vmem:[#allocation5 + $0x18] sm:$0xff] %v3784
    %3801 = vst [vmem:[#allocation5 + $0x20] sm:$0xff] %v3785
    %3802 = vst [vmem:[#allocation5 + $0x28] sm:$0xff] %v3786
    %3803 = vst [vmem:[#allocation5 + $0x30] sm:$0xff] %v3787
    %3804 = vst [vmem:[#allocation5 + $0x38] sm:$0xff] %v3788
    %3805 = vst [vmem:[#allocation5 + $0x40] sm:$0xff] %v3789
    %3806 = vst [vmem:[#allocation5 + $0x48] sm:$0xff] %v3790
    %3807 = vst [vmem:[#allocation5 + $0x50] sm:$0xff] %v3791
    %3808 = vst [vmem:[#allocation5 + $0x58] sm:$0xff] %v3792
    %3809 = vst [vmem:[#allocation5 + $0x60] sm:$0xff] %v3793
    %3810 = vst [vmem:[#allocation5 + $0x68] sm:$0xff] %v3794
    %3811 = vst [vmem:[#allocation5 + $0x70] sm:$0xff] %v3795
    %3812 = vst [vmem:[#allocation5 + $0x78] sm:$0xff] %v3796
    // Predicated region
    $region22: #{tpu_custom_call.1} parent=1 // pred_check
      _
    $region23: #{tpu_custom_call.1} parent=1 // pred_check_branch
      %3814 = sbr.rel (0) target = $region25
    $region24: #{tpu_custom_call.1} parent=1 // pred_region
      %3816 = vsyncadd [#allocation4], 0
      %s3817 = sshll.u32 [#allocation5], 4
      %s3818 = int_to_ptr.vmem [resolvable:$true] %s3817
      %s3819 = sshll.u32 %s4, 4
      %s3820 = int_to_ptr.hbm [resolvable:$true] %s3819
      %3825 = dma.vmem_to_hbm [thread:$0]  %s3818, 2048, %s3820, [#allocation4], 128, 128, 8
    $region25: #{tpu_custom_call.1} parent=1 // pred_fallthru
      _
    // Predicated region
    $region26: #{tpu_custom_call.1} parent=1 // pred_check
      _
    $region27: #{tpu_custom_call.1} parent=1 // pred_check_branch
      %3827 = sbr.rel (0) target = $region29
    $region28: #{tpu_custom_call.1} parent=1 // pred_region
      %3829 = dma.done [#allocation4], 2048
    $region29: #{tpu_custom_call.1} parent=1 // pred_fallthru
      _
    %3830 = vsyncpa [#allocation3], 1
    %3831 = vsyncpa [#allocation4], 1

</llo_original>
